<compile_context>
chip_gen: v5e
topology: v5e:2x2
jax: 0.10.0
libtpu: 0.0.40
codegen_flags: <defaults>
</compile_context>

<pallas_src>
import jax
import jax.numpy as jnp
from jax.experimental import pallas as pl
from jax.experimental.pallas import tpu as pltpu


# ----------------------------------------------------------------------------
# Fused kernel: conv1 -> conv2 -> conv3 -> conv4 -> Linear -> LeakyReLU(2)
# (one image per grid step; grid axis is the batch, marked "parallel")
# ----------------------------------------------------------------------------
def _critic_kernel(x_ref,
                   w1_ref, b1_ref, w2_ref, b2_ref,
                   w3_ref, b3_ref, w4_ref, b4_ref,
                   lw_ref, lb_ref,
                   out_ref,
                   p1, y1, d2, p2, y2, d3, p3, y3, d4, p4):
    f32 = jnp.float32

    def conv(src_ref, w_ref, b_ref, p_scr, Ho, Wo, C4, slope):
        """k=4/s=2/p=1 conv + bias (+ LeakyReLU) as ONE im2col matmul.

        src_ref: [Ho+1, Wo+1, C4] phase-packed, zero-padded input with
                 src[u, v, (r*2+q)*Cin + c] == x_pad[2u + r, 2v + q, c]
                 (C4 = 4*Cin), so every patch read is a unit-stride slice.
        p_scr:   [Ho*Wo, 4*C4] bf16 patch-matrix scratch.
        w_ref:   [4*C4, Cout] bf16, row (ri*2+vj)*C4 + (r*2+q)*Cin + c holds
                 W_torch[cout, c, 2*ri + r, 2*vj + q].
        """
        M = Ho * Wo
        for ri in range(2):              # kernel-row pair  (i = 2*ri + r)
            for vj in range(2):          # kernel-col pair  (j = 2*vj + q)
                blk = ri * 2 + vj
                slab = src_ref[ri:ri + Ho, vj:vj + Wo, :]      # [Ho, Wo, C4]
                p_scr[:, blk * C4:(blk + 1) * C4] = (
                    slab.reshape(M, C4).astype(p_scr.dtype))
        y = jnp.dot(p_scr[...], w_ref[...], preferred_element_type=f32)
        y = y + b_ref[...]                                     # [1, Cout] bcast
        if slope is not None:
            y = jnp.where(y >= 0.0, y, slope * y)
        return y                                               # [M, Cout] f32

    def repack(y, y_scr, dst, Ho, Wo, C):
        """Scatter conv output y ([Ho*Wo, C], NHWC raster) into the next
        layer's zero-padded, phase-packed input:
            dst[u, v, (r*2+q)*C + c] == pad(y, 1)[2u + r, 2v + q, c].
        Fully vectorized: 1 dense store + 2 strided reads + 4 slab stores."""
        M = Ho * Wo
        H2, W2 = Ho // 2, Wo // 2
        dst[...] = jnp.zeros(dst.shape, dst.dtype)             # padding border
        y_scr[...] = y
        # wo parity -> padded-col parity q = 1 - (wo % 2): single strided read
        # over the whole image (wo is the fastest-varying row index).
        q1 = y_scr[pl.ds(0, M // 2, 2), :].reshape(H2, Wo, C)  # wo even -> q=1
        q0 = y_scr[pl.ds(1, M // 2, 2), :].reshape(H2, Wo, C)  # wo odd  -> q=0
        # Within each group of Wo rows: first W2 rows are even ho (padded-row
        # parity r=1, u=ho/2), last W2 rows are odd ho (r=0, u=(ho+1)/2).
        dst[0:H2, 0:W2, 3 * C:4 * C] = q1[:, 0:W2, :]          # r=1, q=1
        dst[1:H2 + 1, 0:W2, 1 * C:2 * C] = q1[:, W2:Wo, :]     # r=0, q=1
        dst[0:H2, 1:W2 + 1, 2 * C:3 * C] = q0[:, 0:W2, :]      # r=1, q=0
        dst[1:H2 + 1, 1:W2 + 1, 0 * C:1 * C] = q0[:, W2:Wo, :] # r=0, q=0

    # conv1: 3 -> 16,   32x32 -> 16x16, LeakyReLU(0.2)
    y = conv(x_ref, w1_ref, b1_ref, p1, 16, 16, 12, 0.2)
    repack(y, y1, d2, 16, 16, 16)
    # conv2: 16 -> 32,  16x16 -> 8x8
    y = conv(d2, w2_ref, b2_ref, p2, 8, 8, 64, 0.2)
    repack(y, y2, d3, 8, 8, 32)
    # conv3: 32 -> 64,  8x8 -> 4x4
    y = conv(d3, w3_ref, b3_ref, p3, 4, 4, 128, 0.2)
    repack(y, y3, d4, 4, 4, 64)
    # conv4: 64 -> 128, 4x4 -> 2x2, no activation (last=True)
    y4 = conv(d4, w4_ref, b4_ref, p4, 2, 2, 256, None)         # [4, 128]

    # Linear(512 -> 1) + LeakyReLU(negative_slope=2): VPU multiply + reduce.
    # lw already folds PyTorch's NCHW flatten: lw[h*2 + w, c] == W[0, c*4+h*2+w].
    prod = y4 * lw_ref[...]                                    # [4, 128]
    s = jnp.sum(prod, axis=0, keepdims=True)                   # [1, 128]
    s = jnp.sum(s, axis=1, keepdims=True)                      # [1, 1]
    z = s + lb_ref[...]
    z = jnp.where(z >= 0.0, z, 2.0 * z)                        # LeakyReLU(2)
    out_ref[...] = jnp.broadcast_to(z, (8, 128))               # lane-dense tile


# ----------------------------------------------------------------------------
# Parameters: PyTorch-style init + one-time conversion to kernel layouts
# ----------------------------------------------------------------------------
def init_params(key):
    params = {}
    conv_shapes = [
        ("conv1", (16, 3, 4, 4)),
        ("conv2", (32, 16, 4, 4)),
        ("conv3", (64, 32, 4, 4)),
        ("conv4", (128, 64, 4, 4)),
    ]
    keys = jax.random.split(key, len(conv_shapes) * 2 + 2)
    ki = 0
    for name, shape in conv_shapes:
        cout, cin, kh, kw = shape
        scale = 1.0 / float(cin * kh * kw) ** 0.5
        params[name + "_w"] = jax.random.uniform(
            keys[ki], shape, jnp.float32, -scale, scale); ki += 1
        params[name + "_b"] = jax.random.uniform(
            keys[ki], (cout,), jnp.float32, -scale, scale); ki += 1
    scale = 1.0 / 512.0 ** 0.5
    params["lin_w"] = jax.random.uniform(keys[ki], (1, 512), jnp.float32,
                                         -scale, scale); ki += 1
    params["lin_b"] = jax.random.uniform(keys[ki], (1,), jnp.float32,
                                         -scale, scale)
    return params


def prepare_params(params):
    """One-time conversion from PyTorch layouts to the kernel's MXU-friendly
    layouts (hoisted out of the forward pass).  Conv weights go to bf16
    (matmul operands); accumulation stays f32 inside the kernel."""
    p = {}
    for idx, (cin, cout) in enumerate(((3, 16), (16, 32), (32, 64), (64, 128)),
                                      start=1):
        w = params["conv%d_w" % idx]                  # [cout, cin, 4, 4]
        # kernel row index = (ri*2+vj)*4*cin + (r*2+q)*cin + c, i=2ri+r, j=2vj+q
        w6 = w.reshape(cout, cin, 2, 2, 2, 2)         # (cout, c, ri, r, vj, q)
        wk = jnp.transpose(w6, (2, 4, 3, 5, 1, 0)).reshape(16 * cin, cout)
        p["w%d" % idx] = wk.astype(jnp.bfloat16)
        p["b%d" % idx] = params["conv%d_b" % idx].reshape(1, cout).astype(jnp.float32)
    # Linear(512, 1): fold the NCHW flatten order (c*4 + h*2 + w) into the weight.
    lw = params["lin_w"].reshape(128, 2, 2)           # [c, h, w]
    p["lw"] = jnp.transpose(lw, (1, 2, 0)).reshape(4, 128).astype(jnp.float32)
    p["lb"] = params["lin_b"].reshape(1, 1).astype(jnp.float32)
    return p


# ----------------------------------------------------------------------------
# Forward wrapper
# ----------------------------------------------------------------------------
def critic_forward(prepped, x_nchw):
    """Critic forward; x_nchw: [B, 3, 32, 32] (PyTorch NCHW). Returns [B, 1]."""
    B, C, H, W = x_nchw.shape
    assert (C, H, W) == (3, 32, 32), "Critic expects 3x32x32 inputs"
    f32 = jnp.float32
    bf16 = jnp.bfloat16

    # NCHW -> NHWC, zero-pad by 1, 2x2 space-to-depth (conv stride) so every
    # in-kernel patch read is a unit-stride slice:
    #   x_packed[b, u, v, (r*2+q)*3 + c] == x_pad[b, 2u + r, 2v + q, c]
    x = jnp.transpose(x_nchw, (0, 2, 3, 1)).astype(f32)        # [B, 32, 32, 3]
    xp = jnp.pad(x, ((0, 0), (1, 1), (1, 1), (0, 0)))          # [B, 34, 34, 3]
    xp = xp.reshape(B, 17, 2, 17, 2, 3)
    x_packed = jnp.transpose(xp, (0, 1, 3, 2, 4, 5)).reshape(B, 17, 17, 12)

    weights = [prepped["w1"], prepped["b1"], prepped["w2"], prepped["b2"],
               prepped["w3"], prepped["b3"], prepped["w4"], prepped["b4"],
               prepped["lw"], prepped["lb"]]

    def const_spec(arr):
        zeros = (0,) * arr.ndim
        return pl.BlockSpec(arr.shape, lambda b, _z=zeros: _z)

    in_specs = ([pl.BlockSpec((None, 17, 17, 12), lambda b: (b, 0, 0, 0))]
                + [const_spec(a) for a in weights])

    scratch = [
        pltpu.VMEM((256, 48), bf16),    # p1: conv1 im2col patches
        pltpu.VMEM((256, 16), f32),     # y1: conv1 output (for repack)
        pltpu.VMEM((9, 9, 64), f32),    # d2: conv2 packed padded input
        pltpu.VMEM((64, 256), bf16),    # p2
        pltpu.VMEM((64, 32), f32),      # y2
        pltpu.VMEM((5, 5, 128), f32),   # d3
        pltpu.VMEM((16, 512), bf16),    # p3
        pltpu.VMEM((16, 64), f32),      # y3
        pltpu.VMEM((3, 3, 256), f32),   # d4
        pltpu.VMEM((4, 1024), bf16),    # p4
    ]

    out = pl.pallas_call(
        _critic_kernel,
        out_shape=jax.ShapeDtypeStruct((B, 8, 128), f32),
        grid=(B,),
        in_specs=in_specs,
        out_specs=pl.BlockSpec((None, 8, 128), lambda b: (b, 0, 0)),
        scratch_shapes=scratch,
        compiler_params=pltpu.CompilerParams(
            dimension_semantics=("parallel",)),
    )(x_packed, *weights)
    # Only element [0, 0] of each image's lane-dense tile carries the result.
    return out[:, 0, :1]


if __name__ == "__main__":
    key = jax.random.PRNGKey(0)
    pkey, xkey = jax.random.split(key)
    params = init_params(pkey)
    prepped = prepare_params(params)        # one-time weight layout preparation

    # Input must be 32x32 so that the flattened conv features are 128*2*2 = 512.
    x = jax.random.normal(xkey, (2, 3, 32, 32), dtype=jnp.float32)

    fwd = jax.jit(critic_forward)
    out = fwd(prepped, x)
    out = jax.block_until_ready(out)
    assert out.shape == (2, 1), out.shape
    assert out.dtype == jnp.float32
    print("KERNEL_OK")
</pallas_src>

<mosaic_0001>
module attributes {stable_mosaic.version = 11 : i64} {
  func.func @_critic_kernel(%arg0: i32, %arg1: memref<1x17x17x12xf32, #tpu.memory_space<vmem>>, %arg2: memref<48x16xbf16, #tpu.memory_space<vmem>>, %arg3: memref<1x16xf32, #tpu.memory_space<vmem>>, %arg4: memref<256x32xbf16, #tpu.memory_space<vmem>>, %arg5: memref<1x32xf32, #tpu.memory_space<vmem>>, %arg6: memref<512x64xbf16, #tpu.memory_space<vmem>>, %arg7: memref<1x64xf32, #tpu.memory_space<vmem>>, %arg8: memref<1024x128xbf16, #tpu.memory_space<vmem>>, %arg9: memref<1x128xf32, #tpu.memory_space<vmem>>, %arg10: memref<4x128xf32, #tpu.memory_space<vmem>>, %arg11: memref<1x1xf32, #tpu.memory_space<vmem>>, %arg12: memref<1x8x128xf32, #tpu.memory_space<vmem>>, %arg13: memref<256x48xbf16, #tpu.memory_space<vmem>>, %arg14: memref<256x16xf32, #tpu.memory_space<vmem>>, %arg15: memref<9x9x64xf32, #tpu.memory_space<vmem>>, %arg16: memref<64x256xbf16, #tpu.memory_space<vmem>>, %arg17: memref<64x32xf32, #tpu.memory_space<vmem>>, %arg18: memref<5x5x128xf32, #tpu.memory_space<vmem>>, %arg19: memref<16x512xbf16, #tpu.memory_space<vmem>>, %arg20: memref<16x64xf32, #tpu.memory_space<vmem>>, %arg21: memref<3x3x256xf32, #tpu.memory_space<vmem>>, %arg22: memref<4x1024xbf16, #tpu.memory_space<vmem>>) attributes {dimension_semantics = [#tpu.dimension_semantics<parallel>], iteration_bounds = array<i64: 2>, scalar_prefetch = 0 : i64, scratch_operands = 10 : i64, tpu.core_type = #tpu.core_type<tc>, window_params = [{transform_indices = @transform_0, window_bounds = array<i64: 1, 17, 17, 12>}, {pipeline_mode = #tpu.pipeline_mode<synchronous>, transform_indices = @transform_1, window_bounds = array<i64: 48, 16>}, {pipeline_mode = #tpu.pipeline_mode<synchronous>, transform_indices = @transform_2, window_bounds = array<i64: 1, 16>}, {pipeline_mode = #tpu.pipeline_mode<synchronous>, transform_indices = @transform_3, window_bounds = array<i64: 256, 32>}, {pipeline_mode = #tpu.pipeline_mode<synchronous>, transform_indices = @transform_4, window_bounds = array<i64: 1, 32>}, {pipeline_mode = #tpu.pipeline_mode<synchronous>, transform_indices = @transform_5, window_bounds = array<i64: 512, 64>}, {pipeline_mode = #tpu.pipeline_mode<synchronous>, transform_indices = @transform_6, window_bounds = array<i64: 1, 64>}, {pipeline_mode = #tpu.pipeline_mode<synchronous>, transform_indices = @transform_7, window_bounds = array<i64: 1024, 128>}, {pipeline_mode = #tpu.pipeline_mode<synchronous>, transform_indices = @transform_8, window_bounds = array<i64: 1, 128>}, {pipeline_mode = #tpu.pipeline_mode<synchronous>, transform_indices = @transform_9, window_bounds = array<i64: 4, 128>}, {pipeline_mode = #tpu.pipeline_mode<synchronous>, transform_indices = @transform_10, window_bounds = array<i64: 1, 1>}, {transform_indices = @transform_11, window_bounds = array<i64: 1, 8, 128>}]} {
    %c0 = arith.constant 0 : index
    %c0_0 = arith.constant 0 : index
    %c0_1 = arith.constant 0 : index
    %c0_2 = arith.constant 0 : index
    %0 = vector.load %arg1[%c0, %c0_0, %c0_1, %c0_2] : memref<1x17x17x12xf32, #tpu.memory_space<vmem>>, vector<1x16x16x12xf32>
    %1 = vector.shape_cast %0 : vector<1x16x16x12xf32> to vector<16x16x12xf32>
    %2 = vector.shape_cast %1 : vector<16x16x12xf32> to vector<256x12xf32>
    %3 = arith.truncf %2 : vector<256x12xf32> to vector<256x12xbf16>
    %c0_3 = arith.constant 0 : index
    %c0_4 = arith.constant 0 : index
    %4 = vector.load %arg13[%c0_3, %c0_4] : memref<256x48xbf16, #tpu.memory_space<vmem>>, vector<256x12xbf16>
    tpu.vector_store %arg13[%c0_3, %c0_4], %3 {strides = array<i32>} : memref<256x48xbf16, #tpu.memory_space<vmem>>, vector<256x12xbf16>,
    %c0_5 = arith.constant 0 : index
    %c0_6 = arith.constant 0 : index
    %c1 = arith.constant 1 : index
    %c0_7 = arith.constant 0 : index
    %5 = vector.load %arg1[%c0_5, %c0_6, %c1, %c0_7] : memref<1x17x17x12xf32, #tpu.memory_space<vmem>>, vector<1x16x16x12xf32>
    %6 = vector.shape_cast %5 : vector<1x16x16x12xf32> to vector<16x16x12xf32>
    %7 = vector.shape_cast %6 : vector<16x16x12xf32> to vector<256x12xf32>
    %8 = arith.truncf %7 : vector<256x12xf32> to vector<256x12xbf16>
    %c0_8 = arith.constant 0 : index
    %c12 = arith.constant 12 : index
    %9 = vector.load %arg13[%c0_8, %c12] : memref<256x48xbf16, #tpu.memory_space<vmem>>, vector<256x12xbf16>
    tpu.vector_store %arg13[%c0_8, %c12], %8 {strides = array<i32>} : memref<256x48xbf16, #tpu.memory_space<vmem>>, vector<256x12xbf16>,
    %c0_9 = arith.constant 0 : index
    %c1_10 = arith.constant 1 : index
    %c0_11 = arith.constant 0 : index
    %c0_12 = arith.constant 0 : index
    %10 = vector.load %arg1[%c0_9, %c1_10, %c0_11, %c0_12] : memref<1x17x17x12xf32, #tpu.memory_space<vmem>>, vector<1x16x16x12xf32>
    %11 = vector.shape_cast %10 : vector<1x16x16x12xf32> to vector<16x16x12xf32>
    %12 = vector.shape_cast %11 : vector<16x16x12xf32> to vector<256x12xf32>
    %13 = arith.truncf %12 : vector<256x12xf32> to vector<256x12xbf16>
    %c0_13 = arith.constant 0 : index
    %c24 = arith.constant 24 : index
    %14 = vector.load %arg13[%c0_13, %c24] : memref<256x48xbf16, #tpu.memory_space<vmem>>, vector<256x12xbf16>
    tpu.vector_store %arg13[%c0_13, %c24], %13 {strides = array<i32>} : memref<256x48xbf16, #tpu.memory_space<vmem>>, vector<256x12xbf16>,
    %c0_14 = arith.constant 0 : index
    %c1_15 = arith.constant 1 : index
    %c1_16 = arith.constant 1 : index
    %c0_17 = arith.constant 0 : index
    %15 = vector.load %arg1[%c0_14, %c1_15, %c1_16, %c0_17] : memref<1x17x17x12xf32, #tpu.memory_space<vmem>>, vector<1x16x16x12xf32>
    %16 = vector.shape_cast %15 : vector<1x16x16x12xf32> to vector<16x16x12xf32>
    %17 = vector.shape_cast %16 : vector<16x16x12xf32> to vector<256x12xf32>
    %18 = arith.truncf %17 : vector<256x12xf32> to vector<256x12xbf16>
    %c0_18 = arith.constant 0 : index
    %c36 = arith.constant 36 : index
    %19 = vector.load %arg13[%c0_18, %c36] : memref<256x48xbf16, #tpu.memory_space<vmem>>, vector<256x12xbf16>
    tpu.vector_store %arg13[%c0_18, %c36], %18 {strides = array<i32>} : memref<256x48xbf16, #tpu.memory_space<vmem>>, vector<256x12xbf16>,
    %c0_19 = arith.constant 0 : index
    %c0_20 = arith.constant 0 : index
    %20 = vector.load %arg13[%c0_19, %c0_20] : memref<256x48xbf16, #tpu.memory_space<vmem>>, vector<256x48xbf16>
    %c0_21 = arith.constant 0 : index
    %c0_22 = arith.constant 0 : index
    %21 = vector.load %arg2[%c0_21, %c0_22] : memref<48x16xbf16, #tpu.memory_space<vmem>>, vector<48x16xbf16>
    %cst = arith.constant dense<0.000000e+00> : vector<256x16xf32>
    %22 = tpu.matmul %20, %21, %cst {dimension_numbers = #tpu.dot_dimension_numbers<[1], [0], [0], [1], [0, 0, 1, 1], [], []>} : vector<256x48xbf16>, vector<48x16xbf16>, vector<256x16xf32> -> vector<256x16xf32>
    %c0_23 = arith.constant 0 : index
    %c0_24 = arith.constant 0 : index
    %23 = vector.load %arg3[%c0_23, %c0_24] : memref<1x16xf32, #tpu.memory_space<vmem>>, vector<1x16xf32>
    %24 = vector.broadcast %23 : vector<1x16xf32> to vector<256x16xf32>
    %25 = arith.addf %22, %24 : vector<256x16xf32>
    %cst_25 = arith.constant 0.000000e+00 : f32
    %26 = vector.broadcast %cst_25 : f32 to vector<256x16xf32>
    %27 = arith.cmpf oge, %25, %26 : vector<256x16xf32>
    %cst_26 = arith.constant 2.000000e-01 : f32
    %28 = vector.broadcast %cst_26 : f32 to vector<256x16xf32>
    %29 = arith.mulf %28, %25 : vector<256x16xf32>
    %30 = arith.select %27, %25, %29 : vector<256x16xi1>, vector<256x16xf32>
    %cst_27 = arith.constant 0.000000e+00 : f32
    %31 = vector.broadcast %cst_27 : f32 to vector<9x9x64xf32>
    %c0_28 = arith.constant 0 : index
    %c0_29 = arith.constant 0 : index
    %c0_30 = arith.constant 0 : index
    %32 = vector.load %arg15[%c0_28, %c0_29, %c0_30] : memref<9x9x64xf32, #tpu.memory_space<vmem>>, vector<9x9x64xf32>
    tpu.vector_store %arg15[%c0_28, %c0_29, %c0_30], %31 {strides = array<i32>} : memref<9x9x64xf32, #tpu.memory_space<vmem>>, vector<9x9x64xf32>,
    %c0_31 = arith.constant 0 : index
    %c0_32 = arith.constant 0 : index
    %33 = vector.load %arg14[%c0_31, %c0_32] : memref<256x16xf32, #tpu.memory_space<vmem>>, vector<256x16xf32>
    tpu.vector_store %arg14[%c0_31, %c0_32], %30 {strides = array<i32>} : memref<256x16xf32, #tpu.memory_space<vmem>>, vector<256x16xf32>,
    %c0_33 = arith.constant 0 : index
    %c0_34 = arith.constant 0 : index
    %34 = tpu.strided_load %arg14[%c0_33, %c0_34] {strides = array<i32: 2, 1>} : memref<256x16xf32, #tpu.memory_space<vmem>>, vector<128x16xf32>
    %35 = vector.shape_cast %34 : vector<128x16xf32> to vector<8x16x16xf32>
    %c1_35 = arith.constant 1 : index
    %c0_36 = arith.constant 0 : index
    %36 = tpu.strided_load %arg14[%c1_35, %c0_36] {strides = array<i32: 2, 1>} : memref<256x16xf32, #tpu.memory_space<vmem>>, vector<128x16xf32>
    %37 = vector.shape_cast %36 : vector<128x16xf32> to vector<8x16x16xf32>
    %38 = vector.extract_strided_slice %35 {offsets = [0, 0, 0], sizes = [8, 8, 16], strides = [1, 1, 1]} : vector<8x16x16xf32> to vector<8x8x16xf32>
    %c0_37 = arith.constant 0 : index
    %c0_38 = arith.constant 0 : index
    %c48 = arith.constant 48 : index
    %39 = vector.load %arg15[%c0_37, %c0_38, %c48] : memref<9x9x64xf32, #tpu.memory_space<vmem>>, vector<8x8x16xf32>
    tpu.vector_store %arg15[%c0_37, %c0_38, %c48], %38 {strides = array<i32>} : memref<9x9x64xf32, #tpu.memory_space<vmem>>, vector<8x8x16xf32>,
    %40 = vector.extract_strided_slice %35 {offsets = [0, 8, 0], sizes = [8, 8, 16], strides = [1, 1, 1]} : vector<8x16x16xf32> to vector<8x8x16xf32>
    %c1_39 = arith.constant 1 : index
    %c0_40 = arith.constant 0 : index
    %c16 = arith.constant 16 : index
    %41 = vector.load %arg15[%c1_39, %c0_40, %c16] : memref<9x9x64xf32, #tpu.memory_space<vmem>>, vector<8x8x16xf32>
    tpu.vector_store %arg15[%c1_39, %c0_40, %c16], %40 {strides = array<i32>} : memref<9x9x64xf32, #tpu.memory_space<vmem>>, vector<8x8x16xf32>,
    %42 = vector.extract_strided_slice %37 {offsets = [0, 0, 0], sizes = [8, 8, 16], strides = [1, 1, 1]} : vector<8x16x16xf32> to vector<8x8x16xf32>
    %c0_41 = arith.constant 0 : index
    %c1_42 = arith.constant 1 : index
    %c32 = arith.constant 32 : index
    %43 = vector.load %arg15[%c0_41, %c1_42, %c32] : memref<9x9x64xf32, #tpu.memory_space<vmem>>, vector<8x8x16xf32>
    tpu.vector_store %arg15[%c0_41, %c1_42, %c32], %42 {strides = array<i32>} : memref<9x9x64xf32, #tpu.memory_space<vmem>>, vector<8x8x16xf32>,
    %44 = vector.extract_strided_slice %37 {offsets = [0, 8, 0], sizes = [8, 8, 16], strides = [1, 1, 1]} : vector<8x16x16xf32> to vector<8x8x16xf32>
    %c1_43 = arith.constant 1 : index
    %c1_44 = arith.constant 1 : index
    %c0_45 = arith.constant 0 : index
    %45 = vector.load %arg15[%c1_43, %c1_44, %c0_45] : memref<9x9x64xf32, #tpu.memory_space<vmem>>, vector<8x8x16xf32>
    tpu.vector_store %arg15[%c1_43, %c1_44, %c0_45], %44 {strides = array<i32>} : memref<9x9x64xf32, #tpu.memory_space<vmem>>, vector<8x8x16xf32>,
    %c0_46 = arith.constant 0 : index
    %c0_47 = arith.constant 0 : index
    %c0_48 = arith.constant 0 : index
    %46 = vector.load %arg15[%c0_46, %c0_47, %c0_48] : memref<9x9x64xf32, #tpu.memory_space<vmem>>, vector<8x8x64xf32>
    %47 = vector.shape_cast %46 : vector<8x8x64xf32> to vector<64x64xf32>
    %48 = arith.truncf %47 : vector<64x64xf32> to vector<64x64xbf16>
    %c0_49 = arith.constant 0 : index
    %c0_50 = arith.constant 0 : index
    %49 = vector.load %arg16[%c0_49, %c0_50] : memref<64x256xbf16, #tpu.memory_space<vmem>>, vector<64x64xbf16>
    tpu.vector_store %arg16[%c0_49, %c0_50], %48 {strides = array<i32>} : memref<64x256xbf16, #tpu.memory_space<vmem>>, vector<64x64xbf16>,
    %c0_51 = arith.constant 0 : index
    %c1_52 = arith.constant 1 : index
    %c0_53 = arith.constant 0 : index
    %50 = vector.load %arg15[%c0_51, %c1_52, %c0_53] : memref<9x9x64xf32, #tpu.memory_space<vmem>>, vector<8x8x64xf32>
    %51 = vector.shape_cast %50 : vector<8x8x64xf32> to vector<64x64xf32>
    %52 = arith.truncf %51 : vector<64x64xf32> to vector<64x64xbf16>
    %c0_54 = arith.constant 0 : index
    %c64 = arith.constant 64 : index
    %53 = vector.load %arg16[%c0_54, %c64] : memref<64x256xbf16, #tpu.memory_space<vmem>>, vector<64x64xbf16>
    tpu.vector_store %arg16[%c0_54, %c64], %52 {strides = array<i32>} : memref<64x256xbf16, #tpu.memory_space<vmem>>, vector<64x64xbf16>,
    %c1_55 = arith.constant 1 : index
    %c0_56 = arith.constant 0 : index
    %c0_57 = arith.constant 0 : index
    %54 = vector.load %arg15[%c1_55, %c0_56, %c0_57] : memref<9x9x64xf32, #tpu.memory_space<vmem>>, vector<8x8x64xf32>
    %55 = vector.shape_cast %54 : vector<8x8x64xf32> to vector<64x64xf32>
    %56 = arith.truncf %55 : vector<64x64xf32> to vector<64x64xbf16>
    %c0_58 = arith.constant 0 : index
    %c128 = arith.constant 128 : index
    %57 = vector.load %arg16[%c0_58, %c128] : memref<64x256xbf16, #tpu.memory_space<vmem>>, vector<64x64xbf16>
    tpu.vector_store %arg16[%c0_58, %c128], %56 {strides = array<i32>} : memref<64x256xbf16, #tpu.memory_space<vmem>>, vector<64x64xbf16>,
    %c1_59 = arith.constant 1 : index
    %c1_60 = arith.constant 1 : index
    %c0_61 = arith.constant 0 : index
    %58 = vector.load %arg15[%c1_59, %c1_60, %c0_61] : memref<9x9x64xf32, #tpu.memory_space<vmem>>, vector<8x8x64xf32>
    %59 = vector.shape_cast %58 : vector<8x8x64xf32> to vector<64x64xf32>
    %60 = arith.truncf %59 : vector<64x64xf32> to vector<64x64xbf16>
    %c0_62 = arith.constant 0 : index
    %c192 = arith.constant 192 : index
    %61 = vector.load %arg16[%c0_62, %c192] : memref<64x256xbf16, #tpu.memory_space<vmem>>, vector<64x64xbf16>
    tpu.vector_store %arg16[%c0_62, %c192], %60 {strides = array<i32>} : memref<64x256xbf16, #tpu.memory_space<vmem>>, vector<64x64xbf16>,
    %c0_63 = arith.constant 0 : index
    %c0_64 = arith.constant 0 : index
    %62 = vector.load %arg16[%c0_63, %c0_64] : memref<64x256xbf16, #tpu.memory_space<vmem>>, vector<64x256xbf16>
    %c0_65 = arith.constant 0 : index
    %c0_66 = arith.constant 0 : index
    %63 = vector.load %arg4[%c0_65, %c0_66] : memref<256x32xbf16, #tpu.memory_space<vmem>>, vector<256x32xbf16>
    %cst_67 = arith.constant dense<0.000000e+00> : vector<64x32xf32>
    %64 = tpu.matmul %62, %63, %cst_67 {dimension_numbers = #tpu.dot_dimension_numbers<[1], [0], [0], [1], [0, 0, 1, 1], [], []>} : vector<64x256xbf16>, vector<256x32xbf16>, vector<64x32xf32> -> vector<64x32xf32>
    %c0_68 = arith.constant 0 : index
    %c0_69 = arith.constant 0 : index
    %65 = vector.load %arg5[%c0_68, %c0_69] : memref<1x32xf32, #tpu.memory_space<vmem>>, vector<1x32xf32>
    %66 = vector.broadcast %65 : vector<1x32xf32> to vector<64x32xf32>
    %67 = arith.addf %64, %66 : vector<64x32xf32>
    %cst_70 = arith.constant 0.000000e+00 : f32
    %68 = vector.broadcast %cst_70 : f32 to vector<64x32xf32>
    %69 = arith.cmpf oge, %67, %68 : vector<64x32xf32>
    %cst_71 = arith.constant 2.000000e-01 : f32
    %70 = vector.broadcast %cst_71 : f32 to vector<64x32xf32>
    %71 = arith.mulf %70, %67 : vector<64x32xf32>
    %72 = arith.select %69, %67, %71 : vector<64x32xi1>, vector<64x32xf32>
    %cst_72 = arith.constant 0.000000e+00 : f32
    %73 = vector.broadcast %cst_72 : f32 to vector<5x5x128xf32>
    %c0_73 = arith.constant 0 : index
    %c0_74 = arith.constant 0 : index
    %c0_75 = arith.constant 0 : index
    %74 = vector.load %arg18[%c0_73, %c0_74, %c0_75] : memref<5x5x128xf32, #tpu.memory_space<vmem>>, vector<5x5x128xf32>
    tpu.vector_store %arg18[%c0_73, %c0_74, %c0_75], %73 {strides = array<i32>} : memref<5x5x128xf32, #tpu.memory_space<vmem>>, vector<5x5x128xf32>,
    %c0_76 = arith.constant 0 : index
    %c0_77 = arith.constant 0 : index
    %75 = vector.load %arg17[%c0_76, %c0_77] : memref<64x32xf32, #tpu.memory_space<vmem>>, vector<64x32xf32>
    tpu.vector_store %arg17[%c0_76, %c0_77], %72 {strides = array<i32>} : memref<64x32xf32, #tpu.memory_space<vmem>>, vector<64x32xf32>,
    %c0_78 = arith.constant 0 : index
    %c0_79 = arith.constant 0 : index
    %76 = tpu.strided_load %arg17[%c0_78, %c0_79] {strides = array<i32: 2, 1>} : memref<64x32xf32, #tpu.memory_space<vmem>>, vector<32x32xf32>
    %77 = vector.shape_cast %76 : vector<32x32xf32> to vector<4x8x32xf32>
    %c1_80 = arith.constant 1 : index
    %c0_81 = arith.constant 0 : index
    %78 = tpu.strided_load %arg17[%c1_80, %c0_81] {strides = array<i32: 2, 1>} : memref<64x32xf32, #tpu.memory_space<vmem>>, vector<32x32xf32>
    %79 = vector.shape_cast %78 : vector<32x32xf32> to vector<4x8x32xf32>
    %80 = vector.extract_strided_slice %77 {offsets = [0, 0, 0], sizes = [4, 4, 32], strides = [1, 1, 1]} : vector<4x8x32xf32> to vector<4x4x32xf32>
    %c0_82 = arith.constant 0 : index
    %c0_83 = arith.constant 0 : index
    %c96 = arith.constant 96 : index
    %81 = vector.load %arg18[%c0_82, %c0_83, %c96] : memref<5x5x128xf32, #tpu.memory_space<vmem>>, vector<4x4x32xf32>
    tpu.vector_store %arg18[%c0_82, %c0_83, %c96], %80 {strides = array<i32>} : memref<5x5x128xf32, #tpu.memory_space<vmem>>, vector<4x4x32xf32>,
    %82 = vector.extract_strided_slice %77 {offsets = [0, 4, 0], sizes = [4, 4, 32], strides = [1, 1, 1]} : vector<4x8x32xf32> to vector<4x4x32xf32>
    %c1_84 = arith.constant 1 : index
    %c0_85 = arith.constant 0 : index
    %c32_86 = arith.constant 32 : index
    %83 = vector.load %arg18[%c1_84, %c0_85, %c32_86] : memref<5x5x128xf32, #tpu.memory_space<vmem>>, vector<4x4x32xf32>
    tpu.vector_store %arg18[%c1_84, %c0_85, %c32_86], %82 {strides = array<i32>} : memref<5x5x128xf32, #tpu.memory_space<vmem>>, vector<4x4x32xf32>,
    %84 = vector.extract_strided_slice %79 {offsets = [0, 0, 0], sizes = [4, 4, 32], strides = [1, 1, 1]} : vector<4x8x32xf32> to vector<4x4x32xf32>
    %c0_87 = arith.constant 0 : index
    %c1_88 = arith.constant 1 : index
    %c64_89 = arith.constant 64 : index
    %85 = vector.load %arg18[%c0_87, %c1_88, %c64_89] : memref<5x5x128xf32, #tpu.memory_space<vmem>>, vector<4x4x32xf32>
    tpu.vector_store %arg18[%c0_87, %c1_88, %c64_89], %84 {strides = array<i32>} : memref<5x5x128xf32, #tpu.memory_space<vmem>>, vector<4x4x32xf32>,
    %86 = vector.extract_strided_slice %79 {offsets = [0, 4, 0], sizes = [4, 4, 32], strides = [1, 1, 1]} : vector<4x8x32xf32> to vector<4x4x32xf32>
    %c1_90 = arith.constant 1 : index
    %c1_91 = arith.constant 1 : index
    %c0_92 = arith.constant 0 : index
    %87 = vector.load %arg18[%c1_90, %c1_91, %c0_92] : memref<5x5x128xf32, #tpu.memory_space<vmem>>, vector<4x4x32xf32>
    tpu.vector_store %arg18[%c1_90, %c1_91, %c0_92], %86 {strides = array<i32>} : memref<5x5x128xf32, #tpu.memory_space<vmem>>, vector<4x4x32xf32>,
    %c0_93 = arith.constant 0 : index
    %c0_94 = arith.constant 0 : index
    %c0_95 = arith.constant 0 : index
    %88 = vector.load %arg18[%c0_93, %c0_94, %c0_95] : memref<5x5x128xf32, #tpu.memory_space<vmem>>, vector<4x4x128xf32>
    %89 = vector.shape_cast %88 : vector<4x4x128xf32> to vector<16x128xf32>
    %90 = arith.truncf %89 : vector<16x128xf32> to vector<16x128xbf16>
    %c0_96 = arith.constant 0 : index
    %c0_97 = arith.constant 0 : index
    %91 = vector.load %arg19[%c0_96, %c0_97] : memref<16x512xbf16, #tpu.memory_space<vmem>>, vector<16x128xbf16>
    tpu.vector_store %arg19[%c0_96, %c0_97], %90 {strides = array<i32>} : memref<16x512xbf16, #tpu.memory_space<vmem>>, vector<16x128xbf16>,
    %c0_98 = arith.constant 0 : index
    %c1_99 = arith.constant 1 : index
    %c0_100 = arith.constant 0 : index
    %92 = vector.load %arg18[%c0_98, %c1_99, %c0_100] : memref<5x5x128xf32, #tpu.memory_space<vmem>>, vector<4x4x128xf32>
    %93 = vector.shape_cast %92 : vector<4x4x128xf32> to vector<16x128xf32>
    %94 = arith.truncf %93 : vector<16x128xf32> to vector<16x128xbf16>
    %c0_101 = arith.constant 0 : index
    %c128_102 = arith.constant 128 : index
    %95 = vector.load %arg19[%c0_101, %c128_102] : memref<16x512xbf16, #tpu.memory_space<vmem>>, vector<16x128xbf16>
    tpu.vector_store %arg19[%c0_101, %c128_102], %94 {strides = array<i32>} : memref<16x512xbf16, #tpu.memory_space<vmem>>, vector<16x128xbf16>,
    %c1_103 = arith.constant 1 : index
    %c0_104 = arith.constant 0 : index
    %c0_105 = arith.constant 0 : index
    %96 = vector.load %arg18[%c1_103, %c0_104, %c0_105] : memref<5x5x128xf32, #tpu.memory_space<vmem>>, vector<4x4x128xf32>
    %97 = vector.shape_cast %96 : vector<4x4x128xf32> to vector<16x128xf32>
    %98 = arith.truncf %97 : vector<16x128xf32> to vector<16x128xbf16>
    %c0_106 = arith.constant 0 : index
    %c256 = arith.constant 256 : index
    %99 = vector.load %arg19[%c0_106, %c256] : memref<16x512xbf16, #tpu.memory_space<vmem>>, vector<16x128xbf16>
    tpu.vector_store %arg19[%c0_106, %c256], %98 {strides = array<i32>} : memref<16x512xbf16, #tpu.memory_space<vmem>>, vector<16x128xbf16>,
    %c1_107 = arith.constant 1 : index
    %c1_108 = arith.constant 1 : index
    %c0_109 = arith.constant 0 : index
    %100 = vector.load %arg18[%c1_107, %c1_108, %c0_109] : memref<5x5x128xf32, #tpu.memory_space<vmem>>, vector<4x4x128xf32>
    %101 = vector.shape_cast %100 : vector<4x4x128xf32> to vector<16x128xf32>
    %102 = arith.truncf %101 : vector<16x128xf32> to vector<16x128xbf16>
    %c0_110 = arith.constant 0 : index
    %c384 = arith.constant 384 : index
    %103 = vector.load %arg19[%c0_110, %c384] : memref<16x512xbf16, #tpu.memory_space<vmem>>, vector<16x128xbf16>
    tpu.vector_store %arg19[%c0_110, %c384], %102 {strides = array<i32>} : memref<16x512xbf16, #tpu.memory_space<vmem>>, vector<16x128xbf16>,
    %c0_111 = arith.constant 0 : index
    %c0_112 = arith.constant 0 : index
    %104 = vector.load %arg19[%c0_111, %c0_112] : memref<16x512xbf16, #tpu.memory_space<vmem>>, vector<16x512xbf16>
    %c0_113 = arith.constant 0 : index
    %c0_114 = arith.constant 0 : index
    %105 = vector.load %arg6[%c0_113, %c0_114] : memref<512x64xbf16, #tpu.memory_space<vmem>>, vector<512x64xbf16>
    %cst_115 = arith.constant dense<0.000000e+00> : vector<16x64xf32>
    %106 = tpu.matmul %104, %105, %cst_115 {dimension_numbers = #tpu.dot_dimension_numbers<[1], [0], [0], [1], [0, 0, 1, 1], [], []>} : vector<16x512xbf16>, vector<512x64xbf16>, vector<16x64xf32> -> vector<16x64xf32>
    %c0_116 = arith.constant 0 : index
    %c0_117 = arith.constant 0 : index
    %107 = vector.load %arg7[%c0_116, %c0_117] : memref<1x64xf32, #tpu.memory_space<vmem>>, vector<1x64xf32>
    %108 = vector.broadcast %107 : vector<1x64xf32> to vector<16x64xf32>
    %109 = arith.addf %106, %108 : vector<16x64xf32>
    %cst_118 = arith.constant 0.000000e+00 : f32
    %110 = vector.broadcast %cst_118 : f32 to vector<16x64xf32>
    %111 = arith.cmpf oge, %109, %110 : vector<16x64xf32>
    %cst_119 = arith.constant 2.000000e-01 : f32
    %112 = vector.broadcast %cst_119 : f32 to vector<16x64xf32>
    %113 = arith.mulf %112, %109 : vector<16x64xf32>
    %114 = arith.select %111, %109, %113 : vector<16x64xi1>, vector<16x64xf32>
    %cst_120 = arith.constant 0.000000e+00 : f32
    %115 = vector.broadcast %cst_120 : f32 to vector<3x3x256xf32>
    %c0_121 = arith.constant 0 : index
    %c0_122 = arith.constant 0 : index
    %c0_123 = arith.constant 0 : index
    %116 = vector.load %arg21[%c0_121, %c0_122, %c0_123] : memref<3x3x256xf32, #tpu.memory_space<vmem>>, vector<3x3x256xf32>
    tpu.vector_store %arg21[%c0_121, %c0_122, %c0_123], %115 {strides = array<i32>} : memref<3x3x256xf32, #tpu.memory_space<vmem>>, vector<3x3x256xf32>,
    %c0_124 = arith.constant 0 : index
    %c0_125 = arith.constant 0 : index
    %117 = vector.load %arg20[%c0_124, %c0_125] : memref<16x64xf32, #tpu.memory_space<vmem>>, vector<16x64xf32>
    tpu.vector_store %arg20[%c0_124, %c0_125], %114 {strides = array<i32>} : memref<16x64xf32, #tpu.memory_space<vmem>>, vector<16x64xf32>,
    %c0_126 = arith.constant 0 : index
    %c0_127 = arith.constant 0 : index
    %118 = tpu.strided_load %arg20[%c0_126, %c0_127] {strides = array<i32: 2, 1>} : memref<16x64xf32, #tpu.memory_space<vmem>>, vector<8x64xf32>
    %119 = vector.shape_cast %118 : vector<8x64xf32> to vector<2x4x64xf32>
    %c1_128 = arith.constant 1 : index
    %c0_129 = arith.constant 0 : index
    %120 = tpu.strided_load %arg20[%c1_128, %c0_129] {strides = array<i32: 2, 1>} : memref<16x64xf32, #tpu.memory_space<vmem>>, vector<8x64xf32>
    %121 = vector.shape_cast %120 : vector<8x64xf32> to vector<2x4x64xf32>
    %122 = vector.extract_strided_slice %119 {offsets = [0, 0, 0], sizes = [2, 2, 64], strides = [1, 1, 1]} : vector<2x4x64xf32> to vector<2x2x64xf32>
    %c0_130 = arith.constant 0 : index
    %c0_131 = arith.constant 0 : index
    %c192_132 = arith.constant 192 : index
    %123 = vector.load %arg21[%c0_130, %c0_131, %c192_132] : memref<3x3x256xf32, #tpu.memory_space<vmem>>, vector<2x2x64xf32>
    tpu.vector_store %arg21[%c0_130, %c0_131, %c192_132], %122 {strides = array<i32>} : memref<3x3x256xf32, #tpu.memory_space<vmem>>, vector<2x2x64xf32>,
    %124 = vector.extract_strided_slice %119 {offsets = [0, 2, 0], sizes = [2, 2, 64], strides = [1, 1, 1]} : vector<2x4x64xf32> to vector<2x2x64xf32>
    %c1_133 = arith.constant 1 : index
    %c0_134 = arith.constant 0 : index
    %c64_135 = arith.constant 64 : index
    %125 = vector.load %arg21[%c1_133, %c0_134, %c64_135] : memref<3x3x256xf32, #tpu.memory_space<vmem>>, vector<2x2x64xf32>
    tpu.vector_store %arg21[%c1_133, %c0_134, %c64_135], %124 {strides = array<i32>} : memref<3x3x256xf32, #tpu.memory_space<vmem>>, vector<2x2x64xf32>,
    %126 = vector.extract_strided_slice %121 {offsets = [0, 0, 0], sizes = [2, 2, 64], strides = [1, 1, 1]} : vector<2x4x64xf32> to vector<2x2x64xf32>
    %c0_136 = arith.constant 0 : index
    %c1_137 = arith.constant 1 : index
    %c128_138 = arith.constant 128 : index
    %127 = vector.load %arg21[%c0_136, %c1_137, %c128_138] : memref<3x3x256xf32, #tpu.memory_space<vmem>>, vector<2x2x64xf32>
    tpu.vector_store %arg21[%c0_136, %c1_137, %c128_138], %126 {strides = array<i32>} : memref<3x3x256xf32, #tpu.memory_space<vmem>>, vector<2x2x64xf32>,
    %128 = vector.extract_strided_slice %121 {offsets = [0, 2, 0], sizes = [2, 2, 64], strides = [1, 1, 1]} : vector<2x4x64xf32> to vector<2x2x64xf32>
    %c1_139 = arith.constant 1 : index
    %c1_140 = arith.constant 1 : index
    %c0_141 = arith.constant 0 : index
    %129 = vector.load %arg21[%c1_139, %c1_140, %c0_141] : memref<3x3x256xf32, #tpu.memory_space<vmem>>, vector<2x2x64xf32>
    tpu.vector_store %arg21[%c1_139, %c1_140, %c0_141], %128 {strides = array<i32>} : memref<3x3x256xf32, #tpu.memory_space<vmem>>, vector<2x2x64xf32>,
    %c0_142 = arith.constant 0 : index
    %c0_143 = arith.constant 0 : index
    %c0_144 = arith.constant 0 : index
    %130 = vector.load %arg21[%c0_142, %c0_143, %c0_144] : memref<3x3x256xf32, #tpu.memory_space<vmem>>, vector<2x2x256xf32>
    %131 = vector.shape_cast %130 : vector<2x2x256xf32> to vector<4x256xf32>
    %132 = arith.truncf %131 : vector<4x256xf32> to vector<4x256xbf16>
    %c0_145 = arith.constant 0 : index
    %c0_146 = arith.constant 0 : index
    %133 = vector.load %arg22[%c0_145, %c0_146] : memref<4x1024xbf16, #tpu.memory_space<vmem>>, vector<4x256xbf16>
    tpu.vector_store %arg22[%c0_145, %c0_146], %132 {strides = array<i32>} : memref<4x1024xbf16, #tpu.memory_space<vmem>>, vector<4x256xbf16>,
    %c0_147 = arith.constant 0 : index
    %c1_148 = arith.constant 1 : index
    %c0_149 = arith.constant 0 : index
    %134 = vector.load %arg21[%c0_147, %c1_148, %c0_149] : memref<3x3x256xf32, #tpu.memory_space<vmem>>, vector<2x2x256xf32>
    %135 = vector.shape_cast %134 : vector<2x2x256xf32> to vector<4x256xf32>
    %136 = arith.truncf %135 : vector<4x256xf32> to vector<4x256xbf16>
    %c0_150 = arith.constant 0 : index
    %c256_151 = arith.constant 256 : index
    %137 = vector.load %arg22[%c0_150, %c256_151] : memref<4x1024xbf16, #tpu.memory_space<vmem>>, vector<4x256xbf16>
    tpu.vector_store %arg22[%c0_150, %c256_151], %136 {strides = array<i32>} : memref<4x1024xbf16, #tpu.memory_space<vmem>>, vector<4x256xbf16>,
    %c1_152 = arith.constant 1 : index
    %c0_153 = arith.constant 0 : index
    %c0_154 = arith.constant 0 : index
    %138 = vector.load %arg21[%c1_152, %c0_153, %c0_154] : memref<3x3x256xf32, #tpu.memory_space<vmem>>, vector<2x2x256xf32>
    %139 = vector.shape_cast %138 : vector<2x2x256xf32> to vector<4x256xf32>
    %140 = arith.truncf %139 : vector<4x256xf32> to vector<4x256xbf16>
    %c0_155 = arith.constant 0 : index
    %c512 = arith.constant 512 : index
    %141 = vector.load %arg22[%c0_155, %c512] : memref<4x1024xbf16, #tpu.memory_space<vmem>>, vector<4x256xbf16>
    tpu.vector_store %arg22[%c0_155, %c512], %140 {strides = array<i32>} : memref<4x1024xbf16, #tpu.memory_space<vmem>>, vector<4x256xbf16>,
    %c1_156 = arith.constant 1 : index
    %c1_157 = arith.constant 1 : index
    %c0_158 = arith.constant 0 : index
    %142 = vector.load %arg21[%c1_156, %c1_157, %c0_158] : memref<3x3x256xf32, #tpu.memory_space<vmem>>, vector<2x2x256xf32>
    %143 = vector.shape_cast %142 : vector<2x2x256xf32> to vector<4x256xf32>
    %144 = arith.truncf %143 : vector<4x256xf32> to vector<4x256xbf16>
    %c0_159 = arith.constant 0 : index
    %c768 = arith.constant 768 : index
    %145 = vector.load %arg22[%c0_159, %c768] : memref<4x1024xbf16, #tpu.memory_space<vmem>>, vector<4x256xbf16>
    tpu.vector_store %arg22[%c0_159, %c768], %144 {strides = array<i32>} : memref<4x1024xbf16, #tpu.memory_space<vmem>>, vector<4x256xbf16>,
    %c0_160 = arith.constant 0 : index
    %c0_161 = arith.constant 0 : index
    %146 = vector.load %arg22[%c0_160, %c0_161] : memref<4x1024xbf16, #tpu.memory_space<vmem>>, vector<4x1024xbf16>
    %c0_162 = arith.constant 0 : index
    %c0_163 = arith.constant 0 : index
    %147 = vector.load %arg8[%c0_162, %c0_163] : memref<1024x128xbf16, #tpu.memory_space<vmem>>, vector<1024x128xbf16>
    %cst_164 = arith.constant dense<0.000000e+00> : vector<4x128xf32>
    %148 = tpu.matmul %146, %147, %cst_164 {dimension_numbers = #tpu.dot_dimension_numbers<[1], [0], [0], [1], [0, 0, 1, 1], [], []>} : vector<4x1024xbf16>, vector<1024x128xbf16>, vector<4x128xf32> -> vector<4x128xf32>
    %c0_165 = arith.constant 0 : index
    %c0_166 = arith.constant 0 : index
    %149 = vector.load %arg9[%c0_165, %c0_166] : memref<1x128xf32, #tpu.memory_space<vmem>>, vector<1x128xf32>
    %150 = vector.broadcast %149 : vector<1x128xf32> to vector<4x128xf32>
    %151 = arith.addf %148, %150 : vector<4x128xf32>
    %c0_167 = arith.constant 0 : index
    %c0_168 = arith.constant 0 : index
    %152 = vector.load %arg10[%c0_167, %c0_168] : memref<4x128xf32, #tpu.memory_space<vmem>>, vector<4x128xf32>
    %153 = arith.mulf %151, %152 : vector<4x128xf32>
    %cst_169 = arith.constant dense<0.000000e+00> : vector<128xf32>
    %154 = vector.multi_reduction <add>, %153, %cst_169 [0] : vector<4x128xf32> to vector<128xf32>
    %155 = vector.shape_cast %154 : vector<128xf32> to vector<1x128xf32>
    %cst_170 = arith.constant dense<0.000000e+00> : vector<1xf32>
    %156 = vector.multi_reduction <add>, %155, %cst_170 [1] : vector<1x128xf32> to vector<1xf32>
    %157 = vector.shape_cast %156 : vector<1xf32> to vector<1x1xf32>
    %c0_171 = arith.constant 0 : index
    %c0_172 = arith.constant 0 : index
    %158 = vector.load %arg11[%c0_171, %c0_172] : memref<1x1xf32, #tpu.memory_space<vmem>>, vector<1x1xf32>
    %159 = arith.addf %157, %158 : vector<1x1xf32>
    %cst_173 = arith.constant 0.000000e+00 : f32
    %160 = vector.broadcast %cst_173 : f32 to vector<1x1xf32>
    %161 = arith.cmpf oge, %159, %160 : vector<1x1xf32>
    %cst_174 = arith.constant 2.000000e+00 : f32
    %162 = vector.broadcast %cst_174 : f32 to vector<1x1xf32>
    %163 = arith.mulf %162, %159 : vector<1x1xf32>
    %164 = arith.select %161, %159, %163 : vector<1x1xi1>, vector<1x1xf32>
    %165 = vector.shape_cast %164 : vector<1x1xf32> to vector<1x1xf32>
    %166 = vector.broadcast %165 : vector<1x1xf32> to vector<8x128xf32>
    %c0_175 = arith.constant 0 : index
    %c0_176 = arith.constant 0 : index
    %c0_177 = arith.constant 0 : index
    %167 = vector.load %arg12[%c0_175, %c0_176, %c0_177] : memref<1x8x128xf32, #tpu.memory_space<vmem>>, vector<1x8x128xf32>
    %168 = vector.shape_cast %167 : vector<1x8x128xf32> to vector<8x128xf32>
    %169 = vector.shape_cast %166 : vector<8x128xf32> to vector<1x8x128xf32>
    tpu.vector_store %arg12[%c0_175, %c0_176, %c0_177], %169 {strides = array<i32>} : memref<1x8x128xf32, #tpu.memory_space<vmem>>, vector<1x8x128xf32>,
    return
  }
  func.func @transform_0(%arg0: i32) -> (i32, i32, i32, i32) {
    %c0_i32 = arith.constant 0 : i32
    %c0_i32_0 = arith.constant 0 : i32
    %c0_i32_1 = arith.constant 0 : i32
    %c0_i32_2 = arith.constant 0 : i32
    return %arg0, %c0_i32, %c0_i32_0, %c0_i32_1 : i32, i32, i32, i32
  }
  func.func @transform_1(%arg0: i32) -> (i32, i32) {
    %c0_i32 = arith.constant 0 : i32
    %c0_i32_0 = arith.constant 0 : i32
    %c0_i32_1 = arith.constant 0 : i32
    return %c0_i32, %c0_i32_0 : i32, i32
  }
  func.func @transform_2(%arg0: i32) -> (i32, i32) {
    %c0_i32 = arith.constant 0 : i32
    %c0_i32_0 = arith.constant 0 : i32
    %c0_i32_1 = arith.constant 0 : i32
    return %c0_i32, %c0_i32_0 : i32, i32
  }
  func.func @transform_3(%arg0: i32) -> (i32, i32) {
    %c0_i32 = arith.constant 0 : i32
    %c0_i32_0 = arith.constant 0 : i32
    %c0_i32_1 = arith.constant 0 : i32
    return %c0_i32, %c0_i32_0 : i32, i32
  }
  func.func @transform_4(%arg0: i32) -> (i32, i32) {
    %c0_i32 = arith.constant 0 : i32
    %c0_i32_0 = arith.constant 0 : i32
    %c0_i32_1 = arith.constant 0 : i32
    return %c0_i32, %c0_i32_0 : i32, i32
  }
  func.func @transform_5(%arg0: i32) -> (i32, i32) {
    %c0_i32 = arith.constant 0 : i32
    %c0_i32_0 = arith.constant 0 : i32
    %c0_i32_1 = arith.constant 0 : i32
    return %c0_i32, %c0_i32_0 : i32, i32
  }
  func.func @transform_6(%arg0: i32) -> (i32, i32) {
    %c0_i32 = arith.constant 0 : i32
    %c0_i32_0 = arith.constant 0 : i32
    %c0_i32_1 = arith.constant 0 : i32
    return %c0_i32, %c0_i32_0 : i32, i32
  }
  func.func @transform_7(%arg0: i32) -> (i32, i32) {
    %c0_i32 = arith.constant 0 : i32
    %c0_i32_0 = arith.constant 0 : i32
    %c0_i32_1 = arith.constant 0 : i32
    return %c0_i32, %c0_i32_0 : i32, i32
  }
  func.func @transform_8(%arg0: i32) -> (i32, i32) {
    %c0_i32 = arith.constant 0 : i32
    %c0_i32_0 = arith.constant 0 : i32
    %c0_i32_1 = arith.constant 0 : i32
    return %c0_i32, %c0_i32_0 : i32, i32
  }
  func.func @transform_9(%arg0: i32) -> (i32, i32) {
    %c0_i32 = arith.constant 0 : i32
    %c0_i32_0 = arith.constant 0 : i32
    %c0_i32_1 = arith.constant 0 : i32
    return %c0_i32, %c0_i32_0 : i32, i32
  }
  func.func @transform_10(%arg0: i32) -> (i32, i32) {
    %c0_i32 = arith.constant 0 : i32
    %c0_i32_0 = arith.constant 0 : i32
    %c0_i32_1 = arith.constant 0 : i32
    return %c0_i32, %c0_i32_0 : i32, i32
  }
  func.func @transform_11(%arg0: i32) -> (i32, i32, i32) {
    %c0_i32 = arith.constant 0 : i32
    %c0_i32_0 = arith.constant 0 : i32
    %c0_i32_1 = arith.constant 0 : i32
    return %arg0, %c0_i32, %c0_i32_0 : i32, i32, i32
  }
}

</mosaic_0001>

<llo_original>
// kernel: critic_forward.1
$region0: #{critic_forward.1}
  #allocation0 [shape = 'u32[]', space=smem, size = 0x4, offset = 0x4, fixed_abs, tag = 'smem constant byte address 0x4 - core index']
  #allocation1 [shape = 'u32[72,128]{1,0:T(1,128)}', space=vmem, size = 0x9000, scoped, tag = 'internal scratch']
  #allocation2 [shape = 'bf16[256,48]{1,0:T(8,128)(2,1)}', space=vmem, size = 0x10000, scoped, tag = 'scratch operand']
  #allocation3 [shape = 'f32[256,16]{1,0:T(8,128)}', space=vmem, size = 0x20000, scoped, tag = 'scratch operand']
  #allocation4 [shape = 'f32[9,9,64]{2,1,0:T(8,128)}', space=vmem, size = 0x12000, scoped, tag = 'scratch operand']
  #allocation5 [shape = 'bf16[64,256]{1,0:T(8,128)(2,1)}', space=vmem, size = 0x8000, scoped, tag = 'scratch operand']
  #allocation6 [shape = 'f32[64,32]{1,0:T(8,128)}', space=vmem, size = 0x8000, scoped, tag = 'scratch operand']
  #allocation7 [shape = 'f32[5,5,128]{2,1,0:T(8,128)}', space=vmem, size = 0x5000, scoped, tag = 'scratch operand']
  #allocation8 [shape = 'bf16[16,512]{1,0:T(8,128)(2,1)}', space=vmem, size = 0x4000, scoped, tag = 'scratch operand']
  #allocation9 [shape = 'f32[16,64]{1,0:T(8,128)}', space=vmem, size = 0x2000, scoped, tag = 'scratch operand']
  #allocation10 [shape = 'f32[3,3,256]{2,1,0:T(4,128)}', space=vmem, size = 0x3000, scoped, tag = 'scratch operand']
  #allocation11 [shape = 'bf16[4,1024]{1,0:T(4,128)(2,1)}', space=vmem, size = 0x2000, scoped, tag = 'scratch operand']
  #allocation12 [shape = 'f32[1,1]{1,0:T(1,128)S(1)}', space=vmem, size = 0x200, scoped, tag = 'scoped memory for critic_forward.1']
  %s0 = inlined_call_operand.vmem [shape: f32[2,17,17,12], index: 0, kind: input, shape index: {}]
  %s1 = inlined_call_operand.vmem [shape: bf16[48,16], index: 1, kind: input, shape index: {}]
  %s2 = inlined_call_operand.vmem [shape: f32[1,16], index: 2, kind: input, shape index: {}]
  %s3 = inlined_call_operand.vmem [shape: bf16[256,32], index: 3, kind: input, shape index: {}]
  %s4 = inlined_call_operand.vmem [shape: f32[1,32], index: 4, kind: input, shape index: {}]
  %s5 = inlined_call_operand.vmem [shape: bf16[512,64], index: 5, kind: input, shape index: {}]
  %s6 = inlined_call_operand.vmem [shape: f32[1,64], index: 6, kind: input, shape index: {}]
  %s7 = inlined_call_operand.vmem [shape: bf16[1024,128], index: 7, kind: input, shape index: {}]
  %s8 = inlined_call_operand.vmem [shape: f32[1,128], index: 8, kind: input, shape index: {}]
  %s9 = inlined_call_operand.vmem [shape: f32[4,128], index: 9, kind: input, shape index: {}]
  %s10 = inlined_call_operand.<no memory space> [shape: f32[1,1], index: 10, kind: input, shape index: {}]
  %s11 = inlined_call_operand.vmem [shape: f32[2,8,128], index: 11, kind: output, shape index: {}]
  %s12 = sld [smem:[#allocation0]]
  $region77: #{critic_forward.1} parent=0
    _
  %s14 = ssub.s32 1, %s12
  %s15 = scalar_select 0, %s14, %s12
  %v16 = vstv %s10
  %17 = vst [vmem:[#allocation12] sm:$0x1] %v16
  loop: start=0, step=1, limit=4
  $region2: #{critic_forward.1} parent=0 // loop_pre_header
    _
  $region3: #{critic_forward.1} parent=0 // loop_header
    %s19 = sphi 0, %s23
    %p20 = scmp.ge.s32.totalorder %s19, 4
    %s29 = sphi 0, %s31
    %s32 = sphi 0, %s29
    %s33 = sphi 0, %s32
    %s49 = sphi 0, %s33
    %s53 = sphi 0, %s53
    %s55 = sphi 0, %s53
    %s56 = sphi 0, %s55
    %s70 = sphi 0, %s56
    %s74 = sphi 0, %s74
    %s76 = sphi 0, %s74
    %s77 = sphi 0, %s76
    %s91 = sphi 0, %s77
    %s95 = sphi 0, %s95
    %s97 = sphi 0, %s95
    %s98 = sphi 0, %s97
    %s112 = sphi 0, %s98
    %s116 = sphi 0, %s116
    %s118 = sphi 0, %s116
    %s119 = sphi 0, %s118
    %s133 = sphi 0, %s119
    %s137 = sphi 0, %s137
    %s139 = sphi 0, %s137
    %s140 = sphi 0, %s139
    %s154 = sphi 0, %s140
    %s158 = sphi 0, %s158
    %s160 = sphi 0, %s158
    %s161 = sphi 0, %s160
    %s175 = sphi 0, %s161
    %s179 = sphi 0, %s179
    %s181 = sphi 0, %s179
    %s182 = sphi 0, %s181
    %s196 = sphi 0, %s182
    %s200 = sphi 0, %s200
    %s202 = sphi 0, %s200
    %s203 = sphi 0, %s202
    %s217 = sphi 0, %s203
    %s221 = sphi 0, %s221
    %s223 = sphi 0, %s221
    %s224 = sphi 0, %s223
    %s238 = sphi 0, %s224
    %s242 = sphi 0, %s242
    %s244 = sphi 0, %s242
    %s245 = sphi 0, %s244
    %s259 = sphi 0, %s245
    %s265 = sphi 0, %s267
    %s268 = sphi 0, %s265
    %s269 = sphi 0, %s268
    %s285 = sphi 0, %s269
  $region4: #{critic_forward.1} parent=0 // loop_header_branch
    %22 = sbr.rel (%p20) target = $region8
  $region5: #{critic_forward.1} parent=0 // loop_body
    %s24 = ssub.s32 %s19, 1
    %s25 = ssub.s32 %s19, 2
    %s26 = sadd.s32 %s19, 1
    %s27 = ssub.s32 %s19, %s26
    %p28 = scmp.eq.s32.totalorder %s27, 0
    %s30 = sadd.s32 %s29, 1
    %s31 = scalar_select %p28, %s29, %s30
    %p34 = pneg %p28
    %p35 = scmp.eq.s32.totalorder %s19, 1
    %p36 = por %p34, %p35
    %p37 = scmp.ne.s32.totalorder %s29, %s32
    %p38 = scmp.eq.s32.totalorder %s19, 0
    %p39 = por %p37, %p38
    %p40 = scmp.ne.s32.totalorder %s29, %s32
    %p41 = scmp.eq.s32.totalorder %s24, 1
    %p42 = por %p40, %p41
    %p43 = scmp.ne.s32.totalorder %s32, %s33
    %p44 = scmp.eq.s32.totalorder %s24, 0
    %p45 = por %p43, %p44
    %p46 = scmp.ne.s32.totalorder %s32, %s33
    %p47 = scmp.eq.s32.totalorder %s25, 1
    %p48 = por %p46, %p47
    %p50 = scmp.ne.s32.totalorder %s33, %s49
    %p51 = scmp.eq.s32.totalorder %s25, 0
    %p52 = por %p50, %p51
    %s54 = sadd.s32 %s53, 1
    %p57 = scmp.eq.s32.totalorder %s19, 1
    %p58 = scmp.ne.s32.totalorder %s53, %s55
    %p59 = scmp.eq.s32.totalorder %s19, 0
    %p60 = por %p58, %p59
    %p61 = scmp.ne.s32.totalorder %s53, %s55
    %p62 = scmp.eq.s32.totalorder %s24, 1
    %p63 = por %p61, %p62
    %p64 = scmp.ne.s32.totalorder %s55, %s56
    %p65 = scmp.eq.s32.totalorder %s24, 0
    %p66 = por %p64, %p65
    %p67 = scmp.ne.s32.totalorder %s55, %s56
    %p68 = scmp.eq.s32.totalorder %s25, 1
    %p69 = por %p67, %p68
    %p71 = scmp.ne.s32.totalorder %s56, %s70
    %p72 = scmp.eq.s32.totalorder %s25, 0
    %p73 = por %p71, %p72
    %s75 = sadd.s32 %s74, 1
    %p78 = scmp.eq.s32.totalorder %s19, 1
    %p79 = scmp.ne.s32.totalorder %s74, %s76
    %p80 = scmp.eq.s32.totalorder %s19, 0
    %p81 = por %p79, %p80
    %p82 = scmp.ne.s32.totalorder %s74, %s76
    %p83 = scmp.eq.s32.totalorder %s24, 1
    %p84 = por %p82, %p83
    %p85 = scmp.ne.s32.totalorder %s76, %s77
    %p86 = scmp.eq.s32.totalorder %s24, 0
    %p87 = por %p85, %p86
    %p88 = scmp.ne.s32.totalorder %s76, %s77
    %p89 = scmp.eq.s32.totalorder %s25, 1
    %p90 = por %p88, %p89
    %p92 = scmp.ne.s32.totalorder %s77, %s91
    %p93 = scmp.eq.s32.totalorder %s25, 0
    %p94 = por %p92, %p93
    %s96 = sadd.s32 %s95, 1
    %p99 = scmp.eq.s32.totalorder %s19, 1
    %p100 = scmp.ne.s32.totalorder %s95, %s97
    %p101 = scmp.eq.s32.totalorder %s19, 0
    %p102 = por %p100, %p101
    %p103 = scmp.ne.s32.totalorder %s95, %s97
    %p104 = scmp.eq.s32.totalorder %s24, 1
    %p105 = por %p103, %p104
    %p106 = scmp.ne.s32.totalorder %s97, %s98
    %p107 = scmp.eq.s32.totalorder %s24, 0
    %p108 = por %p106, %p107
    %p109 = scmp.ne.s32.totalorder %s97, %s98
    %p110 = scmp.eq.s32.totalorder %s25, 1
    %p111 = por %p109, %p110
    %p113 = scmp.ne.s32.totalorder %s98, %s112
    %p114 = scmp.eq.s32.totalorder %s25, 0
    %p115 = por %p113, %p114
    %s117 = sadd.s32 %s116, 1
    %p120 = scmp.eq.s32.totalorder %s19, 1
    %p121 = scmp.ne.s32.totalorder %s116, %s118
    %p122 = scmp.eq.s32.totalorder %s19, 0
    %p123 = por %p121, %p122
    %p124 = scmp.ne.s32.totalorder %s116, %s118
    %p125 = scmp.eq.s32.totalorder %s24, 1
    %p126 = por %p124, %p125
    %p127 = scmp.ne.s32.totalorder %s118, %s119
    %p128 = scmp.eq.s32.totalorder %s24, 0
    %p129 = por %p127, %p128
    %p130 = scmp.ne.s32.totalorder %s118, %s119
    %p131 = scmp.eq.s32.totalorder %s25, 1
    %p132 = por %p130, %p131
    %p134 = scmp.ne.s32.totalorder %s119, %s133
    %p135 = scmp.eq.s32.totalorder %s25, 0
    %p136 = por %p134, %p135
    %s138 = sadd.s32 %s137, 1
    %p141 = scmp.eq.s32.totalorder %s19, 1
    %p142 = scmp.ne.s32.totalorder %s137, %s139
    %p143 = scmp.eq.s32.totalorder %s19, 0
    %p144 = por %p142, %p143
    %p145 = scmp.ne.s32.totalorder %s137, %s139
    %p146 = scmp.eq.s32.totalorder %s24, 1
    %p147 = por %p145, %p146
    %p148 = scmp.ne.s32.totalorder %s139, %s140
    %p149 = scmp.eq.s32.totalorder %s24, 0
    %p150 = por %p148, %p149
    %p151 = scmp.ne.s32.totalorder %s139, %s140
    %p152 = scmp.eq.s32.totalorder %s25, 1
    %p153 = por %p151, %p152
    %p155 = scmp.ne.s32.totalorder %s140, %s154
    %p156 = scmp.eq.s32.totalorder %s25, 0
    %p157 = por %p155, %p156
    %s159 = sadd.s32 %s158, 1
    %p162 = scmp.eq.s32.totalorder %s19, 1
    %p163 = scmp.ne.s32.totalorder %s158, %s160
    %p164 = scmp.eq.s32.totalorder %s19, 0
    %p165 = por %p163, %p164
    %p166 = scmp.ne.s32.totalorder %s158, %s160
    %p167 = scmp.eq.s32.totalorder %s24, 1
    %p168 = por %p166, %p167
    %p169 = scmp.ne.s32.totalorder %s160, %s161
    %p170 = scmp.eq.s32.totalorder %s24, 0
    %p171 = por %p169, %p170
    %p172 = scmp.ne.s32.totalorder %s160, %s161
    %p173 = scmp.eq.s32.totalorder %s25, 1
    %p174 = por %p172, %p173
    %p176 = scmp.ne.s32.totalorder %s161, %s175
    %p177 = scmp.eq.s32.totalorder %s25, 0
    %p178 = por %p176, %p177
    %s180 = sadd.s32 %s179, 1
    %p183 = scmp.eq.s32.totalorder %s19, 1
    %p184 = scmp.ne.s32.totalorder %s179, %s181
    %p185 = scmp.eq.s32.totalorder %s19, 0
    %p186 = por %p184, %p185
    %p187 = scmp.ne.s32.totalorder %s179, %s181
    %p188 = scmp.eq.s32.totalorder %s24, 1
    %p189 = por %p187, %p188
    %p190 = scmp.ne.s32.totalorder %s181, %s182
    %p191 = scmp.eq.s32.totalorder %s24, 0
    %p192 = por %p190, %p191
    %p193 = scmp.ne.s32.totalorder %s181, %s182
    %p194 = scmp.eq.s32.totalorder %s25, 1
    %p195 = por %p193, %p194
    %p197 = scmp.ne.s32.totalorder %s182, %s196
    %p198 = scmp.eq.s32.totalorder %s25, 0
    %p199 = por %p197, %p198
    %s201 = sadd.s32 %s200, 1
    %p204 = scmp.eq.s32.totalorder %s19, 1
    %p205 = scmp.ne.s32.totalorder %s200, %s202
    %p206 = scmp.eq.s32.totalorder %s19, 0
    %p207 = por %p205, %p206
    %p208 = scmp.ne.s32.totalorder %s200, %s202
    %p209 = scmp.eq.s32.totalorder %s24, 1
    %p210 = por %p208, %p209
    %p211 = scmp.ne.s32.totalorder %s202, %s203
    %p212 = scmp.eq.s32.totalorder %s24, 0
    %p213 = por %p211, %p212
    %p214 = scmp.ne.s32.totalorder %s202, %s203
    %p215 = scmp.eq.s32.totalorder %s25, 1
    %p216 = por %p214, %p215
    %p218 = scmp.ne.s32.totalorder %s203, %s217
    %p219 = scmp.eq.s32.totalorder %s25, 0
    %p220 = por %p218, %p219
    %s222 = sadd.s32 %s221, 1
    %p225 = scmp.eq.s32.totalorder %s19, 1
    %p226 = scmp.ne.s32.totalorder %s221, %s223
    %p227 = scmp.eq.s32.totalorder %s19, 0
    %p228 = por %p226, %p227
    %p229 = scmp.ne.s32.totalorder %s221, %s223
    %p230 = scmp.eq.s32.totalorder %s24, 1
    %p231 = por %p229, %p230
    %p232 = scmp.ne.s32.totalorder %s223, %s224
    %p233 = scmp.eq.s32.totalorder %s24, 0
    %p234 = por %p232, %p233
    %p235 = scmp.ne.s32.totalorder %s223, %s224
    %p236 = scmp.eq.s32.totalorder %s25, 1
    %p237 = por %p235, %p236
    %p239 = scmp.ne.s32.totalorder %s224, %s238
    %p240 = scmp.eq.s32.totalorder %s25, 0
    %p241 = por %p239, %p240
    %s243 = sadd.s32 %s242, 1
    %p246 = scmp.eq.s32.totalorder %s19, 1
    %p247 = scmp.ne.s32.totalorder %s242, %s244
    %p248 = scmp.eq.s32.totalorder %s19, 0
    %p249 = por %p247, %p248
    %p250 = scmp.ne.s32.totalorder %s242, %s244
    %p251 = scmp.eq.s32.totalorder %s24, 1
    %p252 = por %p250, %p251
    %p253 = scmp.ne.s32.totalorder %s244, %s245
    %p254 = scmp.eq.s32.totalorder %s24, 0
    %p255 = por %p253, %p254
    %p256 = scmp.ne.s32.totalorder %s244, %s245
    %p257 = scmp.eq.s32.totalorder %s25, 1
    %p258 = por %p256, %p257
    %p260 = scmp.ne.s32.totalorder %s245, %s259
    %p261 = scmp.eq.s32.totalorder %s25, 0
    %p262 = por %p260, %p261
    %s263 = ssub.s32 %s19, %s26
    %p264 = scmp.eq.s32.totalorder %s263, 0
    %s266 = sadd.s32 %s265, 1
    %s267 = scalar_select %p264, %s265, %s266
    %p270 = pneg %p264
    %p271 = scmp.eq.s32.totalorder %s19, 1
    %p272 = por %p270, %p271
    %p273 = scmp.ne.s32.totalorder %s265, %s268
    %p274 = scmp.eq.s32.totalorder %s19, 0
    %p275 = por %p273, %p274
    %p276 = scmp.ne.s32.totalorder %s265, %s268
    %p277 = scmp.eq.s32.totalorder %s24, 1
    %p278 = por %p276, %p277
    %p279 = scmp.ne.s32.totalorder %s268, %s269
    %p280 = scmp.eq.s32.totalorder %s24, 0
    %p281 = por %p279, %p280
    %p282 = scmp.ne.s32.totalorder %s268, %s269
    %p283 = scmp.eq.s32.totalorder %s25, 1
    %p284 = por %p282, %p283
    %p286 = scmp.ne.s32.totalorder %s269, %s285
    %p287 = scmp.eq.s32.totalorder %s25, 0
    %p288 = por %p286, %p287
    %p289 = scmp.le.s32.totalorder 1, %s19
    %p290 = scmp.lt.s32.totalorder %s19, 3
    %p291 = pnand %p289, %p290
    %p292 = pneg %p291
    // Predicated region
    $region9: #{critic_forward.1} parent=5 // pred_check
      _
    $region10: #{critic_forward.1} parent=5 // pred_check_branch
      %294 = sbr.rel (%p291) target = $region12
    $region11: #{critic_forward.1} parent=5 // pred_region
      %s295 = ssub.s32 %s19, 1
      // Predicated region
      $region13: #{critic_forward.1} parent=11 // pred_check
        %p296 = pneg %p66
      $region14: #{critic_forward.1} parent=11 // pred_check_branch
        %298 = sbr.rel (%p296) target = $region16
      $region15: #{critic_forward.1} parent=11 // pred_region
        _
      $region16: #{critic_forward.1} parent=11 // pred_fallthru
        _
      // Predicated region
      $region17: #{critic_forward.1} parent=11 // pred_check
        %p299 = pneg %p87
      $region18: #{critic_forward.1} parent=11 // pred_check_branch
        %301 = sbr.rel (%p299) target = $region20
      $region19: #{critic_forward.1} parent=11 // pred_region
        _
      $region20: #{critic_forward.1} parent=11 // pred_fallthru
        _
      // Predicated region
      $region21: #{critic_forward.1} parent=11 // pred_check
        %p302 = pneg %p108
      $region22: #{critic_forward.1} parent=11 // pred_check_branch
        %304 = sbr.rel (%p302) target = $region24
      $region23: #{critic_forward.1} parent=11 // pred_region
        _
      $region24: #{critic_forward.1} parent=11 // pred_fallthru
        _
      // Predicated region
      $region25: #{critic_forward.1} parent=11 // pred_check
        %p305 = pneg %p129
      $region26: #{critic_forward.1} parent=11 // pred_check_branch
        %307 = sbr.rel (%p305) target = $region28
      $region27: #{critic_forward.1} parent=11 // pred_region
        _
      $region28: #{critic_forward.1} parent=11 // pred_fallthru
        _
      // Predicated region
      $region29: #{critic_forward.1} parent=11 // pred_check
        %p308 = pneg %p150
      $region30: #{critic_forward.1} parent=11 // pred_check_branch
        %310 = sbr.rel (%p308) target = $region32
      $region31: #{critic_forward.1} parent=11 // pred_region
        _
      $region32: #{critic_forward.1} parent=11 // pred_fallthru
        _
      // Predicated region
      $region33: #{critic_forward.1} parent=11 // pred_check
        %p311 = pneg %p171
      $region34: #{critic_forward.1} parent=11 // pred_check_branch
        %313 = sbr.rel (%p311) target = $region36
      $region35: #{critic_forward.1} parent=11 // pred_region
        _
      $region36: #{critic_forward.1} parent=11 // pred_fallthru
        _
      // Predicated region
      $region37: #{critic_forward.1} parent=11 // pred_check
        %p314 = pneg %p192
      $region38: #{critic_forward.1} parent=11 // pred_check_branch
        %316 = sbr.rel (%p314) target = $region40
      $region39: #{critic_forward.1} parent=11 // pred_region
        _
      $region40: #{critic_forward.1} parent=11 // pred_fallthru
        _
      // Predicated region
      $region41: #{critic_forward.1} parent=11 // pred_check
        %p317 = pneg %p213
      $region42: #{critic_forward.1} parent=11 // pred_check_branch
        %319 = sbr.rel (%p317) target = $region44
      $region43: #{critic_forward.1} parent=11 // pred_region
        _
      $region44: #{critic_forward.1} parent=11 // pred_fallthru
        _
      // Predicated region
      $region45: #{critic_forward.1} parent=11 // pred_check
        %p320 = pneg %p234
      $region46: #{critic_forward.1} parent=11 // pred_check_branch
        %322 = sbr.rel (%p320) target = $region48
      $region47: #{critic_forward.1} parent=11 // pred_region
        _
      $region48: #{critic_forward.1} parent=11 // pred_fallthru
        _
      // Predicated region
      $region49: #{critic_forward.1} parent=11 // pred_check
        %p323 = pneg %p255
      $region50: #{critic_forward.1} parent=11 // pred_check_branch
        %325 = sbr.rel (%p323) target = $region52
      $region51: #{critic_forward.1} parent=11 // pred_region
        _
      $region52: #{critic_forward.1} parent=11 // pred_fallthru
        _
    $region12: #{critic_forward.1} parent=5 // pred_fallthru
      _
    %p326 = scmp.lt.s32.totalorder %s19, 2
    // Predicated region
    $region53: #{critic_forward.1} parent=5 // pred_check
      %p327 = pneg %p326
    $region54: #{critic_forward.1} parent=5 // pred_check_branch
      %329 = sbr.rel (%p327) target = $region56
    $region55: #{critic_forward.1} parent=5 // pred_region
      // Predicated region
      $region57: #{critic_forward.1} parent=55 // pred_check
        %p330 = pneg %p39
      $region58: #{critic_forward.1} parent=55 // pred_check_branch
        %332 = sbr.rel (%p330) target = $region60
      $region59: #{critic_forward.1} parent=55 // pred_region
        %p333 = scmp.lt.s32.totalorder %s19, 1
        %s334 = scalar_select %p333, %s19, 1
        %s335 = smul.addr %s334, 51
        %s336 = smul.addr %s335, 8
        %s337 = scalar_lea.vmem %s0, %s336
      $region60: #{critic_forward.1} parent=55 // pred_fallthru
        _
    $region56: #{critic_forward.1} parent=5 // pred_fallthru
      _
    %p338 = scmp.le.s32.totalorder 1, %s19
    %p339 = scmp.lt.s32.totalorder %s19, 3
    %p340 = pnand %p338, %p339
    %p341 = pneg %p340
    // Predicated region
    $region61: #{critic_forward.1} parent=5 // pred_check
      _
    $region62: #{critic_forward.1} parent=5 // pred_check_branch
      %343 = sbr.rel (%p340) target = $region64
    $region63: #{critic_forward.1} parent=5 // pred_region
      %s344 = ssub.s32 %s19, 1
      %p345 = scmp.lt.s32.totalorder %s24, 1
      %s346 = scalar_select %p345, %s24, 1
      %s347 = smul.addr %s346, 51
      %s348 = smul.addr %s347, 8
      %s349 = scalar_lea.vmem %s0, %s348
      %p350 = pneg %p45
      %p351 = pneg %p42
      %p352 = pneg %p66
      %p353 = pneg %p63
      %p354 = pneg %p87
      %p355 = pneg %p84
      %p356 = pneg %p108
      %p357 = pneg %p105
      %p358 = pneg %p129
      %p359 = pneg %p126
      %p360 = pneg %p150
      %p361 = pneg %p147
      %p362 = pneg %p171
      %p363 = pneg %p168
      %p364 = pneg %p192
      %p365 = pneg %p189
      %p366 = pneg %p213
      %p367 = pneg %p210
      %p368 = pneg %p234
      %p369 = pneg %p231
      %p370 = pneg %p255
      %p371 = pneg %p252
      %p372 = pneg %p281
      %p373 = pneg %p278
      %p374 = scmp.lt.s32.totalorder %s24, 1
      %s375 = scalar_select %p374, %s24, 1
      %s376 = smul.addr %s375, 8
      %s377 = scalar_lea.vmem %s11, %s376
      %p378 = scmp.lt.s32.totalorder %s24, 1
      %s379 = scalar_select %p378, %s24, 1
      %s380 = smul.addr %s379, 51
      %s381 = smul.addr %s380, 8
      %s382 = scalar_lea.vmem %s0, %s381
      %p383 = scmp.lt.s32.totalorder %s24, 1
      %s384 = scalar_select %p383, %s24, 1
      %s385 = smul.addr %s384, 8
      %s386 = scalar_lea.vmem %s11, %s385
      %v388 = vld [vmem:[%s382] sm:$0xff]
      %v389 = vld [vmem:[%s382 + $0x8] sm:$0xff]
      %v390 = vld [vmem:[%s382 + $0x18] sm:$0xff]
      %v391 = vld [vmem:[%s382 + $0x20] sm:$0xff]
      %v392 = vld [vmem:[%s382 + $0x30] sm:$0xff]
      %v393 = vld [vmem:[%s382 + $0x38] sm:$0xff]
      %v394 = vld [vmem:[%s382 + $0x48] sm:$0xff]
      %v395 = vld [vmem:[%s382 + $0x50] sm:$0xff]
      %v396 = vld [vmem:[%s382 + $0x60] sm:$0xff]
      %v397 = vld [vmem:[%s382 + $0x68] sm:$0xff]
      %v398 = vld [vmem:[%s382 + $0x78] sm:$0xff]
      %v399 = vld [vmem:[%s382 + $0x80] sm:$0xff]
      %v400 = vld [vmem:[%s382 + $0x90] sm:$0xff]
      %v401 = vld [vmem:[%s382 + $0x98] sm:$0xff]
      %v402 = vld [vmem:[%s382 + $0xa8] sm:$0xff]
      %v403 = vld [vmem:[%s382 + $0xb0] sm:$0xff]
      %v404 = vld [vmem:[%s382 + $0xc0] sm:$0xff]
      %v405 = vld [vmem:[%s382 + $0xc8] sm:$0xff]
      %v406 = vld [vmem:[%s382 + $0xd8] sm:$0xff]
      %v407 = vld [vmem:[%s382 + $0xe0] sm:$0xff]
      %v408 = vld [vmem:[%s382 + $0xf0] sm:$0xff]
      %v409 = vld [vmem:[%s382 + $0xf8] sm:$0xff]
      %v410 = vld [vmem:[%s382 + $0x108] sm:$0xff]
      %v411 = vld [vmem:[%s382 + $0x110] sm:$0xff]
      %v412 = vld [vmem:[%s382 + $0x120] sm:$0xff]
      %v413 = vld [vmem:[%s382 + $0x128] sm:$0xff]
      %v414 = vld [vmem:[%s382 + $0x138] sm:$0xff]
      %v415 = vld [vmem:[%s382 + $0x140] sm:$0xff]
      %v416 = vld [vmem:[%s382 + $0x150] sm:$0xff]
      %v417 = vld [vmem:[%s382 + $0x158] sm:$0xff]
      %v418 = vld [vmem:[%s382 + $0x168] sm:$0xff]
      %v419 = vld [vmem:[%s382 + $0x170] sm:$0xff]
      %v420 = vpack.c.bf16 %v388, %v388
      %v421 = vpack.c.bf16 %v389, %v389
      %v422 = vpack.c.bf16 %v390, %v390
      %v423 = vpack.c.bf16 %v391, %v391
      %v424 = vpack.c.bf16 %v392, %v392
      %v425 = vpack.c.bf16 %v393, %v393
      %v426 = vpack.c.bf16 %v394, %v394
      %v427 = vpack.c.bf16 %v395, %v395
      %v428 = vpack.c.bf16 %v396, %v396
      %v429 = vpack.c.bf16 %v397, %v397
      %v430 = vpack.c.bf16 %v398, %v398
      %v431 = vpack.c.bf16 %v399, %v399
      %v432 = vpack.c.bf16 %v400, %v400
      %v433 = vpack.c.bf16 %v401, %v401
      %v434 = vpack.c.bf16 %v402, %v402
      %v435 = vpack.c.bf16 %v403, %v403
      %v436 = vpack.c.bf16 %v404, %v404
      %v437 = vpack.c.bf16 %v405, %v405
      %v438 = vpack.c.bf16 %v406, %v406
      %v439 = vpack.c.bf16 %v407, %v407
      %v440 = vpack.c.bf16 %v408, %v408
      %v441 = vpack.c.bf16 %v409, %v409
      %v442 = vpack.c.bf16 %v410, %v410
      %v443 = vpack.c.bf16 %v411, %v411
      %v444 = vpack.c.bf16 %v412, %v412
      %v445 = vpack.c.bf16 %v413, %v413
      %v446 = vpack.c.bf16 %v414, %v414
      %v447 = vpack.c.bf16 %v415, %v415
      %v448 = vpack.c.bf16 %v416, %v416
      %v449 = vpack.c.bf16 %v417, %v417
      %v450 = vpack.c.bf16 %v418, %v418
      %v451 = vpack.c.bf16 %v419, %v419
      %vm452 = vcmask 93184
      %453 = vst.msk [vmem:[#allocation2] sm:$0xf] %vm452, %v420
      %454 = vst.msk [vmem:[#allocation2 + $0x4] sm:$0xf] %vm452, %v421
      %455 = vst.msk [vmem:[#allocation2 + $0x8] sm:$0xf] %vm452, %v422
      %456 = vst.msk [vmem:[#allocation2 + $0xc] sm:$0xf] %vm452, %v423
      %457 = vst.msk [vmem:[#allocation2 + $0x10] sm:$0xf] %vm452, %v424
      %458 = vst.msk [vmem:[#allocation2 + $0x14] sm:$0xf] %vm452, %v425
      %459 = vst.msk [vmem:[#allocation2 + $0x18] sm:$0xf] %vm452, %v426
      %460 = vst.msk [vmem:[#allocation2 + $0x1c] sm:$0xf] %vm452, %v427
      %461 = vst.msk [vmem:[#allocation2 + $0x20] sm:$0xf] %vm452, %v428
      %462 = vst.msk [vmem:[#allocation2 + $0x24] sm:$0xf] %vm452, %v429
      %463 = vst.msk [vmem:[#allocation2 + $0x28] sm:$0xf] %vm452, %v430
      %464 = vst.msk [vmem:[#allocation2 + $0x2c] sm:$0xf] %vm452, %v431
      %465 = vst.msk [vmem:[#allocation2 + $0x30] sm:$0xf] %vm452, %v432
      %466 = vst.msk [vmem:[#allocation2 + $0x34] sm:$0xf] %vm452, %v433
      %467 = vst.msk [vmem:[#allocation2 + $0x38] sm:$0xf] %vm452, %v434
      %468 = vst.msk [vmem:[#allocation2 + $0x3c] sm:$0xf] %vm452, %v435
      %469 = vst.msk [vmem:[#allocation2 + $0x40] sm:$0xf] %vm452, %v436
      %470 = vst.msk [vmem:[#allocation2 + $0x44] sm:$0xf] %vm452, %v437
      %471 = vst.msk [vmem:[#allocation2 + $0x48] sm:$0xf] %vm452, %v438
      %472 = vst.msk [vmem:[#allocation2 + $0x4c] sm:$0xf] %vm452, %v439
      %473 = vst.msk [vmem:[#allocation2 + $0x50] sm:$0xf] %vm452, %v440
      %474 = vst.msk [vmem:[#allocation2 + $0x54] sm:$0xf] %vm452, %v441
      %475 = vst.msk [vmem:[#allocation2 + $0x58] sm:$0xf] %vm452, %v442
      %476 = vst.msk [vmem:[#allocation2 + $0x5c] sm:$0xf] %vm452, %v443
      %477 = vst.msk [vmem:[#allocation2 + $0x60] sm:$0xf] %vm452, %v444
      %478 = vst.msk [vmem:[#allocation2 + $0x64] sm:$0xf] %vm452, %v445
      %479 = vst.msk [vmem:[#allocation2 + $0x68] sm:$0xf] %vm452, %v446
      %480 = vst.msk [vmem:[#allocation2 + $0x6c] sm:$0xf] %vm452, %v447
      %481 = vst.msk [vmem:[#allocation2 + $0x70] sm:$0xf] %vm452, %v448
      %482 = vst.msk [vmem:[#allocation2 + $0x74] sm:$0xf] %vm452, %v449
      %483 = vst.msk [vmem:[#allocation2 + $0x78] sm:$0xf] %vm452, %v450
      %484 = vst.msk [vmem:[#allocation2 + $0x7c] sm:$0xf] %vm452, %v451
      %v485 = vld [vmem:[%s382 + $0x1] sm:$0xff]
      %v486 = vld [vmem:[%s382 + $0x9] sm:$0xff]
      %v487 = vld [vmem:[%s382 + $0x19] sm:$0xff]
      %v488 = vld [vmem:[%s382 + $0x21] sm:$0xff]
      %v489 = vld [vmem:[%s382 + $0x31] sm:$0xff]
      %v490 = vld [vmem:[%s382 + $0x39] sm:$0xff]
      %v491 = vld [vmem:[%s382 + $0x49] sm:$0xff]
      %v492 = vld [vmem:[%s382 + $0x51] sm:$0xff]
      %v493 = vld [vmem:[%s382 + $0x61] sm:$0xff]
      %v494 = vld [vmem:[%s382 + $0x69] sm:$0xff]
      %v495 = vld [vmem:[%s382 + $0x79] sm:$0xff]
      %v496 = vld [vmem:[%s382 + $0x81] sm:$0xff]
      %v497 = vld [vmem:[%s382 + $0x91] sm:$0xff]
      %v498 = vld [vmem:[%s382 + $0x99] sm:$0xff]
      %v499 = vld [vmem:[%s382 + $0xa9] sm:$0xff]
      %v500 = vld [vmem:[%s382 + $0xb1] sm:$0xff]
      %v501 = vld [vmem:[%s382 + $0xc1] sm:$0xff]
      %v502 = vld [vmem:[%s382 + $0xc9] sm:$0xff]
      %v503 = vld [vmem:[%s382 + $0xd9] sm:$0xff]
      %v504 = vld [vmem:[%s382 + $0xe1] sm:$0xff]
      %v505 = vld [vmem:[%s382 + $0xf1] sm:$0xff]
      %v506 = vld [vmem:[%s382 + $0xf9] sm:$0xff]
      %v507 = vld [vmem:[%s382 + $0x109] sm:$0xff]
      %v508 = vld [vmem:[%s382 + $0x111] sm:$0xff]
      %v509 = vld [vmem:[%s382 + $0x121] sm:$0xff]
      %v510 = vld [vmem:[%s382 + $0x129] sm:$0xff]
      %v511 = vld [vmem:[%s382 + $0x139] sm:$0xff]
      %v512 = vld [vmem:[%s382 + $0x141] sm:$0xff]
      %v513 = vld [vmem:[%s382 + $0x151] sm:$0xff]
      %v514 = vld [vmem:[%s382 + $0x159] sm:$0xff]
      %v515 = vld [vmem:[%s382 + $0x169] sm:$0xff]
      %v516 = vld [vmem:[%s382 + $0x171] sm:$0xff]
      %v517 = vpack.c.bf16 %v485, %v485
      %v518 = vpack.c.bf16 %v486, %v486
      %v519 = vpack.c.bf16 %v487, %v487
      %v520 = vpack.c.bf16 %v488, %v488
      %v521 = vpack.c.bf16 %v489, %v489
      %v522 = vpack.c.bf16 %v490, %v490
      %v523 = vpack.c.bf16 %v491, %v491
      %v524 = vpack.c.bf16 %v492, %v492
      %v525 = vpack.c.bf16 %v493, %v493
      %v526 = vpack.c.bf16 %v494, %v494
      %v527 = vpack.c.bf16 %v495, %v495
      %v528 = vpack.c.bf16 %v496, %v496
      %v529 = vpack.c.bf16 %v497, %v497
      %v530 = vpack.c.bf16 %v498, %v498
      %v531 = vpack.c.bf16 %v499, %v499
      %v532 = vpack.c.bf16 %v500, %v500
      %v533 = vpack.c.bf16 %v501, %v501
      %v534 = vpack.c.bf16 %v502, %v502
      %v535 = vpack.c.bf16 %v503, %v503
      %v536 = vpack.c.bf16 %v504, %v504
      %v537 = vpack.c.bf16 %v505, %v505
      %v538 = vpack.c.bf16 %v506, %v506
      %v539 = vpack.c.bf16 %v507, %v507
      %v540 = vpack.c.bf16 %v508, %v508
      %v541 = vpack.c.bf16 %v509, %v509
      %v542 = vpack.c.bf16 %v510, %v510
      %v543 = vpack.c.bf16 %v511, %v511
      %v544 = vpack.c.bf16 %v512, %v512
      %v545 = vpack.c.bf16 %v513, %v513
      %v546 = vpack.c.bf16 %v514, %v514
      %v547 = vpack.c.bf16 %v515, %v515
      %v548 = vpack.c.bf16 %v516, %v516
      %581 = vrot.lane.b32.xlu0 %v517, 12
      %v582 = vpop.permute.xlu0 %581
      %583 = vrot.lane.b32.xlu0 %v518, 12
      %v584 = vpop.permute.xlu0 %583
      %585 = vrot.lane.b32.xlu0 %v519, 12
      %v586 = vpop.permute.xlu0 %585
      %587 = vrot.lane.b32.xlu0 %v520, 12
      %v588 = vpop.permute.xlu0 %587
      %589 = vrot.lane.b32.xlu0 %v521, 12
      %v590 = vpop.permute.xlu0 %589
      %591 = vrot.lane.b32.xlu0 %v522, 12
      %v592 = vpop.permute.xlu0 %591
      %593 = vrot.lane.b32.xlu0 %v523, 12
      %v594 = vpop.permute.xlu0 %593
      %595 = vrot.lane.b32.xlu0 %v524, 12
      %v596 = vpop.permute.xlu0 %595
      %597 = vrot.lane.b32.xlu0 %v525, 12
      %v598 = vpop.permute.xlu0 %597
      %599 = vrot.lane.b32.xlu0 %v526, 12
      %v600 = vpop.permute.xlu0 %599
      %601 = vrot.lane.b32.xlu0 %v527, 12
      %v602 = vpop.permute.xlu0 %601
      %603 = vrot.lane.b32.xlu0 %v528, 12
      %v604 = vpop.permute.xlu0 %603
      %605 = vrot.lane.b32.xlu0 %v529, 12
      %v606 = vpop.permute.xlu0 %605
      %607 = vrot.lane.b32.xlu0 %v530, 12
      %v608 = vpop.permute.xlu0 %607
      %609 = vrot.lane.b32.xlu0 %v531, 12
      %v610 = vpop.permute.xlu0 %609
      %611 = vrot.lane.b32.xlu0 %v532, 12
      %v612 = vpop.permute.xlu0 %611
      %613 = vrot.lane.b32.xlu0 %v533, 12
      %v614 = vpop.permute.xlu0 %613
      %615 = vrot.lane.b32.xlu0 %v534, 12
      %v616 = vpop.permute.xlu0 %615
      %617 = vrot.lane.b32.xlu0 %v535, 12
      %v618 = vpop.permute.xlu0 %617
      %619 = vrot.lane.b32.xlu0 %v536, 12
      %v620 = vpop.permute.xlu0 %619
      %621 = vrot.lane.b32.xlu0 %v537, 12
      %v622 = vpop.permute.xlu0 %621
      %623 = vrot.lane.b32.xlu0 %v538, 12
      %v624 = vpop.permute.xlu0 %623
      %625 = vrot.lane.b32.xlu0 %v539, 12
      %v626 = vpop.permute.xlu0 %625
      %627 = vrot.lane.b32.xlu0 %v540, 12
      %v628 = vpop.permute.xlu0 %627
      %629 = vrot.lane.b32.xlu0 %v541, 12
      %v630 = vpop.permute.xlu0 %629
      %631 = vrot.lane.b32.xlu0 %v542, 12
      %v632 = vpop.permute.xlu0 %631
      %633 = vrot.lane.b32.xlu0 %v543, 12
      %v634 = vpop.permute.xlu0 %633
      %635 = vrot.lane.b32.xlu0 %v544, 12
      %v636 = vpop.permute.xlu0 %635
      %637 = vrot.lane.b32.xlu0 %v545, 12
      %v638 = vpop.permute.xlu0 %637
      %639 = vrot.lane.b32.xlu0 %v546, 12
      %v640 = vpop.permute.xlu0 %639
      %641 = vrot.lane.b32.xlu0 %v547, 12
      %v642 = vpop.permute.xlu0 %641
      %643 = vrot.lane.b32.xlu0 %v548, 12
      %v644 = vpop.permute.xlu0 %643
      %vm677 = vcmask 191584
      %678 = vst.msk [vmem:[#allocation2] sm:$0xf] %vm677, %v582
      %679 = vst.msk [vmem:[#allocation2 + $0x4] sm:$0xf] %vm677, %v584
      %680 = vst.msk [vmem:[#allocation2 + $0x8] sm:$0xf] %vm677, %v586
      %681 = vst.msk [vmem:[#allocation2 + $0xc] sm:$0xf] %vm677, %v588
      %682 = vst.msk [vmem:[#allocation2 + $0x10] sm:$0xf] %vm677, %v590
      %683 = vst.msk [vmem:[#allocation2 + $0x14] sm:$0xf] %vm677, %v592
      %684 = vst.msk [vmem:[#allocation2 + $0x18] sm:$0xf] %vm677, %v594
      %685 = vst.msk [vmem:[#allocation2 + $0x1c] sm:$0xf] %vm677, %v596
      %686 = vst.msk [vmem:[#allocation2 + $0x20] sm:$0xf] %vm677, %v598
      %687 = vst.msk [vmem:[#allocation2 + $0x24] sm:$0xf] %vm677, %v600
      %688 = vst.msk [vmem:[#allocation2 + $0x28] sm:$0xf] %vm677, %v602
      %689 = vst.msk [vmem:[#allocation2 + $0x2c] sm:$0xf] %vm677, %v604
      %690 = vst.msk [vmem:[#allocation2 + $0x30] sm:$0xf] %vm677, %v606
      %691 = vst.msk [vmem:[#allocation2 + $0x34] sm:$0xf] %vm677, %v608
      %692 = vst.msk [vmem:[#allocation2 + $0x38] sm:$0xf] %vm677, %v610
      %693 = vst.msk [vmem:[#allocation2 + $0x3c] sm:$0xf] %vm677, %v612
      %694 = vst.msk [vmem:[#allocation2 + $0x40] sm:$0xf] %vm677, %v614
      %695 = vst.msk [vmem:[#allocation2 + $0x44] sm:$0xf] %vm677, %v616
      %696 = vst.msk [vmem:[#allocation2 + $0x48] sm:$0xf] %vm677, %v618
      %697 = vst.msk [vmem:[#allocation2 + $0x4c] sm:$0xf] %vm677, %v620
      %698 = vst.msk [vmem:[#allocation2 + $0x50] sm:$0xf] %vm677, %v622
      %699 = vst.msk [vmem:[#allocation2 + $0x54] sm:$0xf] %vm677, %v624
      %700 = vst.msk [vmem:[#allocation2 + $0x58] sm:$0xf] %vm677, %v626
      %701 = vst.msk [vmem:[#allocation2 + $0x5c] sm:$0xf] %vm677, %v628
      %702 = vst.msk [vmem:[#allocation2 + $0x60] sm:$0xf] %vm677, %v630
      %703 = vst.msk [vmem:[#allocation2 + $0x64] sm:$0xf] %vm677, %v632
      %704 = vst.msk [vmem:[#allocation2 + $0x68] sm:$0xf] %vm677, %v634
      %705 = vst.msk [vmem:[#allocation2 + $0x6c] sm:$0xf] %vm677, %v636
      %706 = vst.msk [vmem:[#allocation2 + $0x70] sm:$0xf] %vm677, %v638
      %707 = vst.msk [vmem:[#allocation2 + $0x74] sm:$0xf] %vm677, %v640
      %708 = vst.msk [vmem:[#allocation2 + $0x78] sm:$0xf] %vm677, %v642
      %709 = vst.msk [vmem:[#allocation2 + $0x7c] sm:$0xf] %vm677, %v644
      %s710 = scalar_lea.vmem %s382, 24
      %v711 = vld [vmem:[%s710] sm:$0xff]
      %v712 = vld [vmem:[%s710 + $0x8] sm:$0xff]
      %v713 = vld [vmem:[%s710 + $0x18] sm:$0xff]
      %v714 = vld [vmem:[%s710 + $0x20] sm:$0xff]
      %v715 = vld [vmem:[%s710 + $0x30] sm:$0xff]
      %v716 = vld [vmem:[%s710 + $0x38] sm:$0xff]
      %v717 = vld [vmem:[%s710 + $0x48] sm:$0xff]
      %v718 = vld [vmem:[%s710 + $0x50] sm:$0xff]
      %v719 = vld [vmem:[%s710 + $0x60] sm:$0xff]
      %v720 = vld [vmem:[%s710 + $0x68] sm:$0xff]
      %v721 = vld [vmem:[%s710 + $0x78] sm:$0xff]
      %v722 = vld [vmem:[%s710 + $0x80] sm:$0xff]
      %v723 = vld [vmem:[%s710 + $0x90] sm:$0xff]
      %v724 = vld [vmem:[%s710 + $0x98] sm:$0xff]
      %v725 = vld [vmem:[%s710 + $0xa8] sm:$0xff]
      %v726 = vld [vmem:[%s710 + $0xb0] sm:$0xff]
      %v727 = vld [vmem:[%s710 + $0xc0] sm:$0xff]
      %v728 = vld [vmem:[%s710 + $0xc8] sm:$0xff]
      %v729 = vld [vmem:[%s710 + $0xd8] sm:$0xff]
      %v730 = vld [vmem:[%s710 + $0xe0] sm:$0xff]
      %v731 = vld [vmem:[%s710 + $0xf0] sm:$0xff]
      %v732 = vld [vmem:[%s710 + $0xf8] sm:$0xff]
      %v733 = vld [vmem:[%s710 + $0x108] sm:$0xff]
      %v734 = vld [vmem:[%s710 + $0x110] sm:$0xff]
      %v735 = vld [vmem:[%s710 + $0x120] sm:$0xff]
      %v736 = vld [vmem:[%s710 + $0x128] sm:$0xff]
      %v737 = vld [vmem:[%s710 + $0x138] sm:$0xff]
      %v738 = vld [vmem:[%s710 + $0x140] sm:$0xff]
      %v739 = vld [vmem:[%s710 + $0x150] sm:$0xff]
      %v740 = vld [vmem:[%s710 + $0x158] sm:$0xff]
      %v741 = vld [vmem:[%s710 + $0x168] sm:$0xff]
      %v742 = vld [vmem:[%s710 + $0x170] sm:$0xff]
      %v743 = vpack.c.bf16 %v711, %v711
      %v744 = vpack.c.bf16 %v712, %v712
      %v745 = vpack.c.bf16 %v713, %v713
      %v746 = vpack.c.bf16 %v714, %v714
      %v747 = vpack.c.bf16 %v715, %v715
      %v748 = vpack.c.bf16 %v716, %v716
      %v749 = vpack.c.bf16 %v717, %v717
      %v750 = vpack.c.bf16 %v718, %v718
      %v751 = vpack.c.bf16 %v719, %v719
      %v752 = vpack.c.bf16 %v720, %v720
      %v753 = vpack.c.bf16 %v721, %v721
      %v754 = vpack.c.bf16 %v722, %v722
      %v755 = vpack.c.bf16 %v723, %v723
      %v756 = vpack.c.bf16 %v724, %v724
      %v757 = vpack.c.bf16 %v725, %v725
      %v758 = vpack.c.bf16 %v726, %v726
      %v759 = vpack.c.bf16 %v727, %v727
      %v760 = vpack.c.bf16 %v728, %v728
      %v761 = vpack.c.bf16 %v729, %v729
      %v762 = vpack.c.bf16 %v730, %v730
      %v763 = vpack.c.bf16 %v731, %v731
      %v764 = vpack.c.bf16 %v732, %v732
      %v765 = vpack.c.bf16 %v733, %v733
      %v766 = vpack.c.bf16 %v734, %v734
      %v767 = vpack.c.bf16 %v735, %v735
      %v768 = vpack.c.bf16 %v736, %v736
      %v769 = vpack.c.bf16 %v737, %v737
      %v770 = vpack.c.bf16 %v738, %v738
      %v771 = vpack.c.bf16 %v739, %v739
      %v772 = vpack.c.bf16 %v740, %v740
      %v773 = vpack.c.bf16 %v741, %v741
      %v774 = vpack.c.bf16 %v742, %v742
      %807 = vrot.lane.b32.xlu0 %v743, 24
      %v808 = vpop.permute.xlu0 %807
      %809 = vrot.lane.b32.xlu0 %v744, 24
      %v810 = vpop.permute.xlu0 %809
      %811 = vrot.lane.b32.xlu0 %v745, 24
      %v812 = vpop.permute.xlu0 %811
      %813 = vrot.lane.b32.xlu0 %v746, 24
      %v814 = vpop.permute.xlu0 %813
      %815 = vrot.lane.b32.xlu0 %v747, 24
      %v816 = vpop.permute.xlu0 %815
      %817 = vrot.lane.b32.xlu0 %v748, 24
      %v818 = vpop.permute.xlu0 %817
      %819 = vrot.lane.b32.xlu0 %v749, 24
      %v820 = vpop.permute.xlu0 %819
      %821 = vrot.lane.b32.xlu0 %v750, 24
      %v822 = vpop.permute.xlu0 %821
      %823 = vrot.lane.b32.xlu0 %v751, 24
      %v824 = vpop.permute.xlu0 %823
      %825 = vrot.lane.b32.xlu0 %v752, 24
      %v826 = vpop.permute.xlu0 %825
      %827 = vrot.lane.b32.xlu0 %v753, 24
      %v828 = vpop.permute.xlu0 %827
      %829 = vrot.lane.b32.xlu0 %v754, 24
      %v830 = vpop.permute.xlu0 %829
      %831 = vrot.lane.b32.xlu0 %v755, 24
      %v832 = vpop.permute.xlu0 %831
      %833 = vrot.lane.b32.xlu0 %v756, 24
      %v834 = vpop.permute.xlu0 %833
      %835 = vrot.lane.b32.xlu0 %v757, 24
      %v836 = vpop.permute.xlu0 %835
      %837 = vrot.lane.b32.xlu0 %v758, 24
      %v838 = vpop.permute.xlu0 %837
      %839 = vrot.lane.b32.xlu0 %v759, 24
      %v840 = vpop.permute.xlu0 %839
      %841 = vrot.lane.b32.xlu0 %v760, 24
      %v842 = vpop.permute.xlu0 %841
      %843 = vrot.lane.b32.xlu0 %v761, 24
      %v844 = vpop.permute.xlu0 %843
      %845 = vrot.lane.b32.xlu0 %v762, 24
      %v846 = vpop.permute.xlu0 %845
      %847 = vrot.lane.b32.xlu0 %v763, 24
      %v848 = vpop.permute.xlu0 %847
      %849 = vrot.lane.b32.xlu0 %v764, 24
      %v850 = vpop.permute.xlu0 %849
      %851 = vrot.lane.b32.xlu0 %v765, 24
      %v852 = vpop.permute.xlu0 %851
      %853 = vrot.lane.b32.xlu0 %v766, 24
      %v854 = vpop.permute.xlu0 %853
      %855 = vrot.lane.b32.xlu0 %v767, 24
      %v856 = vpop.permute.xlu0 %855
      %857 = vrot.lane.b32.xlu0 %v768, 24
      %v858 = vpop.permute.xlu0 %857
      %859 = vrot.lane.b32.xlu0 %v769, 24
      %v860 = vpop.permute.xlu0 %859
      %861 = vrot.lane.b32.xlu0 %v770, 24
      %v862 = vpop.permute.xlu0 %861
      %863 = vrot.lane.b32.xlu0 %v771, 24
      %v864 = vpop.permute.xlu0 %863
      %865 = vrot.lane.b32.xlu0 %v772, 24
      %v866 = vpop.permute.xlu0 %865
      %867 = vrot.lane.b32.xlu0 %v773, 24
      %v868 = vpop.permute.xlu0 %867
      %869 = vrot.lane.b32.xlu0 %v774, 24
      %v870 = vpop.permute.xlu0 %869
      %vm903 = vcmask 289984
      %904 = vst.msk [vmem:[#allocation2] sm:$0xf] %vm903, %v808
      %905 = vst.msk [vmem:[#allocation2 + $0x4] sm:$0xf] %vm903, %v810
      %906 = vst.msk [vmem:[#allocation2 + $0x8] sm:$0xf] %vm903, %v812
      %907 = vst.msk [vmem:[#allocation2 + $0xc] sm:$0xf] %vm903, %v814
      %908 = vst.msk [vmem:[#allocation2 + $0x10] sm:$0xf] %vm903, %v816
      %909 = vst.msk [vmem:[#allocation2 + $0x14] sm:$0xf] %vm903, %v818
      %910 = vst.msk [vmem:[#allocation2 + $0x18] sm:$0xf] %vm903, %v820
      %911 = vst.msk [vmem:[#allocation2 + $0x1c] sm:$0xf] %vm903, %v822
      %912 = vst.msk [vmem:[#allocation2 + $0x20] sm:$0xf] %vm903, %v824
      %913 = vst.msk [vmem:[#allocation2 + $0x24] sm:$0xf] %vm903, %v826
      %914 = vst.msk [vmem:[#allocation2 + $0x28] sm:$0xf] %vm903, %v828
      %915 = vst.msk [vmem:[#allocation2 + $0x2c] sm:$0xf] %vm903, %v830
      %916 = vst.msk [vmem:[#allocation2 + $0x30] sm:$0xf] %vm903, %v832
      %917 = vst.msk [vmem:[#allocation2 + $0x34] sm:$0xf] %vm903, %v834
      %918 = vst.msk [vmem:[#allocation2 + $0x38] sm:$0xf] %vm903, %v836
      %919 = vst.msk [vmem:[#allocation2 + $0x3c] sm:$0xf] %vm903, %v838
      %920 = vst.msk [vmem:[#allocation2 + $0x40] sm:$0xf] %vm903, %v840
      %921 = vst.msk [vmem:[#allocation2 + $0x44] sm:$0xf] %vm903, %v842
      %922 = vst.msk [vmem:[#allocation2 + $0x48] sm:$0xf] %vm903, %v844
      %923 = vst.msk [vmem:[#allocation2 + $0x4c] sm:$0xf] %vm903, %v846
      %924 = vst.msk [vmem:[#allocation2 + $0x50] sm:$0xf] %vm903, %v848
      %925 = vst.msk [vmem:[#allocation2 + $0x54] sm:$0xf] %vm903, %v850
      %926 = vst.msk [vmem:[#allocation2 + $0x58] sm:$0xf] %vm903, %v852
      %927 = vst.msk [vmem:[#allocation2 + $0x5c] sm:$0xf] %vm903, %v854
      %928 = vst.msk [vmem:[#allocation2 + $0x60] sm:$0xf] %vm903, %v856
      %929 = vst.msk [vmem:[#allocation2 + $0x64] sm:$0xf] %vm903, %v858
      %930 = vst.msk [vmem:[#allocation2 + $0x68] sm:$0xf] %vm903, %v860
      %931 = vst.msk [vmem:[#allocation2 + $0x6c] sm:$0xf] %vm903, %v862
      %932 = vst.msk [vmem:[#allocation2 + $0x70] sm:$0xf] %vm903, %v864
      %933 = vst.msk [vmem:[#allocation2 + $0x74] sm:$0xf] %vm903, %v866
      %934 = vst.msk [vmem:[#allocation2 + $0x78] sm:$0xf] %vm903, %v868
      %935 = vst.msk [vmem:[#allocation2 + $0x7c] sm:$0xf] %vm903, %v870
      %v936 = vld [vmem:[%s710 + $0x1] sm:$0xff]
      %v937 = vld [vmem:[%s710 + $0x9] sm:$0xff]
      %v938 = vld [vmem:[%s710 + $0x19] sm:$0xff]
      %v939 = vld [vmem:[%s710 + $0x21] sm:$0xff]
      %v940 = vld [vmem:[%s710 + $0x31] sm:$0xff]
      %v941 = vld [vmem:[%s710 + $0x39] sm:$0xff]
      %v942 = vld [vmem:[%s710 + $0x49] sm:$0xff]
      %v943 = vld [vmem:[%s710 + $0x51] sm:$0xff]
      %v944 = vld [vmem:[%s710 + $0x61] sm:$0xff]
      %v945 = vld [vmem:[%s710 + $0x69] sm:$0xff]
      %v946 = vld [vmem:[%s710 + $0x79] sm:$0xff]
      %v947 = vld [vmem:[%s710 + $0x81] sm:$0xff]
      %v948 = vld [vmem:[%s710 + $0x91] sm:$0xff]
      %v949 = vld [vmem:[%s710 + $0x99] sm:$0xff]
      %v950 = vld [vmem:[%s710 + $0xa9] sm:$0xff]
      %v951 = vld [vmem:[%s710 + $0xb1] sm:$0xff]
      %v952 = vld [vmem:[%s710 + $0xc1] sm:$0xff]
      %v953 = vld [vmem:[%s710 + $0xc9] sm:$0xff]
      %v954 = vld [vmem:[%s710 + $0xd9] sm:$0xff]
      %v955 = vld [vmem:[%s710 + $0xe1] sm:$0xff]
      %v956 = vld [vmem:[%s710 + $0xf1] sm:$0xff]
      %v957 = vld [vmem:[%s710 + $0xf9] sm:$0xff]
      %v958 = vld [vmem:[%s710 + $0x109] sm:$0xff]
      %v959 = vld [vmem:[%s710 + $0x111] sm:$0xff]
      %v960 = vld [vmem:[%s710 + $0x121] sm:$0xff]
      %v961 = vld [vmem:[%s710 + $0x129] sm:$0xff]
      %v962 = vld [vmem:[%s710 + $0x139] sm:$0xff]
      %v963 = vld [vmem:[%s710 + $0x141] sm:$0xff]
      %v964 = vld [vmem:[%s710 + $0x151] sm:$0xff]
      %v965 = vld [vmem:[%s710 + $0x159] sm:$0xff]
      %v966 = vld [vmem:[%s710 + $0x169] sm:$0xff]
      %v967 = vld [vmem:[%s710 + $0x171] sm:$0xff]
      %v968 = vpack.c.bf16 %v936, %v936
      %v969 = vpack.c.bf16 %v937, %v937
      %v970 = vpack.c.bf16 %v938, %v938
      %v971 = vpack.c.bf16 %v939, %v939
      %v972 = vpack.c.bf16 %v940, %v940
      %v973 = vpack.c.bf16 %v941, %v941
      %v974 = vpack.c.bf16 %v942, %v942
      %v975 = vpack.c.bf16 %v943, %v943
      %v976 = vpack.c.bf16 %v944, %v944
      %v977 = vpack.c.bf16 %v945, %v945
      %v978 = vpack.c.bf16 %v946, %v946
      %v979 = vpack.c.bf16 %v947, %v947
      %v980 = vpack.c.bf16 %v948, %v948
      %v981 = vpack.c.bf16 %v949, %v949
      %v982 = vpack.c.bf16 %v950, %v950
      %v983 = vpack.c.bf16 %v951, %v951
      %v984 = vpack.c.bf16 %v952, %v952
      %v985 = vpack.c.bf16 %v953, %v953
      %v986 = vpack.c.bf16 %v954, %v954
      %v987 = vpack.c.bf16 %v955, %v955
      %v988 = vpack.c.bf16 %v956, %v956
      %v989 = vpack.c.bf16 %v957, %v957
      %v990 = vpack.c.bf16 %v958, %v958
      %v991 = vpack.c.bf16 %v959, %v959
      %v992 = vpack.c.bf16 %v960, %v960
      %v993 = vpack.c.bf16 %v961, %v961
      %v994 = vpack.c.bf16 %v962, %v962
      %v995 = vpack.c.bf16 %v963, %v963
      %v996 = vpack.c.bf16 %v964, %v964
      %v997 = vpack.c.bf16 %v965, %v965
      %v998 = vpack.c.bf16 %v966, %v966
      %v999 = vpack.c.bf16 %v967, %v967
      %1032 = vrot.lane.b32.xlu0 %v968, 36
      %v1033 = vpop.permute.xlu0 %1032
      %1034 = vrot.lane.b32.xlu0 %v969, 36
      %v1035 = vpop.permute.xlu0 %1034
      %1036 = vrot.lane.b32.xlu0 %v970, 36
      %v1037 = vpop.permute.xlu0 %1036
      %1038 = vrot.lane.b32.xlu0 %v971, 36
      %v1039 = vpop.permute.xlu0 %1038
      %1040 = vrot.lane.b32.xlu0 %v972, 36
      %v1041 = vpop.permute.xlu0 %1040
      %1042 = vrot.lane.b32.xlu0 %v973, 36
      %v1043 = vpop.permute.xlu0 %1042
      %1044 = vrot.lane.b32.xlu0 %v974, 36
      %v1045 = vpop.permute.xlu0 %1044
      %1046 = vrot.lane.b32.xlu0 %v975, 36
      %v1047 = vpop.permute.xlu0 %1046
      %1048 = vrot.lane.b32.xlu0 %v976, 36
      %v1049 = vpop.permute.xlu0 %1048
      %1050 = vrot.lane.b32.xlu0 %v977, 36
      %v1051 = vpop.permute.xlu0 %1050
      %1052 = vrot.lane.b32.xlu0 %v978, 36
      %v1053 = vpop.permute.xlu0 %1052
      %1054 = vrot.lane.b32.xlu0 %v979, 36
      %v1055 = vpop.permute.xlu0 %1054
      %1056 = vrot.lane.b32.xlu0 %v980, 36
      %v1057 = vpop.permute.xlu0 %1056
      %1058 = vrot.lane.b32.xlu0 %v981, 36
      %v1059 = vpop.permute.xlu0 %1058
      %1060 = vrot.lane.b32.xlu0 %v982, 36
      %v1061 = vpop.permute.xlu0 %1060
      %1062 = vrot.lane.b32.xlu0 %v983, 36
      %v1063 = vpop.permute.xlu0 %1062
      %1064 = vrot.lane.b32.xlu0 %v984, 36
      %v1065 = vpop.permute.xlu0 %1064
      %1066 = vrot.lane.b32.xlu0 %v985, 36
      %v1067 = vpop.permute.xlu0 %1066
      %1068 = vrot.lane.b32.xlu0 %v986, 36
      %v1069 = vpop.permute.xlu0 %1068
      %1070 = vrot.lane.b32.xlu0 %v987, 36
      %v1071 = vpop.permute.xlu0 %1070
      %1072 = vrot.lane.b32.xlu0 %v988, 36
      %v1073 = vpop.permute.xlu0 %1072
      %1074 = vrot.lane.b32.xlu0 %v989, 36
      %v1075 = vpop.permute.xlu0 %1074
      %1076 = vrot.lane.b32.xlu0 %v990, 36
      %v1077 = vpop.permute.xlu0 %1076
      %1078 = vrot.lane.b32.xlu0 %v991, 36
      %v1079 = vpop.permute.xlu0 %1078
      %1080 = vrot.lane.b32.xlu0 %v992, 36
      %v1081 = vpop.permute.xlu0 %1080
      %1082 = vrot.lane.b32.xlu0 %v993, 36
      %v1083 = vpop.permute.xlu0 %1082
      %1084 = vrot.lane.b32.xlu0 %v994, 36
      %v1085 = vpop.permute.xlu0 %1084
      %1086 = vrot.lane.b32.xlu0 %v995, 36
      %v1087 = vpop.permute.xlu0 %1086
      %1088 = vrot.lane.b32.xlu0 %v996, 36
      %v1089 = vpop.permute.xlu0 %1088
      %1090 = vrot.lane.b32.xlu0 %v997, 36
      %v1091 = vpop.permute.xlu0 %1090
      %1092 = vrot.lane.b32.xlu0 %v998, 36
      %v1093 = vpop.permute.xlu0 %1092
      %1094 = vrot.lane.b32.xlu0 %v999, 36
      %v1095 = vpop.permute.xlu0 %1094
      %vm1128 = vcmask 388384
      %1129 = vst.msk [vmem:[#allocation2] sm:$0xf] %vm1128, %v1033
      %1130 = vst.msk [vmem:[#allocation2 + $0x4] sm:$0xf] %vm1128, %v1035
      %1131 = vst.msk [vmem:[#allocation2 + $0x8] sm:$0xf] %vm1128, %v1037
      %1132 = vst.msk [vmem:[#allocation2 + $0xc] sm:$0xf] %vm1128, %v1039
      %1133 = vst.msk [vmem:[#allocation2 + $0x10] sm:$0xf] %vm1128, %v1041
      %1134 = vst.msk [vmem:[#allocation2 + $0x14] sm:$0xf] %vm1128, %v1043
      %1135 = vst.msk [vmem:[#allocation2 + $0x18] sm:$0xf] %vm1128, %v1045
      %1136 = vst.msk [vmem:[#allocation2 + $0x1c] sm:$0xf] %vm1128, %v1047
      %1137 = vst.msk [vmem:[#allocation2 + $0x20] sm:$0xf] %vm1128, %v1049
      %1138 = vst.msk [vmem:[#allocation2 + $0x24] sm:$0xf] %vm1128, %v1051
      %1139 = vst.msk [vmem:[#allocation2 + $0x28] sm:$0xf] %vm1128, %v1053
      %1140 = vst.msk [vmem:[#allocation2 + $0x2c] sm:$0xf] %vm1128, %v1055
      %1141 = vst.msk [vmem:[#allocation2 + $0x30] sm:$0xf] %vm1128, %v1057
      %1142 = vst.msk [vmem:[#allocation2 + $0x34] sm:$0xf] %vm1128, %v1059
      %1143 = vst.msk [vmem:[#allocation2 + $0x38] sm:$0xf] %vm1128, %v1061
      %1144 = vst.msk [vmem:[#allocation2 + $0x3c] sm:$0xf] %vm1128, %v1063
      %1145 = vst.msk [vmem:[#allocation2 + $0x40] sm:$0xf] %vm1128, %v1065
      %1146 = vst.msk [vmem:[#allocation2 + $0x44] sm:$0xf] %vm1128, %v1067
      %1147 = vst.msk [vmem:[#allocation2 + $0x48] sm:$0xf] %vm1128, %v1069
      %1148 = vst.msk [vmem:[#allocation2 + $0x4c] sm:$0xf] %vm1128, %v1071
      %1149 = vst.msk [vmem:[#allocation2 + $0x50] sm:$0xf] %vm1128, %v1073
      %1150 = vst.msk [vmem:[#allocation2 + $0x54] sm:$0xf] %vm1128, %v1075
      %1151 = vst.msk [vmem:[#allocation2 + $0x58] sm:$0xf] %vm1128, %v1077
      %1152 = vst.msk [vmem:[#allocation2 + $0x5c] sm:$0xf] %vm1128, %v1079
      %1153 = vst.msk [vmem:[#allocation2 + $0x60] sm:$0xf] %vm1128, %v1081
      %1154 = vst.msk [vmem:[#allocation2 + $0x64] sm:$0xf] %vm1128, %v1083
      %1155 = vst.msk [vmem:[#allocation2 + $0x68] sm:$0xf] %vm1128, %v1085
      %1156 = vst.msk [vmem:[#allocation2 + $0x6c] sm:$0xf] %vm1128, %v1087
      %1157 = vst.msk [vmem:[#allocation2 + $0x70] sm:$0xf] %vm1128, %v1089
      %1158 = vst.msk [vmem:[#allocation2 + $0x74] sm:$0xf] %vm1128, %v1091
      %1159 = vst.msk [vmem:[#allocation2 + $0x78] sm:$0xf] %vm1128, %v1093
      %1160 = vst.msk [vmem:[#allocation2 + $0x7c] sm:$0xf] %vm1128, %v1095
      %v1161 = vld [vmem:[#allocation2] sm:$0xf]
      %v1162 = vld [vmem:[#allocation2 + $0x4] sm:$0xf]
      %v1163 = vld [vmem:[#allocation2 + $0x8] sm:$0xf]
      %v1164 = vld [vmem:[#allocation2 + $0xc] sm:$0xf]
      %v1165 = vld [vmem:[#allocation2 + $0x10] sm:$0xf]
      %v1166 = vld [vmem:[#allocation2 + $0x14] sm:$0xf]
      %v1167 = vld [vmem:[#allocation2 + $0x18] sm:$0xf]
      %v1168 = vld [vmem:[#allocation2 + $0x1c] sm:$0xf]
      %v1169 = vld [vmem:[#allocation2 + $0x20] sm:$0xf]
      %v1170 = vld [vmem:[#allocation2 + $0x24] sm:$0xf]
      %v1171 = vld [vmem:[#allocation2 + $0x28] sm:$0xf]
      %v1172 = vld [vmem:[#allocation2 + $0x2c] sm:$0xf]
      %v1173 = vld [vmem:[#allocation2 + $0x30] sm:$0xf]
      %v1174 = vld [vmem:[#allocation2 + $0x34] sm:$0xf]
      %v1175 = vld [vmem:[#allocation2 + $0x38] sm:$0xf]
      %v1176 = vld [vmem:[#allocation2 + $0x3c] sm:$0xf]
      %v1177 = vld [vmem:[#allocation2 + $0x40] sm:$0xf]
      %v1178 = vld [vmem:[#allocation2 + $0x44] sm:$0xf]
      %v1179 = vld [vmem:[#allocation2 + $0x48] sm:$0xf]
      %v1180 = vld [vmem:[#allocation2 + $0x4c] sm:$0xf]
      %v1181 = vld [vmem:[#allocation2 + $0x50] sm:$0xf]
      %v1182 = vld [vmem:[#allocation2 + $0x54] sm:$0xf]
      %v1183 = vld [vmem:[#allocation2 + $0x58] sm:$0xf]
      %v1184 = vld [vmem:[#allocation2 + $0x5c] sm:$0xf]
      %v1185 = vld [vmem:[#allocation2 + $0x60] sm:$0xf]
      %v1186 = vld [vmem:[#allocation2 + $0x64] sm:$0xf]
      %v1187 = vld [vmem:[#allocation2 + $0x68] sm:$0xf]
      %v1188 = vld [vmem:[#allocation2 + $0x6c] sm:$0xf]
      %v1189 = vld [vmem:[#allocation2 + $0x70] sm:$0xf]
      %v1190 = vld [vmem:[#allocation2 + $0x74] sm:$0xf]
      %v1191 = vld [vmem:[#allocation2 + $0x78] sm:$0xf]
      %v1192 = vld [vmem:[#allocation2 + $0x7c] sm:$0xf]
      %v1193 = vld [vmem:[%s1] sm:$0xf]
      %v1194 = vld [vmem:[%s1 + $0x4] sm:$0xf]
      %v1195 = vld [vmem:[%s1 + $0x8] sm:$0xf]
      %v1196 = vld [vmem:[%s1 + $0xc] sm:$0xf]
      %v1197 = vld [vmem:[%s1 + $0x10] sm:$0xf]
      %v1198 = vld [vmem:[%s1 + $0x14] sm:$0xf]
      %v1199 = vld [vmem:[%s2] sm:$0x1]
      %v1201 = vperm.slane %v1199, 0
      %v1235 = vunpack.c.l.b16 %v1161
      %v1236 = vunpack.c.l.b16 %v1162
      %v1237 = vunpack.c.l.b16 %v1163
      %v1238 = vunpack.c.l.b16 %v1164
      %v1239 = vunpack.c.l.b16 %v1165
      %v1240 = vunpack.c.l.b16 %v1166
      %v1241 = vunpack.c.l.b16 %v1167
      %v1242 = vunpack.c.l.b16 %v1168
      %v1243 = vunpack.c.l.b16 %v1169
      %v1244 = vunpack.c.l.b16 %v1170
      %v1245 = vunpack.c.l.b16 %v1171
      %v1246 = vunpack.c.l.b16 %v1172
      %v1247 = vunpack.c.l.b16 %v1173
      %v1248 = vunpack.c.l.b16 %v1174
      %v1249 = vunpack.c.l.b16 %v1175
      %v1250 = vunpack.c.l.b16 %v1176
      %v1251 = vunpack.c.l.b16 %v1177
      %v1252 = vunpack.c.l.b16 %v1178
      %v1253 = vunpack.c.l.b16 %v1179
      %v1254 = vunpack.c.l.b16 %v1180
      %v1255 = vunpack.c.l.b16 %v1181
      %v1256 = vunpack.c.l.b16 %v1182
      %v1257 = vunpack.c.l.b16 %v1183
      %v1258 = vunpack.c.l.b16 %v1184
      %v1259 = vunpack.c.l.b16 %v1185
      %v1260 = vunpack.c.l.b16 %v1186
      %v1261 = vunpack.c.l.b16 %v1187
      %v1262 = vunpack.c.l.b16 %v1188
      %v1263 = vunpack.c.l.b16 %v1189
      %v1264 = vunpack.c.l.b16 %v1190
      %v1265 = vunpack.c.l.b16 %v1191
      %v1266 = vunpack.c.l.b16 %v1192
      %v1267 = vpack.c.b16 %v1236, %v1235
      %v1268 = vpack.c.b16 %v1238, %v1237
      %v1269 = vpack.c.b16 %v1240, %v1239
      %v1270 = vpack.c.b16 %v1242, %v1241
      %v1271 = vpack.c.b16 %v1244, %v1243
      %v1272 = vpack.c.b16 %v1246, %v1245
      %v1273 = vpack.c.b16 %v1248, %v1247
      %v1274 = vpack.c.b16 %v1250, %v1249
      %v1275 = vpack.c.b16 %v1252, %v1251
      %v1276 = vpack.c.b16 %v1254, %v1253
      %v1277 = vpack.c.b16 %v1256, %v1255
      %v1278 = vpack.c.b16 %v1258, %v1257
      %v1279 = vpack.c.b16 %v1260, %v1259
      %v1280 = vpack.c.b16 %v1262, %v1261
      %v1281 = vpack.c.b16 %v1264, %v1263
      %v1282 = vpack.c.b16 %v1266, %v1265
      %v1289 = vunpack.c.l.b16 %v1193
      %v1290 = vunpack.c.l.b16 %v1194
      %v1291 = vunpack.c.l.b16 %v1195
      %v1292 = vunpack.c.l.b16 %v1196
      %v1293 = vunpack.c.l.b16 %v1197
      %v1294 = vunpack.c.l.b16 %v1198
      %v1295 = vpack.c.b16 %v1290, %v1289
      %v1296 = vpack.c.b16 %v1292, %v1291
      %v1297 = vpack.c.b16 %v1294, %v1293
      %vm1301 = vcmask 392192
      %v1303 = vsel %vm1301, %v1267, 0
      %v1306 = vsel %vm1301, %v1268, 0
      %v1309 = vsel %vm1301, %v1269, 0
      %v1312 = vsel %vm1301, %v1270, 0
      %v1315 = vsel %vm1301, %v1271, 0
      %v1318 = vsel %vm1301, %v1272, 0
      %v1321 = vsel %vm1301, %v1273, 0
      %v1324 = vsel %vm1301, %v1274, 0
      %v1327 = vsel %vm1301, %v1275, 0
      %v1330 = vsel %vm1301, %v1276, 0
      %v1333 = vsel %vm1301, %v1277, 0
      %v1336 = vsel %vm1301, %v1278, 0
      %v1339 = vsel %vm1301, %v1279, 0
      %v1342 = vsel %vm1301, %v1280, 0
      %v1345 = vsel %vm1301, %v1281, 0
      %v1348 = vsel %vm1301, %v1282, 0
      %1350 = vmatpush.bf16.msra.mxu0 0
      %1351 = vmatpush.bf16.msra.mxu0 0
      %1352 = vmatpush.bf16.msra.mxu0 0
      %1353 = vmatpush.bf16.msra.mxu0 0
      %1354 = vmatpush.bf16.msra.mxu0 0
      %1355 = vmatpush.bf16.msra.mxu0 %v1297
      %1356 = vmatpush.bf16.msra.mxu0 %v1296
      %1357 = vmatpush.bf16.msra.mxu0 %v1295
      %1358 = vmatmul.bf16.gmra.mxu0 %v1303
      %v1359 = vpop.f32.mrf.mxu0
      %v1360 = vadd.f32 %v1201, %v1359
      %v1361 = vpop.f32.mrf.mxu0
      %v1362 = vadd.f32 %v1201, %v1361
      %1363 = vmatmul.bf16.gmra.mxu0 %v1306
      %v1364 = vpop.f32.mrf.mxu0
      %v1365 = vadd.f32 %v1201, %v1364
      %v1366 = vpop.f32.mrf.mxu0
      %v1367 = vadd.f32 %v1201, %v1366
      %1368 = vmatmul.bf16.gmra.mxu0 %v1309
      %v1369 = vpop.f32.mrf.mxu0
      %v1370 = vadd.f32 %v1201, %v1369
      %v1371 = vpop.f32.mrf.mxu0
      %v1372 = vadd.f32 %v1201, %v1371
      %1373 = vmatmul.bf16.gmra.mxu0 %v1312
      %v1374 = vpop.f32.mrf.mxu0
      %v1375 = vadd.f32 %v1201, %v1374
      %v1376 = vpop.f32.mrf.mxu0
      %v1377 = vadd.f32 %v1201, %v1376
      %1378 = vmatmul.bf16.gmra.mxu0 %v1315
      %v1379 = vpop.f32.mrf.mxu0
      %v1380 = vadd.f32 %v1201, %v1379
      %v1381 = vpop.f32.mrf.mxu0
      %v1382 = vadd.f32 %v1201, %v1381
      %1383 = vmatmul.bf16.gmra.mxu0 %v1318
      %v1384 = vpop.f32.mrf.mxu0
      %v1385 = vadd.f32 %v1201, %v1384
      %v1386 = vpop.f32.mrf.mxu0
      %v1387 = vadd.f32 %v1201, %v1386
      %1388 = vmatmul.bf16.gmra.mxu0 %v1321
      %v1389 = vpop.f32.mrf.mxu0
      %v1390 = vadd.f32 %v1201, %v1389
      %v1391 = vpop.f32.mrf.mxu0
      %v1392 = vadd.f32 %v1201, %v1391
      %1393 = vmatmul.bf16.gmra.mxu0 %v1324
      %v1394 = vpop.f32.mrf.mxu0
      %v1395 = vadd.f32 %v1201, %v1394
      %v1396 = vpop.f32.mrf.mxu0
      %v1397 = vadd.f32 %v1201, %v1396
      %1398 = vmatmul.bf16.gmra.mxu0 %v1327
      %v1399 = vpop.f32.mrf.mxu0
      %v1400 = vadd.f32 %v1201, %v1399
      %v1401 = vpop.f32.mrf.mxu0
      %v1402 = vadd.f32 %v1201, %v1401
      %1403 = vmatmul.bf16.gmra.mxu0 %v1330
      %v1404 = vpop.f32.mrf.mxu0
      %v1405 = vadd.f32 %v1201, %v1404
      %v1406 = vpop.f32.mrf.mxu0
      %v1407 = vadd.f32 %v1201, %v1406
      %1408 = vmatmul.bf16.gmra.mxu0 %v1333
      %v1409 = vpop.f32.mrf.mxu0
      %v1410 = vadd.f32 %v1201, %v1409
      %v1411 = vpop.f32.mrf.mxu0
      %v1412 = vadd.f32 %v1201, %v1411
      %1413 = vmatmul.bf16.gmra.mxu0 %v1336
      %v1414 = vpop.f32.mrf.mxu0
      %v1415 = vadd.f32 %v1201, %v1414
      %v1416 = vpop.f32.mrf.mxu0
      %v1417 = vadd.f32 %v1201, %v1416
      %1418 = vmatmul.bf16.gmra.mxu0 %v1339
      %v1419 = vpop.f32.mrf.mxu0
      %v1420 = vadd.f32 %v1201, %v1419
      %v1421 = vpop.f32.mrf.mxu0
      %v1422 = vadd.f32 %v1201, %v1421
      %1423 = vmatmul.bf16.gmra.mxu0 %v1342
      %v1424 = vpop.f32.mrf.mxu0
      %v1425 = vadd.f32 %v1201, %v1424
      %v1426 = vpop.f32.mrf.mxu0
      %v1427 = vadd.f32 %v1201, %v1426
      %1428 = vmatmul.bf16.gmra.mxu0 %v1345
      %v1429 = vpop.f32.mrf.mxu0
      %v1430 = vadd.f32 %v1201, %v1429
      %v1431 = vpop.f32.mrf.mxu0
      %v1432 = vadd.f32 %v1201, %v1431
      %1433 = vmatmul.bf16.gmra.mxu0 %v1348
      %v1434 = vpop.f32.mrf.mxu0
      %v1435 = vadd.f32 %v1201, %v1434
      %v1436 = vpop.f32.mrf.mxu0
      %v1437 = vadd.f32 %v1201, %v1436
      %1438 = vdwg.mxu0
      %vm1439 = vcmp.ge.f32.partialorder %v1360, 0.0
      %vm1440 = vcmp.ge.f32.partialorder %v1362, 0.0
      %vm1441 = vcmp.ge.f32.partialorder %v1365, 0.0
      %vm1442 = vcmp.ge.f32.partialorder %v1367, 0.0
      %vm1443 = vcmp.ge.f32.partialorder %v1370, 0.0
      %vm1444 = vcmp.ge.f32.partialorder %v1372, 0.0
      %vm1445 = vcmp.ge.f32.partialorder %v1375, 0.0
      %vm1446 = vcmp.ge.f32.partialorder %v1377, 0.0
      %vm1447 = vcmp.ge.f32.partialorder %v1380, 0.0
      %vm1448 = vcmp.ge.f32.partialorder %v1382, 0.0
      %vm1449 = vcmp.ge.f32.partialorder %v1385, 0.0
      %vm1450 = vcmp.ge.f32.partialorder %v1387, 0.0
      %vm1451 = vcmp.ge.f32.partialorder %v1390, 0.0
      %vm1452 = vcmp.ge.f32.partialorder %v1392, 0.0
      %vm1453 = vcmp.ge.f32.partialorder %v1395, 0.0
      %vm1454 = vcmp.ge.f32.partialorder %v1397, 0.0
      %vm1455 = vcmp.ge.f32.partialorder %v1400, 0.0
      %vm1456 = vcmp.ge.f32.partialorder %v1402, 0.0
      %vm1457 = vcmp.ge.f32.partialorder %v1405, 0.0
      %vm1458 = vcmp.ge.f32.partialorder %v1407, 0.0
      %vm1459 = vcmp.ge.f32.partialorder %v1410, 0.0
      %vm1460 = vcmp.ge.f32.partialorder %v1412, 0.0
      %vm1461 = vcmp.ge.f32.partialorder %v1415, 0.0
      %vm1462 = vcmp.ge.f32.partialorder %v1417, 0.0
      %vm1463 = vcmp.ge.f32.partialorder %v1420, 0.0
      %vm1464 = vcmp.ge.f32.partialorder %v1422, 0.0
      %vm1465 = vcmp.ge.f32.partialorder %v1425, 0.0
      %vm1466 = vcmp.ge.f32.partialorder %v1427, 0.0
      %vm1467 = vcmp.ge.f32.partialorder %v1430, 0.0
      %vm1468 = vcmp.ge.f32.partialorder %v1432, 0.0
      %vm1469 = vcmp.ge.f32.partialorder %v1435, 0.0
      %vm1470 = vcmp.ge.f32.partialorder %v1437, 0.0
      %v1471 = vmul.f32 %v1360, 0.2
      %v1472 = vmul.f32 %v1362, 0.2
      %v1473 = vmul.f32 %v1365, 0.2
      %v1474 = vmul.f32 %v1367, 0.2
      %v1475 = vmul.f32 %v1370, 0.2
      %v1476 = vmul.f32 %v1372, 0.2
      %v1477 = vmul.f32 %v1375, 0.2
      %v1478 = vmul.f32 %v1377, 0.2
      %v1479 = vmul.f32 %v1380, 0.2
      %v1480 = vmul.f32 %v1382, 0.2
      %v1481 = vmul.f32 %v1385, 0.2
      %v1482 = vmul.f32 %v1387, 0.2
      %v1483 = vmul.f32 %v1390, 0.2
      %v1484 = vmul.f32 %v1392, 0.2
      %v1485 = vmul.f32 %v1395, 0.2
      %v1486 = vmul.f32 %v1397, 0.2
      %v1487 = vmul.f32 %v1400, 0.2
      %v1488 = vmul.f32 %v1402, 0.2
      %v1489 = vmul.f32 %v1405, 0.2
      %v1490 = vmul.f32 %v1407, 0.2
      %v1491 = vmul.f32 %v1410, 0.2
      %v1492 = vmul.f32 %v1412, 0.2
      %v1493 = vmul.f32 %v1415, 0.2
      %v1494 = vmul.f32 %v1417, 0.2
      %v1495 = vmul.f32 %v1420, 0.2
      %v1496 = vmul.f32 %v1422, 0.2
      %v1497 = vmul.f32 %v1425, 0.2
      %v1498 = vmul.f32 %v1427, 0.2
      %v1499 = vmul.f32 %v1430, 0.2
      %v1500 = vmul.f32 %v1432, 0.2
      %v1501 = vmul.f32 %v1435, 0.2
      %v1502 = vmul.f32 %v1437, 0.2
      %v1503 = vsel %vm1439, %v1360, %v1471
      %v1504 = vsel %vm1440, %v1362, %v1472
      %v1505 = vsel %vm1441, %v1365, %v1473
      %v1506 = vsel %vm1442, %v1367, %v1474
      %v1507 = vsel %vm1443, %v1370, %v1475
      %v1508 = vsel %vm1444, %v1372, %v1476
      %v1509 = vsel %vm1445, %v1375, %v1477
      %v1510 = vsel %vm1446, %v1377, %v1478
      %v1511 = vsel %vm1447, %v1380, %v1479
      %v1512 = vsel %vm1448, %v1382, %v1480
      %v1513 = vsel %vm1449, %v1385, %v1481
      %v1514 = vsel %vm1450, %v1387, %v1482
      %v1515 = vsel %vm1451, %v1390, %v1483
      %v1516 = vsel %vm1452, %v1392, %v1484
      %v1517 = vsel %vm1453, %v1395, %v1485
      %v1518 = vsel %vm1454, %v1397, %v1486
      %v1519 = vsel %vm1455, %v1400, %v1487
      %v1520 = vsel %vm1456, %v1402, %v1488
      %v1521 = vsel %vm1457, %v1405, %v1489
      %v1522 = vsel %vm1458, %v1407, %v1490
      %v1523 = vsel %vm1459, %v1410, %v1491
      %v1524 = vsel %vm1460, %v1412, %v1492
      %v1525 = vsel %vm1461, %v1415, %v1493
      %v1526 = vsel %vm1462, %v1417, %v1494
      %v1527 = vsel %vm1463, %v1420, %v1495
      %v1528 = vsel %vm1464, %v1422, %v1496
      %v1529 = vsel %vm1465, %v1425, %v1497
      %v1530 = vsel %vm1466, %v1427, %v1498
      %v1531 = vsel %vm1467, %v1430, %v1499
      %v1532 = vsel %vm1468, %v1432, %v1500
      %v1533 = vsel %vm1469, %v1435, %v1501
      %v1534 = vsel %vm1470, %v1437, %v1502
      %vm1535 = vcmask 523264
      %1536 = vst.msk [vmem:[#allocation4] sm:$0xff] %vm1535, 0.0
      %vm1537 = vcmask 516096
      %1538 = vst.msk [vmem:[#allocation4 + $0x8] sm:$0x1] %vm1537, 0.0
      %1539 = vst.msk [vmem:[#allocation4 + $0x10] sm:$0xff] %vm1535, 0.0
      %1540 = vst.msk [vmem:[#allocation4 + $0x18] sm:$0x1] %vm1537, 0.0
      %1541 = vst.msk [vmem:[#allocation4 + $0x20] sm:$0xff] %vm1535, 0.0
      %1542 = vst.msk [vmem:[#allocation4 + $0x28] sm:$0x1] %vm1537, 0.0
      %1543 = vst.msk [vmem:[#allocation4 + $0x30] sm:$0xff] %vm1535, 0.0
      %1544 = vst.msk [vmem:[#allocation4 + $0x38] sm:$0x1] %vm1537, 0.0
      %1545 = vst.msk [vmem:[#allocation4 + $0x40] sm:$0xff] %vm1535, 0.0
      %1546 = vst.msk [vmem:[#allocation4 + $0x48] sm:$0x1] %vm1537, 0.0
      %1547 = vst.msk [vmem:[#allocation4 + $0x50] sm:$0xff] %vm1535, 0.0
      %1548 = vst.msk [vmem:[#allocation4 + $0x58] sm:$0x1] %vm1537, 0.0
      %1549 = vst.msk [vmem:[#allocation4 + $0x60] sm:$0xff] %vm1535, 0.0
      %1550 = vst.msk [vmem:[#allocation4 + $0x68] sm:$0x1] %vm1537, 0.0
      %1551 = vst.msk [vmem:[#allocation4 + $0x70] sm:$0xff] %vm1535, 0.0
      %1552 = vst.msk [vmem:[#allocation4 + $0x78] sm:$0x1] %vm1537, 0.0
      %1553 = vst.msk [vmem:[#allocation4 + $0x80] sm:$0xff] %vm1535, 0.0
      %1554 = vst.msk [vmem:[#allocation4 + $0x88] sm:$0x1] %vm1537, 0.0
      %vm1555 = vcmask 130048
      %1556 = vst.msk [vmem:[#allocation3] sm:$0xff] %vm1555, %v1503
      %1557 = vst.msk [vmem:[#allocation3 + $0x8] sm:$0xff] %vm1555, %v1504
      %1558 = vst.msk [vmem:[#allocation3 + $0x10] sm:$0xff] %vm1555, %v1505
      %1559 = vst.msk [vmem:[#allocation3 + $0x18] sm:$0xff] %vm1555, %v1506
      %1560 = vst.msk [vmem:[#allocation3 + $0x20] sm:$0xff] %vm1555, %v1507
      %1561 = vst.msk [vmem:[#allocation3 + $0x28] sm:$0xff] %vm1555, %v1508
      %1562 = vst.msk [vmem:[#allocation3 + $0x30] sm:$0xff] %vm1555, %v1509
      %1563 = vst.msk [vmem:[#allocation3 + $0x38] sm:$0xff] %vm1555, %v1510
      %1564 = vst.msk [vmem:[#allocation3 + $0x40] sm:$0xff] %vm1555, %v1511
      %1565 = vst.msk [vmem:[#allocation3 + $0x48] sm:$0xff] %vm1555, %v1512
      %1566 = vst.msk [vmem:[#allocation3 + $0x50] sm:$0xff] %vm1555, %v1513
      %1567 = vst.msk [vmem:[#allocation3 + $0x58] sm:$0xff] %vm1555, %v1514
      %1568 = vst.msk [vmem:[#allocation3 + $0x60] sm:$0xff] %vm1555, %v1515
      %1569 = vst.msk [vmem:[#allocation3 + $0x68] sm:$0xff] %vm1555, %v1516
      %1570 = vst.msk [vmem:[#allocation3 + $0x70] sm:$0xff] %vm1555, %v1517
      %1571 = vst.msk [vmem:[#allocation3 + $0x78] sm:$0xff] %vm1555, %v1518
      %1572 = vst.msk [vmem:[#allocation3 + $0x80] sm:$0xff] %vm1555, %v1519
      %1573 = vst.msk [vmem:[#allocation3 + $0x88] sm:$0xff] %vm1555, %v1520
      %1574 = vst.msk [vmem:[#allocation3 + $0x90] sm:$0xff] %vm1555, %v1521
      %1575 = vst.msk [vmem:[#allocation3 + $0x98] sm:$0xff] %vm1555, %v1522
      %1576 = vst.msk [vmem:[#allocation3 + $0xa0] sm:$0xff] %vm1555, %v1523
      %1577 = vst.msk [vmem:[#allocation3 + $0xa8] sm:$0xff] %vm1555, %v1524
      %1578 = vst.msk [vmem:[#allocation3 + $0xb0] sm:$0xff] %vm1555, %v1525
      %1579 = vst.msk [vmem:[#allocation3 + $0xb8] sm:$0xff] %vm1555, %v1526
      %1580 = vst.msk [vmem:[#allocation3 + $0xc0] sm:$0xff] %vm1555, %v1527
      %1581 = vst.msk [vmem:[#allocation3 + $0xc8] sm:$0xff] %vm1555, %v1528
      %1582 = vst.msk [vmem:[#allocation3 + $0xd0] sm:$0xff] %vm1555, %v1529
      %1583 = vst.msk [vmem:[#allocation3 + $0xd8] sm:$0xff] %vm1555, %v1530
      %1584 = vst.msk [vmem:[#allocation3 + $0xe0] sm:$0xff] %vm1555, %v1531
      %1585 = vst.msk [vmem:[#allocation3 + $0xe8] sm:$0xff] %vm1555, %v1532
      %1586 = vst.msk [vmem:[#allocation3 + $0xf0] sm:$0xff] %vm1555, %v1533
      %1587 = vst.msk [vmem:[#allocation3 + $0xf8] sm:$0xff] %vm1555, %v1534
      %v1588 = vld [vmem:[#allocation3] ss:$2 sm:$0xff]
      %s1589 = scalar_lea.vmem [#allocation3], 16
      %v1590 = vld [vmem:[%s1589] ss:$2 sm:$0xff]
      %s1591 = scalar_lea.vmem [#allocation3], 32
      %v1592 = vld [vmem:[%s1591] ss:$2 sm:$0xff]
      %s1593 = scalar_lea.vmem [#allocation3], 48
      %v1594 = vld [vmem:[%s1593] ss:$2 sm:$0xff]
      %s1595 = scalar_lea.vmem [#allocation3], 64
      %v1596 = vld [vmem:[%s1595] ss:$2 sm:$0xff]
      %s1597 = scalar_lea.vmem [#allocation3], 80
      %v1598 = vld [vmem:[%s1597] ss:$2 sm:$0xff]
      %s1599 = scalar_lea.vmem [#allocation3], 96
      %v1600 = vld [vmem:[%s1599] ss:$2 sm:$0xff]
      %s1601 = scalar_lea.vmem [#allocation3], 112
      %v1602 = vld [vmem:[%s1601] ss:$2 sm:$0xff]
      %s1603 = scalar_lea.vmem [#allocation3], 128
      %v1604 = vld [vmem:[%s1603] ss:$2 sm:$0xff]
      %s1605 = scalar_lea.vmem [#allocation3], 144
      %v1606 = vld [vmem:[%s1605] ss:$2 sm:$0xff]
      %s1607 = scalar_lea.vmem [#allocation3], 160
      %v1608 = vld [vmem:[%s1607] ss:$2 sm:$0xff]
      %s1609 = scalar_lea.vmem [#allocation3], 176
      %v1610 = vld [vmem:[%s1609] ss:$2 sm:$0xff]
      %s1611 = scalar_lea.vmem [#allocation3], 192
      %v1612 = vld [vmem:[%s1611] ss:$2 sm:$0xff]
      %s1613 = scalar_lea.vmem [#allocation3], 208
      %v1614 = vld [vmem:[%s1613] ss:$2 sm:$0xff]
      %s1615 = scalar_lea.vmem [#allocation3], 224
      %v1616 = vld [vmem:[%s1615] ss:$2 sm:$0xff]
      %s1617 = scalar_lea.vmem [#allocation3], 240
      %v1618 = vld [vmem:[%s1617] ss:$2 sm:$0xff]
      %s1619 = scalar_lea.vmem [#allocation3], 1
      %v1620 = vld [vmem:[%s1619] ss:$2 sm:$0xff]
      %s1621 = scalar_lea.vmem [#allocation3], 17
      %v1622 = vld [vmem:[%s1621] ss:$2 sm:$0xff]
      %s1623 = scalar_lea.vmem [#allocation3], 33
      %v1624 = vld [vmem:[%s1623] ss:$2 sm:$0xff]
      %s1625 = scalar_lea.vmem [#allocation3], 49
      %v1626 = vld [vmem:[%s1625] ss:$2 sm:$0xff]
      %s1627 = scalar_lea.vmem [#allocation3], 65
      %v1628 = vld [vmem:[%s1627] ss:$2 sm:$0xff]
      %s1629 = scalar_lea.vmem [#allocation3], 81
      %v1630 = vld [vmem:[%s1629] ss:$2 sm:$0xff]
      %s1631 = scalar_lea.vmem [#allocation3], 97
      %v1632 = vld [vmem:[%s1631] ss:$2 sm:$0xff]
      %s1633 = scalar_lea.vmem [#allocation3], 113
      %v1634 = vld [vmem:[%s1633] ss:$2 sm:$0xff]
      %s1635 = scalar_lea.vmem [#allocation3], 129
      %v1636 = vld [vmem:[%s1635] ss:$2 sm:$0xff]
      %s1637 = scalar_lea.vmem [#allocation3], 145
      %v1638 = vld [vmem:[%s1637] ss:$2 sm:$0xff]
      %s1639 = scalar_lea.vmem [#allocation3], 161
      %v1640 = vld [vmem:[%s1639] ss:$2 sm:$0xff]
      %s1641 = scalar_lea.vmem [#allocation3], 177
      %v1642 = vld [vmem:[%s1641] ss:$2 sm:$0xff]
      %s1643 = scalar_lea.vmem [#allocation3], 193
      %v1644 = vld [vmem:[%s1643] ss:$2 sm:$0xff]
      %s1645 = scalar_lea.vmem [#allocation3], 209
      %v1646 = vld [vmem:[%s1645] ss:$2 sm:$0xff]
      %s1647 = scalar_lea.vmem [#allocation3], 225
      %v1648 = vld [vmem:[%s1647] ss:$2 sm:$0xff]
      %s1649 = scalar_lea.vmem [#allocation3], 241
      %v1650 = vld [vmem:[%s1649] ss:$2 sm:$0xff]
      %1659 = vrot.lane.b32.xlu0 %v1588, 48
      %v1660 = vpop.permute.xlu0 %1659
      %1661 = vrot.lane.b32.xlu0 %v1592, 48
      %v1662 = vpop.permute.xlu0 %1661
      %1663 = vrot.lane.b32.xlu0 %v1596, 48
      %v1664 = vpop.permute.xlu0 %1663
      %1665 = vrot.lane.b32.xlu0 %v1600, 48
      %v1666 = vpop.permute.xlu0 %1665
      %1667 = vrot.lane.b32.xlu0 %v1604, 48
      %v1668 = vpop.permute.xlu0 %1667
      %1669 = vrot.lane.b32.xlu0 %v1608, 48
      %v1670 = vpop.permute.xlu0 %1669
      %1671 = vrot.lane.b32.xlu0 %v1612, 48
      %v1672 = vpop.permute.xlu0 %1671
      %1673 = vrot.lane.b32.xlu0 %v1616, 48
      %v1674 = vpop.permute.xlu0 %1673
      %vm1683 = vcmask 523648
      %1684 = vst.msk [vmem:[#allocation4] sm:$0xff] %vm1683, %v1660
      %1685 = vst.msk [vmem:[#allocation4 + $0x10] sm:$0xff] %vm1683, %v1662
      %1686 = vst.msk [vmem:[#allocation4 + $0x20] sm:$0xff] %vm1683, %v1664
      %1687 = vst.msk [vmem:[#allocation4 + $0x30] sm:$0xff] %vm1683, %v1666
      %1688 = vst.msk [vmem:[#allocation4 + $0x40] sm:$0xff] %vm1683, %v1668
      %1689 = vst.msk [vmem:[#allocation4 + $0x50] sm:$0xff] %vm1683, %v1670
      %1690 = vst.msk [vmem:[#allocation4 + $0x60] sm:$0xff] %vm1683, %v1672
      %1691 = vst.msk [vmem:[#allocation4 + $0x70] sm:$0xff] %vm1683, %v1674
      %1700 = vrot.lane.b32.xlu0 %v1590, 16
      %v1701 = vpop.permute.xlu0 %1700
      %1702 = vrot.lane.b32.xlu0 %v1594, 16
      %v1703 = vpop.permute.xlu0 %1702
      %1704 = vrot.lane.b32.xlu0 %v1598, 16
      %v1705 = vpop.permute.xlu0 %1704
      %1706 = vrot.lane.b32.xlu0 %v1602, 16
      %v1707 = vpop.permute.xlu0 %1706
      %1708 = vrot.lane.b32.xlu0 %v1606, 16
      %v1709 = vpop.permute.xlu0 %1708
      %1710 = vrot.lane.b32.xlu0 %v1610, 16
      %v1711 = vpop.permute.xlu0 %1710
      %1712 = vrot.lane.b32.xlu0 %v1614, 16
      %v1713 = vpop.permute.xlu0 %1712
      %1714 = vrot.lane.b32.xlu0 %v1618, 16
      %v1715 = vpop.permute.xlu0 %1714
      %s1724 = scalar_lea.vmem [#allocation4], 16
      %vm1725 = vcmask 261248
      %1726 = vst.msk [vmem:[%s1724] sm:$0xff] %vm1725, %v1701
      %1727 = vst.msk [vmem:[%s1724 + $0x10] sm:$0xff] %vm1725, %v1703
      %1728 = vst.msk [vmem:[%s1724 + $0x20] sm:$0xff] %vm1725, %v1705
      %1729 = vst.msk [vmem:[%s1724 + $0x30] sm:$0xff] %vm1725, %v1707
      %1730 = vst.msk [vmem:[%s1724 + $0x40] sm:$0xff] %vm1725, %v1709
      %1731 = vst.msk [vmem:[%s1724 + $0x50] sm:$0xff] %vm1725, %v1711
      %1732 = vst.msk [vmem:[%s1724 + $0x60] sm:$0xff] %vm1725, %v1713
      %1733 = vst.msk [vmem:[%s1724 + $0x70] sm:$0xff] %vm1725, %v1715
      %1742 = vrot.lane.b32.xlu0 %v1620, 32
      %v1743 = vpop.permute.xlu0 %1742
      %1744 = vrot.lane.b32.xlu0 %v1624, 32
      %v1745 = vpop.permute.xlu0 %1744
      %1746 = vrot.lane.b32.xlu0 %v1628, 32
      %v1747 = vpop.permute.xlu0 %1746
      %1748 = vrot.lane.b32.xlu0 %v1632, 32
      %v1749 = vpop.permute.xlu0 %1748
      %1750 = vrot.lane.b32.xlu0 %v1636, 32
      %v1751 = vpop.permute.xlu0 %1750
      %1752 = vrot.lane.b32.xlu0 %v1640, 32
      %v1753 = vpop.permute.xlu0 %1752
      %1754 = vrot.lane.b32.xlu0 %v1644, 32
      %v1755 = vpop.permute.xlu0 %1754
      %1756 = vrot.lane.b32.xlu0 %v1648, 32
      %v1757 = vpop.permute.xlu0 %1756
      %vm1766 = vcmask 392448
      %1767 = vst.msk [vmem:[#allocation4 + $0x1] sm:$0xff] %vm1766, %v1743
      %1768 = vst.msk [vmem:[#allocation4 + $0x11] sm:$0xff] %vm1766, %v1745
      %1769 = vst.msk [vmem:[#allocation4 + $0x21] sm:$0xff] %vm1766, %v1747
      %1770 = vst.msk [vmem:[#allocation4 + $0x31] sm:$0xff] %vm1766, %v1749
      %1771 = vst.msk [vmem:[#allocation4 + $0x41] sm:$0xff] %vm1766, %v1751
      %1772 = vst.msk [vmem:[#allocation4 + $0x51] sm:$0xff] %vm1766, %v1753
      %1773 = vst.msk [vmem:[#allocation4 + $0x61] sm:$0xff] %vm1766, %v1755
      %1774 = vst.msk [vmem:[#allocation4 + $0x71] sm:$0xff] %vm1766, %v1757
      %1775 = vst.msk [vmem:[%s1724 + $0x1] sm:$0xff] %vm1555, %v1622
      %1776 = vst.msk [vmem:[%s1724 + $0x11] sm:$0xff] %vm1555, %v1626
      %1777 = vst.msk [vmem:[%s1724 + $0x21] sm:$0xff] %vm1555, %v1630
      %1778 = vst.msk [vmem:[%s1724 + $0x31] sm:$0xff] %vm1555, %v1634
      %1779 = vst.msk [vmem:[%s1724 + $0x41] sm:$0xff] %vm1555, %v1638
      %1780 = vst.msk [vmem:[%s1724 + $0x51] sm:$0xff] %vm1555, %v1642
      %1781 = vst.msk [vmem:[%s1724 + $0x61] sm:$0xff] %vm1555, %v1646
      %1782 = vst.msk [vmem:[%s1724 + $0x71] sm:$0xff] %vm1555, %v1650
      %v1783 = vld [vmem:[#allocation4] sm:$0xff]
      %v1784 = vld [vmem:[#allocation4 + $0x10] sm:$0xff]
      %v1785 = vld [vmem:[#allocation4 + $0x20] sm:$0xff]
      %v1786 = vld [vmem:[#allocation4 + $0x30] sm:$0xff]
      %v1787 = vld [vmem:[#allocation4 + $0x40] sm:$0xff]
      %v1788 = vld [vmem:[#allocation4 + $0x50] sm:$0xff]
      %v1789 = vld [vmem:[#allocation4 + $0x60] sm:$0xff]
      %v1790 = vld [vmem:[#allocation4 + $0x70] sm:$0xff]
      %v1791 = vpack.c.bf16 %v1783, %v1783
      %v1792 = vpack.c.bf16 %v1784, %v1784
      %v1793 = vpack.c.bf16 %v1785, %v1785
      %v1794 = vpack.c.bf16 %v1786, %v1786
      %v1795 = vpack.c.bf16 %v1787, %v1787
      %v1796 = vpack.c.bf16 %v1788, %v1788
      %v1797 = vpack.c.bf16 %v1789, %v1789
      %v1798 = vpack.c.bf16 %v1790, %v1790
      %vm1799 = vcmask 519168
      %1800 = vst.msk [vmem:[#allocation5] sm:$0xf] %vm1799, %v1791
      %1801 = vst.msk [vmem:[#allocation5 + $0x8] sm:$0xf] %vm1799, %v1792
      %1802 = vst.msk [vmem:[#allocation5 + $0x10] sm:$0xf] %vm1799, %v1793
      %1803 = vst.msk [vmem:[#allocation5 + $0x18] sm:$0xf] %vm1799, %v1794
      %1804 = vst.msk [vmem:[#allocation5 + $0x20] sm:$0xf] %vm1799, %v1795
      %1805 = vst.msk [vmem:[#allocation5 + $0x28] sm:$0xf] %vm1799, %v1796
      %1806 = vst.msk [vmem:[#allocation5 + $0x30] sm:$0xf] %vm1799, %v1797
      %1807 = vst.msk [vmem:[#allocation5 + $0x38] sm:$0xf] %vm1799, %v1798
      %v1808 = vld [vmem:[#allocation4 + $0x1] sm:$0xff]
      %v1809 = vld [vmem:[#allocation4 + $0x11] sm:$0xff]
      %v1810 = vld [vmem:[#allocation4 + $0x21] sm:$0xff]
      %v1811 = vld [vmem:[#allocation4 + $0x31] sm:$0xff]
      %v1812 = vld [vmem:[#allocation4 + $0x41] sm:$0xff]
      %v1813 = vld [vmem:[#allocation4 + $0x51] sm:$0xff]
      %v1814 = vld [vmem:[#allocation4 + $0x61] sm:$0xff]
      %v1815 = vld [vmem:[#allocation4 + $0x71] sm:$0xff]
      %v1816 = vpack.c.bf16 %v1808, %v1808
      %v1817 = vpack.c.bf16 %v1809, %v1809
      %v1818 = vpack.c.bf16 %v1810, %v1810
      %v1819 = vpack.c.bf16 %v1811, %v1811
      %v1820 = vpack.c.bf16 %v1812, %v1812
      %v1821 = vpack.c.bf16 %v1813, %v1813
      %v1822 = vpack.c.bf16 %v1814, %v1814
      %v1823 = vpack.c.bf16 %v1815, %v1815
      %1832 = vrot.lane.b32.xlu0 %v1816, 64
      %v1833 = vpop.permute.xlu0 %1832
      %1834 = vrot.lane.b32.xlu0 %v1817, 64
      %v1835 = vpop.permute.xlu0 %1834
      %1836 = vrot.lane.b32.xlu0 %v1818, 64
      %v1837 = vpop.permute.xlu0 %1836
      %1838 = vrot.lane.b32.xlu0 %v1819, 64
      %v1839 = vpop.permute.xlu0 %1838
      %1840 = vrot.lane.b32.xlu0 %v1820, 64
      %v1841 = vpop.permute.xlu0 %1840
      %1842 = vrot.lane.b32.xlu0 %v1821, 64
      %v1843 = vpop.permute.xlu0 %1842
      %1844 = vrot.lane.b32.xlu0 %v1822, 64
      %v1845 = vpop.permute.xlu0 %1844
      %1846 = vrot.lane.b32.xlu0 %v1823, 64
      %v1847 = vpop.permute.xlu0 %1846
      %vm1856 = vcmask 1043968
      %1857 = vst.msk [vmem:[#allocation5] sm:$0xf] %vm1856, %v1833
      %1858 = vst.msk [vmem:[#allocation5 + $0x8] sm:$0xf] %vm1856, %v1835
      %1859 = vst.msk [vmem:[#allocation5 + $0x10] sm:$0xf] %vm1856, %v1837
      %1860 = vst.msk [vmem:[#allocation5 + $0x18] sm:$0xf] %vm1856, %v1839
      %1861 = vst.msk [vmem:[#allocation5 + $0x20] sm:$0xf] %vm1856, %v1841
      %1862 = vst.msk [vmem:[#allocation5 + $0x28] sm:$0xf] %vm1856, %v1843
      %1863 = vst.msk [vmem:[#allocation5 + $0x30] sm:$0xf] %vm1856, %v1845
      %1864 = vst.msk [vmem:[#allocation5 + $0x38] sm:$0xf] %vm1856, %v1847
      %v1865 = vld [vmem:[%s1724] sm:$0xff]
      %v1866 = vld [vmem:[%s1724 + $0x10] sm:$0xff]
      %v1867 = vld [vmem:[%s1724 + $0x20] sm:$0xff]
      %v1868 = vld [vmem:[%s1724 + $0x30] sm:$0xff]
      %v1869 = vld [vmem:[%s1724 + $0x40] sm:$0xff]
      %v1870 = vld [vmem:[%s1724 + $0x50] sm:$0xff]
      %v1871 = vld [vmem:[%s1724 + $0x60] sm:$0xff]
      %v1872 = vld [vmem:[%s1724 + $0x70] sm:$0xff]
      %v1873 = vpack.c.bf16 %v1865, %v1865
      %v1874 = vpack.c.bf16 %v1866, %v1866
      %v1875 = vpack.c.bf16 %v1867, %v1867
      %v1876 = vpack.c.bf16 %v1868, %v1868
      %v1877 = vpack.c.bf16 %v1869, %v1869
      %v1878 = vpack.c.bf16 %v1870, %v1870
      %v1879 = vpack.c.bf16 %v1871, %v1871
      %v1880 = vpack.c.bf16 %v1872, %v1872
      %1881 = vst.msk [vmem:[#allocation5 + $0x4] sm:$0xf] %vm1799, %v1873
      %1882 = vst.msk [vmem:[#allocation5 + $0xc] sm:$0xf] %vm1799, %v1874
      %1883 = vst.msk [vmem:[#allocation5 + $0x14] sm:$0xf] %vm1799, %v1875
      %1884 = vst.msk [vmem:[#allocation5 + $0x1c] sm:$0xf] %vm1799, %v1876
      %1885 = vst.msk [vmem:[#allocation5 + $0x24] sm:$0xf] %vm1799, %v1877
      %1886 = vst.msk [vmem:[#allocation5 + $0x2c] sm:$0xf] %vm1799, %v1878
      %1887 = vst.msk [vmem:[#allocation5 + $0x34] sm:$0xf] %vm1799, %v1879
      %1888 = vst.msk [vmem:[#allocation5 + $0x3c] sm:$0xf] %vm1799, %v1880
      %v1889 = vld [vmem:[%s1724 + $0x1] sm:$0xff]
      %v1890 = vld [vmem:[%s1724 + $0x11] sm:$0xff]
      %v1891 = vld [vmem:[%s1724 + $0x21] sm:$0xff]
      %v1892 = vld [vmem:[%s1724 + $0x31] sm:$0xff]
      %v1893 = vld [vmem:[%s1724 + $0x41] sm:$0xff]
      %v1894 = vld [vmem:[%s1724 + $0x51] sm:$0xff]
      %v1895 = vld [vmem:[%s1724 + $0x61] sm:$0xff]
      %v1896 = vld [vmem:[%s1724 + $0x71] sm:$0xff]
      %v1897 = vpack.c.bf16 %v1889, %v1889
      %v1898 = vpack.c.bf16 %v1890, %v1890
      %v1899 = vpack.c.bf16 %v1891, %v1891
      %v1900 = vpack.c.bf16 %v1892, %v1892
      %v1901 = vpack.c.bf16 %v1893, %v1893
      %v1902 = vpack.c.bf16 %v1894, %v1894
      %v1903 = vpack.c.bf16 %v1895, %v1895
      %v1904 = vpack.c.bf16 %v1896, %v1896
      %1913 = vrot.lane.b32.xlu0 %v1897, 64
      %v1914 = vpop.permute.xlu0 %1913
      %1915 = vrot.lane.b32.xlu0 %v1898, 64
      %v1916 = vpop.permute.xlu0 %1915
      %1917 = vrot.lane.b32.xlu0 %v1899, 64
      %v1918 = vpop.permute.xlu0 %1917
      %1919 = vrot.lane.b32.xlu0 %v1900, 64
      %v1920 = vpop.permute.xlu0 %1919
      %1921 = vrot.lane.b32.xlu0 %v1901, 64
      %v1922 = vpop.permute.xlu0 %1921
      %1923 = vrot.lane.b32.xlu0 %v1902, 64
      %v1924 = vpop.permute.xlu0 %1923
      %1925 = vrot.lane.b32.xlu0 %v1903, 64
      %v1926 = vpop.permute.xlu0 %1925
      %1927 = vrot.lane.b32.xlu0 %v1904, 64
      %v1928 = vpop.permute.xlu0 %1927
      %1937 = vst.msk [vmem:[#allocation5 + $0x4] sm:$0xf] %vm1856, %v1914
      %1938 = vst.msk [vmem:[#allocation5 + $0xc] sm:$0xf] %vm1856, %v1916
      %1939 = vst.msk [vmem:[#allocation5 + $0x14] sm:$0xf] %vm1856, %v1918
      %1940 = vst.msk [vmem:[#allocation5 + $0x1c] sm:$0xf] %vm1856, %v1920
      %1941 = vst.msk [vmem:[#allocation5 + $0x24] sm:$0xf] %vm1856, %v1922
      %1942 = vst.msk [vmem:[#allocation5 + $0x2c] sm:$0xf] %vm1856, %v1924
      %1943 = vst.msk [vmem:[#allocation5 + $0x34] sm:$0xf] %vm1856, %v1926
      %1944 = vst.msk [vmem:[#allocation5 + $0x3c] sm:$0xf] %vm1856, %v1928
      %v1945 = vld [vmem:[#allocation5] sm:$0xff]
      %v1946 = vld [vmem:[#allocation5 + $0x8] sm:$0xff]
      %v1947 = vld [vmem:[#allocation5 + $0x10] sm:$0xff]
      %v1948 = vld [vmem:[#allocation5 + $0x18] sm:$0xff]
      %v1949 = vld [vmem:[#allocation5 + $0x20] sm:$0xff]
      %v1950 = vld [vmem:[#allocation5 + $0x28] sm:$0xff]
      %v1951 = vld [vmem:[#allocation5 + $0x30] sm:$0xff]
      %v1952 = vld [vmem:[#allocation5 + $0x38] sm:$0xff]
      %v1953 = vld [vmem:[%s3] sm:$0xf]
      %v1954 = vld [vmem:[%s3 + $0x4] sm:$0xf]
      %v1955 = vld [vmem:[%s3 + $0x8] sm:$0xf]
      %v1956 = vld [vmem:[%s3 + $0xc] sm:$0xf]
      %v1957 = vld [vmem:[%s3 + $0x10] sm:$0xf]
      %v1958 = vld [vmem:[%s3 + $0x14] sm:$0xf]
      %v1959 = vld [vmem:[%s3 + $0x18] sm:$0xf]
      %v1960 = vld [vmem:[%s3 + $0x1c] sm:$0xf]
      %v1961 = vld [vmem:[%s3 + $0x20] sm:$0xf]
      %v1962 = vld [vmem:[%s3 + $0x24] sm:$0xf]
      %v1963 = vld [vmem:[%s3 + $0x28] sm:$0xf]
      %v1964 = vld [vmem:[%s3 + $0x2c] sm:$0xf]
      %v1965 = vld [vmem:[%s3 + $0x30] sm:$0xf]
      %v1966 = vld [vmem:[%s3 + $0x34] sm:$0xf]
      %v1967 = vld [vmem:[%s3 + $0x38] sm:$0xf]
      %v1968 = vld [vmem:[%s3 + $0x3c] sm:$0xf]
      %v1969 = vld [vmem:[%s3 + $0x40] sm:$0xf]
      %v1970 = vld [vmem:[%s3 + $0x44] sm:$0xf]
      %v1971 = vld [vmem:[%s3 + $0x48] sm:$0xf]
      %v1972 = vld [vmem:[%s3 + $0x4c] sm:$0xf]
      %v1973 = vld [vmem:[%s3 + $0x50] sm:$0xf]
      %v1974 = vld [vmem:[%s3 + $0x54] sm:$0xf]
      %v1975 = vld [vmem:[%s3 + $0x58] sm:$0xf]
      %v1976 = vld [vmem:[%s3 + $0x5c] sm:$0xf]
      %v1977 = vld [vmem:[%s3 + $0x60] sm:$0xf]
      %v1978 = vld [vmem:[%s3 + $0x64] sm:$0xf]
      %v1979 = vld [vmem:[%s3 + $0x68] sm:$0xf]
      %v1980 = vld [vmem:[%s3 + $0x6c] sm:$0xf]
      %v1981 = vld [vmem:[%s3 + $0x70] sm:$0xf]
      %v1982 = vld [vmem:[%s3 + $0x74] sm:$0xf]
      %v1983 = vld [vmem:[%s3 + $0x78] sm:$0xf]
      %v1984 = vld [vmem:[%s3 + $0x7c] sm:$0xf]
      %v1985 = vld [vmem:[%s4] sm:$0x1]
      %v1987 = vperm.slane %v1985, 0
      %v1997 = vunpack.c.l.b16 %v1945
      %v1998 = vunpack.c.h.b16 %v1945
      %v1999 = vunpack.c.l.b16 %v1946
      %v2000 = vunpack.c.h.b16 %v1946
      %v2001 = vunpack.c.l.b16 %v1947
      %v2002 = vunpack.c.h.b16 %v1947
      %v2003 = vunpack.c.l.b16 %v1948
      %v2004 = vunpack.c.h.b16 %v1948
      %v2005 = vunpack.c.l.b16 %v1949
      %v2006 = vunpack.c.h.b16 %v1949
      %v2007 = vunpack.c.l.b16 %v1950
      %v2008 = vunpack.c.h.b16 %v1950
      %v2009 = vunpack.c.l.b16 %v1951
      %v2010 = vunpack.c.h.b16 %v1951
      %v2011 = vunpack.c.l.b16 %v1952
      %v2012 = vunpack.c.h.b16 %v1952
      %v2013 = vpack.c.b16 %v1999, %v1997
      %v2014 = vpack.c.b16 %v2000, %v1998
      %v2015 = vpack.c.b16 %v2003, %v2001
      %v2016 = vpack.c.b16 %v2004, %v2002
      %v2017 = vpack.c.b16 %v2007, %v2005
      %v2018 = vpack.c.b16 %v2008, %v2006
      %v2019 = vpack.c.b16 %v2011, %v2009
      %v2020 = vpack.c.b16 %v2012, %v2010
      %v2061 = vunpack.c.l.b16 %v1953
      %v2062 = vunpack.c.l.b16 %v1954
      %v2063 = vunpack.c.l.b16 %v1955
      %v2064 = vunpack.c.l.b16 %v1956
      %v2065 = vunpack.c.l.b16 %v1957
      %v2066 = vunpack.c.l.b16 %v1958
      %v2067 = vunpack.c.l.b16 %v1959
      %v2068 = vunpack.c.l.b16 %v1960
      %v2069 = vunpack.c.l.b16 %v1961
      %v2070 = vunpack.c.l.b16 %v1962
      %v2071 = vunpack.c.l.b16 %v1963
      %v2072 = vunpack.c.l.b16 %v1964
      %v2073 = vunpack.c.l.b16 %v1965
      %v2074 = vunpack.c.l.b16 %v1966
      %v2075 = vunpack.c.l.b16 %v1967
      %v2076 = vunpack.c.l.b16 %v1968
      %v2077 = vunpack.c.l.b16 %v1969
      %v2078 = vunpack.c.l.b16 %v1970
      %v2079 = vunpack.c.l.b16 %v1971
      %v2080 = vunpack.c.l.b16 %v1972
      %v2081 = vunpack.c.l.b16 %v1973
      %v2082 = vunpack.c.l.b16 %v1974
      %v2083 = vunpack.c.l.b16 %v1975
      %v2084 = vunpack.c.l.b16 %v1976
      %v2085 = vunpack.c.l.b16 %v1977
      %v2086 = vunpack.c.l.b16 %v1978
      %v2087 = vunpack.c.l.b16 %v1979
      %v2088 = vunpack.c.l.b16 %v1980
      %v2089 = vunpack.c.l.b16 %v1981
      %v2090 = vunpack.c.l.b16 %v1982
      %v2091 = vunpack.c.l.b16 %v1983
      %v2092 = vunpack.c.l.b16 %v1984
      %v2093 = vpack.c.b16 %v2062, %v2061
      %v2094 = vpack.c.b16 %v2064, %v2063
      %v2095 = vpack.c.b16 %v2066, %v2065
      %v2096 = vpack.c.b16 %v2068, %v2067
      %v2097 = vpack.c.b16 %v2070, %v2069
      %v2098 = vpack.c.b16 %v2072, %v2071
      %v2099 = vpack.c.b16 %v2074, %v2073
      %v2100 = vpack.c.b16 %v2076, %v2075
      %v2101 = vpack.c.b16 %v2078, %v2077
      %v2102 = vpack.c.b16 %v2080, %v2079
      %v2103 = vpack.c.b16 %v2082, %v2081
      %v2104 = vpack.c.b16 %v2084, %v2083
      %v2105 = vpack.c.b16 %v2086, %v2085
      %v2106 = vpack.c.b16 %v2088, %v2087
      %v2107 = vpack.c.b16 %v2090, %v2089
      %v2108 = vpack.c.b16 %v2092, %v2091
      %2125 = vmatpush.bf16.msra.mxu0 %v2100
      %2126 = vmatpush.bf16.msra.mxu0 %v2099
      %2127 = vmatpush.bf16.msra.mxu0 %v2098
      %2128 = vmatpush.bf16.msra.mxu0 %v2097
      %2129 = vmatpush.bf16.msra.mxu0 %v2096
      %2130 = vmatpush.bf16.msra.mxu0 %v2095
      %2131 = vmatpush.bf16.msra.mxu0 %v2094
      %2132 = vmatpush.bf16.msra.mxu0 %v2093
      %2133 = vmatmul.bf16.gmra.mxu0 %v2013
      %v2134 = vpop.f32.mrf.mxu0
      %v2135 = vadd.f32 %v1987, %v2134
      %v2136 = vpop.f32.mrf.mxu0
      %v2137 = vadd.f32 %v1987, %v2136
      %2138 = vmatmul.bf16.gmra.mxu0 %v2015
      %v2139 = vpop.f32.mrf.mxu0
      %v2140 = vadd.f32 %v1987, %v2139
      %v2141 = vpop.f32.mrf.mxu0
      %v2142 = vadd.f32 %v1987, %v2141
      %2143 = vmatmul.bf16.gmra.mxu0 %v2017
      %v2144 = vpop.f32.mrf.mxu0
      %v2145 = vadd.f32 %v1987, %v2144
      %v2146 = vpop.f32.mrf.mxu0
      %v2147 = vadd.f32 %v1987, %v2146
      %2148 = vmatmul.bf16.gmra.mxu0 %v2019
      %v2149 = vpop.f32.mrf.mxu0
      %v2150 = vadd.f32 %v1987, %v2149
      %v2151 = vpop.f32.mrf.mxu0
      %v2152 = vadd.f32 %v1987, %v2151
      %2153 = vdwg.mxu0
      %2154 = vmatpush.bf16.msra.mxu0 %v2108
      %2155 = vmatpush.bf16.msra.mxu0 %v2107
      %2156 = vmatpush.bf16.msra.mxu0 %v2106
      %2157 = vmatpush.bf16.msra.mxu0 %v2105
      %2158 = vmatpush.bf16.msra.mxu0 %v2104
      %2159 = vmatpush.bf16.msra.mxu0 %v2103
      %2160 = vmatpush.bf16.msra.mxu0 %v2102
      %2161 = vmatpush.bf16.msra.mxu0 %v2101
      %2162 = vmatmul.bf16.gmra.mxu0 %v2014
      %v2163 = vpop.f32.mrf.mxu0
      %v2164 = vadd.f32 %v2135, %v2163
      %v2165 = vpop.f32.mrf.mxu0
      %v2166 = vadd.f32 %v2137, %v2165
      %2167 = vmatmul.bf16.gmra.mxu0 %v2016
      %v2168 = vpop.f32.mrf.mxu0
      %v2169 = vadd.f32 %v2140, %v2168
      %v2170 = vpop.f32.mrf.mxu0
      %v2171 = vadd.f32 %v2142, %v2170
      %2172 = vmatmul.bf16.gmra.mxu0 %v2018
      %v2173 = vpop.f32.mrf.mxu0
      %v2174 = vadd.f32 %v2145, %v2173
      %v2175 = vpop.f32.mrf.mxu0
      %v2176 = vadd.f32 %v2147, %v2175
      %2177 = vmatmul.bf16.gmra.mxu0 %v2020
      %v2178 = vpop.f32.mrf.mxu0
      %v2179 = vadd.f32 %v2150, %v2178
      %v2180 = vpop.f32.mrf.mxu0
      %v2181 = vadd.f32 %v2152, %v2180
      %2182 = vdwg.mxu0
      %vm2183 = vcmp.ge.f32.partialorder %v2164, 0.0
      %vm2184 = vcmp.ge.f32.partialorder %v2166, 0.0
      %vm2185 = vcmp.ge.f32.partialorder %v2169, 0.0
      %vm2186 = vcmp.ge.f32.partialorder %v2171, 0.0
      %vm2187 = vcmp.ge.f32.partialorder %v2174, 0.0
      %vm2188 = vcmp.ge.f32.partialorder %v2176, 0.0
      %vm2189 = vcmp.ge.f32.partialorder %v2179, 0.0
      %vm2190 = vcmp.ge.f32.partialorder %v2181, 0.0
      %v2191 = vmul.f32 %v2164, 0.2
      %v2192 = vmul.f32 %v2166, 0.2
      %v2193 = vmul.f32 %v2169, 0.2
      %v2194 = vmul.f32 %v2171, 0.2
      %v2195 = vmul.f32 %v2174, 0.2
      %v2196 = vmul.f32 %v2176, 0.2
      %v2197 = vmul.f32 %v2179, 0.2
      %v2198 = vmul.f32 %v2181, 0.2
      %v2199 = vsel %vm2183, %v2164, %v2191
      %v2200 = vsel %vm2184, %v2166, %v2192
      %v2201 = vsel %vm2185, %v2169, %v2193
      %v2202 = vsel %vm2186, %v2171, %v2194
      %v2203 = vsel %vm2187, %v2174, %v2195
      %v2204 = vsel %vm2188, %v2176, %v2196
      %v2205 = vsel %vm2189, %v2179, %v2197
      %v2206 = vsel %vm2190, %v2181, %v2198
      %2207 = vst [vmem:[#allocation7] sm:$0x1f] 0.0
      %2208 = vst [vmem:[#allocation7 + $0x8] sm:$0x1f] 0.0
      %2209 = vst [vmem:[#allocation7 + $0x10] sm:$0x1f] 0.0
      %2210 = vst [vmem:[#allocation7 + $0x18] sm:$0x1f] 0.0
      %2211 = vst [vmem:[#allocation7 + $0x20] sm:$0x1f] 0.0
      %vm2212 = vcmask 261120
      %2213 = vst.msk [vmem:[#allocation6] sm:$0xff] %vm2212, %v2199
      %2214 = vst.msk [vmem:[#allocation6 + $0x8] sm:$0xff] %vm2212, %v2200
      %2215 = vst.msk [vmem:[#allocation6 + $0x10] sm:$0xff] %vm2212, %v2201
      %2216 = vst.msk [vmem:[#allocation6 + $0x18] sm:$0xff] %vm2212, %v2202
      %2217 = vst.msk [vmem:[#allocation6 + $0x20] sm:$0xff] %vm2212, %v2203
      %2218 = vst.msk [vmem:[#allocation6 + $0x28] sm:$0xff] %vm2212, %v2204
      %2219 = vst.msk [vmem:[#allocation6 + $0x30] sm:$0xff] %vm2212, %v2205
      %2220 = vst.msk [vmem:[#allocation6 + $0x38] sm:$0xff] %vm2212, %v2206
      %v2221 = vld [vmem:[#allocation6] ss:$2 sm:$0xff]
      %s2222 = scalar_lea.vmem [#allocation6], 16
      %v2223 = vld [vmem:[%s2222] ss:$2 sm:$0xff]
      %s2224 = scalar_lea.vmem [#allocation6], 32
      %v2225 = vld [vmem:[%s2224] ss:$2 sm:$0xff]
      %s2226 = scalar_lea.vmem [#allocation6], 48
      %v2227 = vld [vmem:[%s2226] ss:$2 sm:$0xff]
      %s2228 = scalar_lea.vmem [#allocation6], 1
      %v2229 = vld [vmem:[%s2228] ss:$2 sm:$0xff]
      %s2230 = scalar_lea.vmem [#allocation6], 17
      %v2231 = vld [vmem:[%s2230] ss:$2 sm:$0xff]
      %s2232 = scalar_lea.vmem [#allocation6], 33
      %v2233 = vld [vmem:[%s2232] ss:$2 sm:$0xff]
      %s2234 = scalar_lea.vmem [#allocation6], 49
      %v2235 = vld [vmem:[%s2234] ss:$2 sm:$0xff]
      %2240 = vrot.lane.b32.xlu0 %v2221, 96
      %v2241 = vpop.permute.xlu0 %2240
      %2242 = vrot.lane.b32.xlu0 %v2223, 96
      %v2243 = vpop.permute.xlu0 %2242
      %2244 = vrot.lane.b32.xlu0 %v2225, 96
      %v2245 = vpop.permute.xlu0 %2244
      %2246 = vrot.lane.b32.xlu0 %v2227, 96
      %v2247 = vpop.permute.xlu0 %2246
      %vm2252 = vcmask 1044224
      %2253 = vst.msk [vmem:[#allocation7] sm:$0xf] %vm2252, %v2241
      %2254 = vst.msk [vmem:[#allocation7 + $0x8] sm:$0xf] %vm2252, %v2243
      %2255 = vst.msk [vmem:[#allocation7 + $0x10] sm:$0xf] %vm2252, %v2245
      %2256 = vst.msk [vmem:[#allocation7 + $0x18] sm:$0xf] %vm2252, %v2247
      %2257 = vrot.lane.b32.xlu0 %v2221, 32
      %v2258 = vpop.permute.xlu0 %2257
      %2259 = vrot.lane.b32.xlu0 %v2223, 32
      %v2260 = vpop.permute.xlu0 %2259
      %2261 = vrot.lane.b32.xlu0 %v2225, 32
      %v2262 = vpop.permute.xlu0 %2261
      %2263 = vrot.lane.b32.xlu0 %v2227, 32
      %v2264 = vpop.permute.xlu0 %2263
      %s2269 = scalar_lea.vmem [#allocation7], 8
      %vm2270 = vcmask 523524
      %2271 = vst.msk [vmem:[%s2269 - $0x4] sm:$0xf0] %vm2270, %v2258
      %2272 = vst.msk [vmem:[%s2269 + $0x4] sm:$0xf0] %vm2270, %v2260
      %2273 = vst.msk [vmem:[%s2269 + $0xc] sm:$0xf0] %vm2270, %v2262
      %2274 = vst.msk [vmem:[%s2269 + $0x14] sm:$0xf0] %vm2270, %v2264
      %2279 = vrot.lane.b32.xlu0 %v2229, 64
      %v2280 = vpop.permute.xlu0 %2279
      %2281 = vrot.lane.b32.xlu0 %v2231, 64
      %v2282 = vpop.permute.xlu0 %2281
      %2283 = vrot.lane.b32.xlu0 %v2233, 64
      %v2284 = vpop.permute.xlu0 %2283
      %2285 = vrot.lane.b32.xlu0 %v2235, 64
      %v2286 = vpop.permute.xlu0 %2285
      %vm2291 = vcmask 781824
      %2292 = vst.msk [vmem:[#allocation7 + $0x1] sm:$0xf] %vm2291, %v2280
      %2293 = vst.msk [vmem:[#allocation7 + $0x9] sm:$0xf] %vm2291, %v2282
      %2294 = vst.msk [vmem:[#allocation7 + $0x11] sm:$0xf] %vm2291, %v2284
      %2295 = vst.msk [vmem:[#allocation7 + $0x19] sm:$0xf] %vm2291, %v2286
      %vm2296 = vcmask 261124
      %2297 = vst.msk [vmem:[%s2269 - $0x3] sm:$0xf0] %vm2296, %v2229
      %2298 = vst.msk [vmem:[%s2269 + $0x5] sm:$0xf0] %vm2296, %v2231
      %2299 = vst.msk [vmem:[%s2269 + $0xd] sm:$0xf0] %vm2296, %v2233
      %2300 = vst.msk [vmem:[%s2269 + $0x15] sm:$0xf0] %vm2296, %v2235
      %v2301 = vld [vmem:[#allocation7] sm:$0xf]
      %v2302 = vld [vmem:[#allocation7 + $0x8] sm:$0xf]
      %v2303 = vld [vmem:[#allocation7 + $0x10] sm:$0xf]
      %v2304 = vld [vmem:[#allocation7 + $0x18] sm:$0xf]
      %2309 = vst [vmem:[#allocation1] ss:$2 sm:$0xff] %v2301
      %s2310 = scalar_lea.vmem [#allocation1], 1
      %2311 = vst [vmem:[%s2310] ss:$2 sm:$0xff] %v2302
      %s2312 = scalar_lea.vmem [#allocation1], 16
      %2313 = vst [vmem:[%s2312] ss:$2 sm:$0xff] %v2303
      %s2314 = scalar_lea.vmem [#allocation1], 17
      %2315 = vst [vmem:[%s2314] ss:$2 sm:$0xff] %v2304
      %v2316 = vld.sshfl [vmem:[#allocation1] sm:$0xff pattern:$0x75316420]
      %v2317 = vld.sshfl [vmem:[#allocation1 + $0x10] sm:$0xff pattern:$0x75316420]
      %v2320 = vpack.c.bf16 %v2316, %v2316
      %v2321 = vpack.c.bf16 %v2317, %v2317
      %2322 = vst [vmem:[#allocation8] sm:$0xf] %v2320
      %2323 = vst [vmem:[#allocation8 + $0x10] sm:$0xf] %v2321
      %v2324 = vld [vmem:[#allocation7 + $0x1] sm:$0xf]
      %v2325 = vld [vmem:[#allocation7 + $0x9] sm:$0xf]
      %v2326 = vld [vmem:[#allocation7 + $0x11] sm:$0xf]
      %v2327 = vld [vmem:[#allocation7 + $0x19] sm:$0xf]
      %2332 = vst [vmem:[#allocation1] ss:$2 sm:$0xff] %v2324
      %s2333 = scalar_lea.vmem [#allocation1], 1
      %2334 = vst [vmem:[%s2333] ss:$2 sm:$0xff] %v2325
      %s2335 = scalar_lea.vmem [#allocation1], 16
      %2336 = vst [vmem:[%s2335] ss:$2 sm:$0xff] %v2326
      %s2337 = scalar_lea.vmem [#allocation1], 17
      %2338 = vst [vmem:[%s2337] ss:$2 sm:$0xff] %v2327
      %v2339 = vld.sshfl [vmem:[#allocation1] sm:$0xff pattern:$0x75316420]
      %v2340 = vld.sshfl [vmem:[#allocation1 + $0x10] sm:$0xff pattern:$0x75316420]
      %v2343 = vpack.c.bf16 %v2339, %v2339
      %v2344 = vpack.c.bf16 %v2340, %v2340
      %2345 = vst [vmem:[#allocation8 + $0x4] sm:$0xf] %v2343
      %2346 = vst [vmem:[#allocation8 + $0x14] sm:$0xf] %v2344
      %v2347 = vld [vmem:[%s2269] sm:$0xf]
      %v2348 = vld [vmem:[%s2269 + $0x8] sm:$0xf]
      %v2349 = vld [vmem:[%s2269 + $0x10] sm:$0xf]
      %v2350 = vld [vmem:[%s2269 + $0x18] sm:$0xf]
      %2355 = vst [vmem:[#allocation1] ss:$2 sm:$0xff] %v2347
      %s2356 = scalar_lea.vmem [#allocation1], 1
      %2357 = vst [vmem:[%s2356] ss:$2 sm:$0xff] %v2348
      %s2358 = scalar_lea.vmem [#allocation1], 16
      %2359 = vst [vmem:[%s2358] ss:$2 sm:$0xff] %v2349
      %s2360 = scalar_lea.vmem [#allocation1], 17
      %2361 = vst [vmem:[%s2360] ss:$2 sm:$0xff] %v2350
      %v2362 = vld.sshfl [vmem:[#allocation1] sm:$0xff pattern:$0x75316420]
      %v2363 = vld.sshfl [vmem:[#allocation1 + $0x10] sm:$0xff pattern:$0x75316420]
      %v2366 = vpack.c.bf16 %v2362, %v2362
      %v2367 = vpack.c.bf16 %v2363, %v2363
      %2368 = vst [vmem:[#allocation8 + $0x8] sm:$0xf] %v2366
      %2369 = vst [vmem:[#allocation8 + $0x18] sm:$0xf] %v2367
      %v2370 = vld [vmem:[%s2269 + $0x1] sm:$0xf]
      %v2371 = vld [vmem:[%s2269 + $0x9] sm:$0xf]
      %v2372 = vld [vmem:[%s2269 + $0x11] sm:$0xf]
      %v2373 = vld [vmem:[%s2269 + $0x19] sm:$0xf]
      %2378 = vst [vmem:[#allocation1] ss:$2 sm:$0xff] %v2370
      %s2379 = scalar_lea.vmem [#allocation1], 1
      %2380 = vst [vmem:[%s2379] ss:$2 sm:$0xff] %v2371
      %s2381 = scalar_lea.vmem [#allocation1], 16
      %2382 = vst [vmem:[%s2381] ss:$2 sm:$0xff] %v2372
      %s2383 = scalar_lea.vmem [#allocation1], 17
      %2384 = vst [vmem:[%s2383] ss:$2 sm:$0xff] %v2373
      %v2385 = vld.sshfl [vmem:[#allocation1] sm:$0xff pattern:$0x75316420]
      %v2386 = vld.sshfl [vmem:[#allocation1 + $0x10] sm:$0xff pattern:$0x75316420]
      %v2389 = vpack.c.bf16 %v2385, %v2385
      %v2390 = vpack.c.bf16 %v2386, %v2386
      %2391 = vst [vmem:[#allocation8 + $0xc] sm:$0xf] %v2389
      %2392 = vst [vmem:[#allocation8 + $0x1c] sm:$0xf] %v2390
      %v2393 = vld [vmem:[#allocation8] sm:$0xff]
      %v2394 = vld [vmem:[#allocation8 + $0x8] sm:$0xff]
      %v2395 = vld [vmem:[#allocation8 + $0x10] sm:$0xff]
      %v2396 = vld [vmem:[#allocation8 + $0x18] sm:$0xff]
      %v2397 = vld [vmem:[%s5] sm:$0xf]
      %v2398 = vld [vmem:[%s5 + $0x4] sm:$0xf]
      %v2399 = vld [vmem:[%s5 + $0x8] sm:$0xf]
      %v2400 = vld [vmem:[%s5 + $0xc] sm:$0xf]
      %v2401 = vld [vmem:[%s5 + $0x10] sm:$0xf]
      %v2402 = vld [vmem:[%s5 + $0x14] sm:$0xf]
      %v2403 = vld [vmem:[%s5 + $0x18] sm:$0xf]
      %v2404 = vld [vmem:[%s5 + $0x1c] sm:$0xf]
      %v2405 = vld [vmem:[%s5 + $0x20] sm:$0xf]
      %v2406 = vld [vmem:[%s5 + $0x24] sm:$0xf]
      %v2407 = vld [vmem:[%s5 + $0x28] sm:$0xf]
      %v2408 = vld [vmem:[%s5 + $0x2c] sm:$0xf]
      %v2409 = vld [vmem:[%s5 + $0x30] sm:$0xf]
      %v2410 = vld [vmem:[%s5 + $0x34] sm:$0xf]
      %v2411 = vld [vmem:[%s5 + $0x38] sm:$0xf]
      %v2412 = vld [vmem:[%s5 + $0x3c] sm:$0xf]
      %v2413 = vld [vmem:[%s5 + $0x40] sm:$0xf]
      %v2414 = vld [vmem:[%s5 + $0x44] sm:$0xf]
      %v2415 = vld [vmem:[%s5 + $0x48] sm:$0xf]
      %v2416 = vld [vmem:[%s5 + $0x4c] sm:$0xf]
      %v2417 = vld [vmem:[%s5 + $0x50] sm:$0xf]
      %v2418 = vld [vmem:[%s5 + $0x54] sm:$0xf]
      %v2419 = vld [vmem:[%s5 + $0x58] sm:$0xf]
      %v2420 = vld [vmem:[%s5 + $0x5c] sm:$0xf]
      %v2421 = vld [vmem:[%s5 + $0x60] sm:$0xf]
      %v2422 = vld [vmem:[%s5 + $0x64] sm:$0xf]
      %v2423 = vld [vmem:[%s5 + $0x68] sm:$0xf]
      %v2424 = vld [vmem:[%s5 + $0x6c] sm:$0xf]
      %v2425 = vld [vmem:[%s5 + $0x70] sm:$0xf]
      %v2426 = vld [vmem:[%s5 + $0x74] sm:$0xf]
      %v2427 = vld [vmem:[%s5 + $0x78] sm:$0xf]
      %v2428 = vld [vmem:[%s5 + $0x7c] sm:$0xf]
      %v2429 = vld [vmem:[%s5 + $0x80] sm:$0xf]
      %v2430 = vld [vmem:[%s5 + $0x84] sm:$0xf]
      %v2431 = vld [vmem:[%s5 + $0x88] sm:$0xf]
      %v2432 = vld [vmem:[%s5 + $0x8c] sm:$0xf]
      %v2433 = vld [vmem:[%s5 + $0x90] sm:$0xf]
      %v2434 = vld [vmem:[%s5 + $0x94] sm:$0xf]
      %v2435 = vld [vmem:[%s5 + $0x98] sm:$0xf]
      %v2436 = vld [vmem:[%s5 + $0x9c] sm:$0xf]
      %v2437 = vld [vmem:[%s5 + $0xa0] sm:$0xf]
      %v2438 = vld [vmem:[%s5 + $0xa4] sm:$0xf]
      %v2439 = vld [vmem:[%s5 + $0xa8] sm:$0xf]
      %v2440 = vld [vmem:[%s5 + $0xac] sm:$0xf]
      %v2441 = vld [vmem:[%s5 + $0xb0] sm:$0xf]
      %v2442 = vld [vmem:[%s5 + $0xb4] sm:$0xf]
      %v2443 = vld [vmem:[%s5 + $0xb8] sm:$0xf]
      %v2444 = vld [vmem:[%s5 + $0xbc] sm:$0xf]
      %v2445 = vld [vmem:[%s5 + $0xc0] sm:$0xf]
      %v2446 = vld [vmem:[%s5 + $0xc4] sm:$0xf]
      %v2447 = vld [vmem:[%s5 + $0xc8] sm:$0xf]
      %v2448 = vld [vmem:[%s5 + $0xcc] sm:$0xf]
      %v2449 = vld [vmem:[%s5 + $0xd0] sm:$0xf]
      %v2450 = vld [vmem:[%s5 + $0xd4] sm:$0xf]
      %v2451 = vld [vmem:[%s5 + $0xd8] sm:$0xf]
      %v2452 = vld [vmem:[%s5 + $0xdc] sm:$0xf]
      %v2453 = vld [vmem:[%s5 + $0xe0] sm:$0xf]
      %v2454 = vld [vmem:[%s5 + $0xe4] sm:$0xf]
      %v2455 = vld [vmem:[%s5 + $0xe8] sm:$0xf]
      %v2456 = vld [vmem:[%s5 + $0xec] sm:$0xf]
      %v2457 = vld [vmem:[%s5 + $0xf0] sm:$0xf]
      %v2458 = vld [vmem:[%s5 + $0xf4] sm:$0xf]
      %v2459 = vld [vmem:[%s5 + $0xf8] sm:$0xf]
      %v2460 = vld [vmem:[%s5 + $0xfc] sm:$0xf]
      %v2461 = vld [vmem:[%s6] sm:$0x1]
      %v2463 = vperm.slane %v2461, 0
      %v2469 = vunpack.c.l.b16 %v2393
      %v2470 = vunpack.c.h.b16 %v2393
      %v2471 = vunpack.c.l.b16 %v2394
      %v2472 = vunpack.c.h.b16 %v2394
      %v2473 = vunpack.c.l.b16 %v2395
      %v2474 = vunpack.c.h.b16 %v2395
      %v2475 = vunpack.c.l.b16 %v2396
      %v2476 = vunpack.c.h.b16 %v2396
      %v2477 = vpack.c.b16 %v2473, %v2469
      %v2478 = vpack.c.b16 %v2474, %v2470
      %v2479 = vpack.c.b16 %v2475, %v2471
      %v2480 = vpack.c.b16 %v2476, %v2472
      %v2549 = vunpack.c.l.b16 %v2397
      %v2550 = vunpack.c.l.b16 %v2398
      %v2551 = vunpack.c.l.b16 %v2399
      %v2552 = vunpack.c.l.b16 %v2400
      %v2553 = vunpack.c.l.b16 %v2401
      %v2554 = vunpack.c.l.b16 %v2402
      %v2555 = vunpack.c.l.b16 %v2403
      %v2556 = vunpack.c.l.b16 %v2404
      %v2557 = vunpack.c.l.b16 %v2405
      %v2558 = vunpack.c.l.b16 %v2406
      %v2559 = vunpack.c.l.b16 %v2407
      %v2560 = vunpack.c.l.b16 %v2408
      %v2561 = vunpack.c.l.b16 %v2409
      %v2562 = vunpack.c.l.b16 %v2410
      %v2563 = vunpack.c.l.b16 %v2411
      %v2564 = vunpack.c.l.b16 %v2412
      %v2565 = vunpack.c.l.b16 %v2413
      %v2566 = vunpack.c.l.b16 %v2414
      %v2567 = vunpack.c.l.b16 %v2415
      %v2568 = vunpack.c.l.b16 %v2416
      %v2569 = vunpack.c.l.b16 %v2417
      %v2570 = vunpack.c.l.b16 %v2418
      %v2571 = vunpack.c.l.b16 %v2419
      %v2572 = vunpack.c.l.b16 %v2420
      %v2573 = vunpack.c.l.b16 %v2421
      %v2574 = vunpack.c.l.b16 %v2422
      %v2575 = vunpack.c.l.b16 %v2423
      %v2576 = vunpack.c.l.b16 %v2424
      %v2577 = vunpack.c.l.b16 %v2425
      %v2578 = vunpack.c.l.b16 %v2426
      %v2579 = vunpack.c.l.b16 %v2427
      %v2580 = vunpack.c.l.b16 %v2428
      %v2581 = vunpack.c.l.b16 %v2429
      %v2582 = vunpack.c.l.b16 %v2430
      %v2583 = vunpack.c.l.b16 %v2431
      %v2584 = vunpack.c.l.b16 %v2432
      %v2585 = vunpack.c.l.b16 %v2433
      %v2586 = vunpack.c.l.b16 %v2434
      %v2587 = vunpack.c.l.b16 %v2435
      %v2588 = vunpack.c.l.b16 %v2436
      %v2589 = vunpack.c.l.b16 %v2437
      %v2590 = vunpack.c.l.b16 %v2438
      %v2591 = vunpack.c.l.b16 %v2439
      %v2592 = vunpack.c.l.b16 %v2440
      %v2593 = vunpack.c.l.b16 %v2441
      %v2594 = vunpack.c.l.b16 %v2442
      %v2595 = vunpack.c.l.b16 %v2443
      %v2596 = vunpack.c.l.b16 %v2444
      %v2597 = vunpack.c.l.b16 %v2445
      %v2598 = vunpack.c.l.b16 %v2446
      %v2599 = vunpack.c.l.b16 %v2447
      %v2600 = vunpack.c.l.b16 %v2448
      %v2601 = vunpack.c.l.b16 %v2449
      %v2602 = vunpack.c.l.b16 %v2450
      %v2603 = vunpack.c.l.b16 %v2451
      %v2604 = vunpack.c.l.b16 %v2452
      %v2605 = vunpack.c.l.b16 %v2453
      %v2606 = vunpack.c.l.b16 %v2454
      %v2607 = vunpack.c.l.b16 %v2455
      %v2608 = vunpack.c.l.b16 %v2456
      %v2609 = vunpack.c.l.b16 %v2457
      %v2610 = vunpack.c.l.b16 %v2458
      %v2611 = vunpack.c.l.b16 %v2459
      %v2612 = vunpack.c.l.b16 %v2460
      %v2613 = vpack.c.b16 %v2550, %v2549
      %v2614 = vpack.c.b16 %v2552, %v2551
      %v2615 = vpack.c.b16 %v2554, %v2553
      %v2616 = vpack.c.b16 %v2556, %v2555
      %v2617 = vpack.c.b16 %v2558, %v2557
      %v2618 = vpack.c.b16 %v2560, %v2559
      %v2619 = vpack.c.b16 %v2562, %v2561
      %v2620 = vpack.c.b16 %v2564, %v2563
      %v2621 = vpack.c.b16 %v2566, %v2565
      %v2622 = vpack.c.b16 %v2568, %v2567
      %v2623 = vpack.c.b16 %v2570, %v2569
      %v2624 = vpack.c.b16 %v2572, %v2571
      %v2625 = vpack.c.b16 %v2574, %v2573
      %v2626 = vpack.c.b16 %v2576, %v2575
      %v2627 = vpack.c.b16 %v2578, %v2577
      %v2628 = vpack.c.b16 %v2580, %v2579
      %v2629 = vpack.c.b16 %v2582, %v2581
      %v2630 = vpack.c.b16 %v2584, %v2583
      %v2631 = vpack.c.b16 %v2586, %v2585
      %v2632 = vpack.c.b16 %v2588, %v2587
      %v2633 = vpack.c.b16 %v2590, %v2589
      %v2634 = vpack.c.b16 %v2592, %v2591
      %v2635 = vpack.c.b16 %v2594, %v2593
      %v2636 = vpack.c.b16 %v2596, %v2595
      %v2637 = vpack.c.b16 %v2598, %v2597
      %v2638 = vpack.c.b16 %v2600, %v2599
      %v2639 = vpack.c.b16 %v2602, %v2601
      %v2640 = vpack.c.b16 %v2604, %v2603
      %v2641 = vpack.c.b16 %v2606, %v2605
      %v2642 = vpack.c.b16 %v2608, %v2607
      %v2643 = vpack.c.b16 %v2610, %v2609
      %v2644 = vpack.c.b16 %v2612, %v2611
      %2677 = vmatpush.bf16.msra.mxu0 %v2620
      %2678 = vmatpush.bf16.msra.mxu0 %v2619
      %2679 = vmatpush.bf16.msra.mxu0 %v2618
      %2680 = vmatpush.bf16.msra.mxu0 %v2617
      %2681 = vmatpush.bf16.msra.mxu0 %v2616
      %2682 = vmatpush.bf16.msra.mxu0 %v2615
      %2683 = vmatpush.bf16.msra.mxu0 %v2614
      %2684 = vmatpush.bf16.msra.mxu0 %v2613
      %2685 = vmatmul.bf16.gmra.mxu0 %v2477
      %v2686 = vpop.f32.mrf.mxu0
      %v2687 = vadd.f32 %v2463, %v2686
      %v2688 = vpop.f32.mrf.mxu0
      %v2689 = vadd.f32 %v2463, %v2688
      %2690 = vdwg.mxu0
      %2691 = vmatpush.bf16.msra.mxu0 %v2628
      %2692 = vmatpush.bf16.msra.mxu0 %v2627
      %2693 = vmatpush.bf16.msra.mxu0 %v2626
      %2694 = vmatpush.bf16.msra.mxu0 %v2625
      %2695 = vmatpush.bf16.msra.mxu0 %v2624
      %2696 = vmatpush.bf16.msra.mxu0 %v2623
      %2697 = vmatpush.bf16.msra.mxu0 %v2622
      %2698 = vmatpush.bf16.msra.mxu0 %v2621
      %2699 = vmatmul.bf16.gmra.mxu0 %v2478
      %v2700 = vpop.f32.mrf.mxu0
      %v2701 = vadd.f32 %v2687, %v2700
      %v2702 = vpop.f32.mrf.mxu0
      %v2703 = vadd.f32 %v2689, %v2702
      %2704 = vdwg.mxu0
      %2705 = vmatpush.bf16.msra.mxu0 %v2636
      %2706 = vmatpush.bf16.msra.mxu0 %v2635
      %2707 = vmatpush.bf16.msra.mxu0 %v2634
      %2708 = vmatpush.bf16.msra.mxu0 %v2633
      %2709 = vmatpush.bf16.msra.mxu0 %v2632
      %2710 = vmatpush.bf16.msra.mxu0 %v2631
      %2711 = vmatpush.bf16.msra.mxu0 %v2630
      %2712 = vmatpush.bf16.msra.mxu0 %v2629
      %2713 = vmatmul.bf16.gmra.mxu0 %v2479
      %v2714 = vpop.f32.mrf.mxu0
      %v2715 = vadd.f32 %v2701, %v2714
      %v2716 = vpop.f32.mrf.mxu0
      %v2717 = vadd.f32 %v2703, %v2716
      %2718 = vdwg.mxu0
      %2719 = vmatpush.bf16.msra.mxu0 %v2644
      %2720 = vmatpush.bf16.msra.mxu0 %v2643
      %2721 = vmatpush.bf16.msra.mxu0 %v2642
      %2722 = vmatpush.bf16.msra.mxu0 %v2641
      %2723 = vmatpush.bf16.msra.mxu0 %v2640
      %2724 = vmatpush.bf16.msra.mxu0 %v2639
      %2725 = vmatpush.bf16.msra.mxu0 %v2638
      %2726 = vmatpush.bf16.msra.mxu0 %v2637
      %2727 = vmatmul.bf16.gmra.mxu0 %v2480
      %v2728 = vpop.f32.mrf.mxu0
      %v2729 = vadd.f32 %v2715, %v2728
      %v2730 = vpop.f32.mrf.mxu0
      %v2731 = vadd.f32 %v2717, %v2730
      %2732 = vdwg.mxu0
      %vm2733 = vcmp.ge.f32.partialorder %v2729, 0.0
      %vm2734 = vcmp.ge.f32.partialorder %v2731, 0.0
      %v2735 = vmul.f32 %v2729, 0.2
      %v2736 = vmul.f32 %v2731, 0.2
      %v2737 = vsel %vm2733, %v2729, %v2735
      %v2738 = vsel %vm2734, %v2731, %v2736
      %2739 = vst [vmem:[#allocation10] sm:$0x77] 0.0
      %2740 = vst [vmem:[#allocation10 + $0x8] sm:$0x77] 0.0
      %2741 = vst [vmem:[#allocation10 + $0x10] sm:$0x77] 0.0
      %2742 = vst.msk [vmem:[#allocation9] sm:$0xff] %vm1535, %v2737
      %2743 = vst.msk [vmem:[#allocation9 + $0x8] sm:$0xff] %vm1535, %v2738
      %v2744 = vld [vmem:[#allocation9] ss:$2 sm:$0xff]
      %v2746 = vrot.slane %v2744, 4
      %s2747 = scalar_lea.vmem [#allocation9], 1
      %v2748 = vld [vmem:[%s2747] ss:$2 sm:$0xff]
      %v2750 = vrot.slane %v2748, 4
      %2751 = vrot.lane.b32.xlu0 %v2744, 64
      %v2752 = vpop.permute.xlu0 %2751
      %2753 = vrot.lane.b32.xlu0 %v2746, 64
      %v2754 = vpop.permute.xlu0 %2753
      %vm2757 = vcmask 1041920
      %2758 = vst.msk [vmem:[#allocation10 + $0x4] sm:$0x3] %vm2757, %v2752
      %2759 = vst.msk [vmem:[#allocation10 + $0xc] sm:$0x3] %vm2757, %v2754
      %v2760 = vrot.slane %v2744, 6
      %v2761 = vrot.slane %v2760, 4
      %v2762 = vrot.slane %v2746, 6
      %v2763 = vrot.slane %v2762, 4
      %2764 = vrot.lane.b32.xlu0 %v2761, 64
      %v2765 = vpop.permute.xlu0 %2764
      %2766 = vrot.lane.b32.xlu0 %v2763, 64
      %v2767 = vpop.permute.xlu0 %2766
      %s2770 = scalar_lea.vmem [#allocation10], 8
      %2771 = vst.msk [vmem:[%s2770] sm:$0x3] %vm2757, %v2765
      %2772 = vst.msk [vmem:[%s2770 + $0x8] sm:$0x3] %vm2757, %v2767
      %v2773 = vrot.slane %v2748, 7
      %v2774 = vrot.slane %v2750, 7
      %vm2777 = vcmask 518145
      %2778 = vst.msk [vmem:[#allocation10 + $0x4] sm:$0x6] %vm2777, %v2773
      %2779 = vst.msk [vmem:[#allocation10 + $0xc] sm:$0x6] %vm2777, %v2774
      %v2780 = vrot.slane %v2748, 5
      %v2781 = vrot.slane %v2780, 4
      %v2782 = vrot.slane %v2750, 5
      %v2783 = vrot.slane %v2782, 4
      %2786 = vst.msk [vmem:[%s2770] sm:$0x6] %vm2777, %v2781
      %2787 = vst.msk [vmem:[%s2770 + $0x8] sm:$0x6] %vm2777, %v2783
      %v2788 = vld [vmem:[#allocation10] sm:$0x33]
      %v2789 = vld [vmem:[#allocation10 + $0x8] sm:$0x33]
      %v2792 = vrot.slane %v2788, 2
      %v2793 = vrot.slane %v2789, 2
      %vm2794 = vcmask 1041408
      %v2795 = vsel %vm2794, %v2788, %v2792
      %v2796 = vsel %vm2794, %v2789, %v2793
      %2797 = vst [vmem:[#allocation1] ss:$4 sm:$0xff] %v2795
      %s2798 = scalar_lea.vmem [#allocation1], 1
      %2799 = vst [vmem:[%s2798] ss:$4 sm:$0xff] %v2796
      %v2800 = vld.sshfl [vmem:[#allocation1] sm:$0xff pattern:$0x73625140]
      %v2801 = vld.sshfl [vmem:[#allocation1 + $0x8] sm:$0xff pattern:$0x73625140]
      %v2804 = vpack.c.bf16 %v2801, %v2800
      %v2806 = vrot.slane %v2804, 2
      %v2809 = vsel %vm2794, %v2804, %v2806
      %2811 = vst [vmem:[#allocation11] sm:$0xf] %v2809
      %v2812 = vld [vmem:[#allocation10] sm:$0x66]
      %v2813 = vld [vmem:[#allocation10 + $0x8] sm:$0x66]
      %v2816 = vrot.slane %v2812, 2
      %v2817 = vrot.slane %v2813, 2
      %v2818 = vsel %vm2794, %v2812, %v2816
      %vm2819 = vcmask 1043458
      %v2820 = vsel %vm2819, %v2812, %v2816
      %v2821 = vrot.slane %v2820, 2
      %v2822 = vsel %vm2794, %v2813, %v2817
      %v2823 = vsel %vm2819, %v2813, %v2817
      %v2824 = vrot.slane %v2823, 2
      %vm2825 = vcmask 1040384
      %vm2826 = vcmask 1042434
      %vm2827 = vmor %vm2825, %vm2826
      %vm2828 = vcmask 1044484
      %vm2829 = vmor %vm2827, %vm2828
      %vm2830 = vcmask 1046534
      %vm2831 = vmor %vm2829, %vm2830
      %v2832 = vrot.slane %v2818, 7
      %v2833 = vrot.slane %v2832, 2
      %v2834 = vrot.slane %v2821, 7
      %v2835 = vsel %vm2831, %v2833, %v2834
      %v2836 = vrot.slane %v2822, 7
      %v2837 = vrot.slane %v2836, 2
      %v2838 = vrot.slane %v2824, 7
      %v2839 = vsel %vm2831, %v2837, %v2838
      %2840 = vst [vmem:[#allocation1] ss:$4 sm:$0xff] %v2835
      %s2841 = scalar_lea.vmem [#allocation1], 1
      %2842 = vst [vmem:[%s2841] ss:$4 sm:$0xff] %v2839
      %v2843 = vld.sshfl [vmem:[#allocation1] sm:$0xff pattern:$0x73625140]
      %v2844 = vld.sshfl [vmem:[#allocation1 + $0x8] sm:$0xff pattern:$0x73625140]
      %v2847 = vpack.c.bf16 %v2844, %v2843
      %v2849 = vrot.slane %v2847, 2
      %v2852 = vsel %vm2794, %v2847, %v2849
      %2854 = vst [vmem:[#allocation11 + $0x4] sm:$0xf] %v2852
      %v2855 = vld [vmem:[%s2770] sm:$0x33]
      %v2856 = vld [vmem:[%s2770 + $0x8] sm:$0x33]
      %v2859 = vrot.slane %v2855, 2
      %v2860 = vrot.slane %v2856, 2
      %v2861 = vsel %vm2794, %v2855, %v2859
      %v2862 = vsel %vm2794, %v2856, %v2860
      %2863 = vst [vmem:[#allocation1] ss:$4 sm:$0xff] %v2861
      %s2864 = scalar_lea.vmem [#allocation1], 1
      %2865 = vst [vmem:[%s2864] ss:$4 sm:$0xff] %v2862
      %v2866 = vld.sshfl [vmem:[#allocation1] sm:$0xff pattern:$0x73625140]
      %v2867 = vld.sshfl [vmem:[#allocation1 + $0x8] sm:$0xff pattern:$0x73625140]
      %v2870 = vpack.c.bf16 %v2867, %v2866
      %v2872 = vrot.slane %v2870, 2
      %v2875 = vsel %vm2794, %v2870, %v2872
      %2877 = vst [vmem:[#allocation11 + $0x8] sm:$0xf] %v2875
      %v2878 = vld [vmem:[%s2770] sm:$0x66]
      %v2879 = vld [vmem:[%s2770 + $0x8] sm:$0x66]
      %v2882 = vrot.slane %v2878, 2
      %v2883 = vrot.slane %v2879, 2
      %v2884 = vsel %vm2794, %v2878, %v2882
      %v2885 = vsel %vm2819, %v2878, %v2882
      %v2886 = vrot.slane %v2885, 2
      %v2887 = vsel %vm2794, %v2879, %v2883
      %v2888 = vsel %vm2819, %v2879, %v2883
      %v2889 = vrot.slane %v2888, 2
      %v2890 = vrot.slane %v2884, 7
      %v2891 = vrot.slane %v2890, 2
      %v2892 = vrot.slane %v2886, 7
      %v2893 = vsel %vm2831, %v2891, %v2892
      %v2894 = vrot.slane %v2887, 7
      %v2895 = vrot.slane %v2894, 2
      %v2896 = vrot.slane %v2889, 7
      %v2897 = vsel %vm2831, %v2895, %v2896
      %2898 = vst [vmem:[#allocation1] ss:$4 sm:$0xff] %v2893
      %s2899 = scalar_lea.vmem [#allocation1], 1
      %2900 = vst [vmem:[%s2899] ss:$4 sm:$0xff] %v2897
      %v2901 = vld.sshfl [vmem:[#allocation1] sm:$0xff pattern:$0x73625140]
      %v2902 = vld.sshfl [vmem:[#allocation1 + $0x8] sm:$0xff pattern:$0x73625140]
      %v2905 = vpack.c.bf16 %v2902, %v2901
      %v2907 = vrot.slane %v2905, 2
      %v2910 = vsel %vm2794, %v2905, %v2907
      %2912 = vst [vmem:[#allocation11 + $0xc] sm:$0xf] %v2910
      %v2913 = vld [vmem:[#allocation11] sm:$0xff]
      %v2914 = vld [vmem:[#allocation11 + $0x8] sm:$0xff]
      %v2915 = vld [vmem:[%s7] sm:$0xf]
      %v2916 = vld [vmem:[%s7 + $0x4] sm:$0xf]
      %v2917 = vld [vmem:[%s7 + $0x8] sm:$0xf]
      %v2918 = vld [vmem:[%s7 + $0xc] sm:$0xf]
      %v2919 = vld [vmem:[%s7 + $0x10] sm:$0xf]
      %v2920 = vld [vmem:[%s7 + $0x14] sm:$0xf]
      %v2921 = vld [vmem:[%s7 + $0x18] sm:$0xf]
      %v2922 = vld [vmem:[%s7 + $0x1c] sm:$0xf]
      %v2923 = vld [vmem:[%s7 + $0x20] sm:$0xf]
      %v2924 = vld [vmem:[%s7 + $0x24] sm:$0xf]
      %v2925 = vld [vmem:[%s7 + $0x28] sm:$0xf]
      %v2926 = vld [vmem:[%s7 + $0x2c] sm:$0xf]
      %v2927 = vld [vmem:[%s7 + $0x30] sm:$0xf]
      %v2928 = vld [vmem:[%s7 + $0x34] sm:$0xf]
      %v2929 = vld [vmem:[%s7 + $0x38] sm:$0xf]
      %v2930 = vld [vmem:[%s7 + $0x3c] sm:$0xf]
      %v2931 = vld [vmem:[%s7 + $0x40] sm:$0xf]
      %v2932 = vld [vmem:[%s7 + $0x44] sm:$0xf]
      %v2933 = vld [vmem:[%s7 + $0x48] sm:$0xf]
      %v2934 = vld [vmem:[%s7 + $0x4c] sm:$0xf]
      %v2935 = vld [vmem:[%s7 + $0x50] sm:$0xf]
      %v2936 = vld [vmem:[%s7 + $0x54] sm:$0xf]
      %v2937 = vld [vmem:[%s7 + $0x58] sm:$0xf]
      %v2938 = vld [vmem:[%s7 + $0x5c] sm:$0xf]
      %v2939 = vld [vmem:[%s7 + $0x60] sm:$0xf]
      %v2940 = vld [vmem:[%s7 + $0x64] sm:$0xf]
      %v2941 = vld [vmem:[%s7 + $0x68] sm:$0xf]
      %v2942 = vld [vmem:[%s7 + $0x6c] sm:$0xf]
      %v2943 = vld [vmem:[%s7 + $0x70] sm:$0xf]
      %v2944 = vld [vmem:[%s7 + $0x74] sm:$0xf]
      %v2945 = vld [vmem:[%s7 + $0x78] sm:$0xf]
      %v2946 = vld [vmem:[%s7 + $0x7c] sm:$0xf]
      %v2947 = vld [vmem:[%s7 + $0x80] sm:$0xf]
      %v2948 = vld [vmem:[%s7 + $0x84] sm:$0xf]
      %v2949 = vld [vmem:[%s7 + $0x88] sm:$0xf]
      %v2950 = vld [vmem:[%s7 + $0x8c] sm:$0xf]
      %v2951 = vld [vmem:[%s7 + $0x90] sm:$0xf]
      %v2952 = vld [vmem:[%s7 + $0x94] sm:$0xf]
      %v2953 = vld [vmem:[%s7 + $0x98] sm:$0xf]
      %v2954 = vld [vmem:[%s7 + $0x9c] sm:$0xf]
      %v2955 = vld [vmem:[%s7 + $0xa0] sm:$0xf]
      %v2956 = vld [vmem:[%s7 + $0xa4] sm:$0xf]
      %v2957 = vld [vmem:[%s7 + $0xa8] sm:$0xf]
      %v2958 = vld [vmem:[%s7 + $0xac] sm:$0xf]
      %v2959 = vld [vmem:[%s7 + $0xb0] sm:$0xf]
      %v2960 = vld [vmem:[%s7 + $0xb4] sm:$0xf]
      %v2961 = vld [vmem:[%s7 + $0xb8] sm:$0xf]
      %v2962 = vld [vmem:[%s7 + $0xbc] sm:$0xf]
      %v2963 = vld [vmem:[%s7 + $0xc0] sm:$0xf]
      %v2964 = vld [vmem:[%s7 + $0xc4] sm:$0xf]
      %v2965 = vld [vmem:[%s7 + $0xc8] sm:$0xf]
      %v2966 = vld [vmem:[%s7 + $0xcc] sm:$0xf]
      %v2967 = vld [vmem:[%s7 + $0xd0] sm:$0xf]
      %v2968 = vld [vmem:[%s7 + $0xd4] sm:$0xf]
      %v2969 = vld [vmem:[%s7 + $0xd8] sm:$0xf]
      %v2970 = vld [vmem:[%s7 + $0xdc] sm:$0xf]
      %v2971 = vld [vmem:[%s7 + $0xe0] sm:$0xf]
      %v2972 = vld [vmem:[%s7 + $0xe4] sm:$0xf]
      %v2973 = vld [vmem:[%s7 + $0xe8] sm:$0xf]
      %v2974 = vld [vmem:[%s7 + $0xec] sm:$0xf]
      %v2975 = vld [vmem:[%s7 + $0xf0] sm:$0xf]
      %v2976 = vld [vmem:[%s7 + $0xf4] sm:$0xf]
      %v2977 = vld [vmem:[%s7 + $0xf8] sm:$0xf]
      %v2978 = vld [vmem:[%s7 + $0xfc] sm:$0xf]
      %v2979 = vld [vmem:[%s7 + $0x100] sm:$0xf]
      %v2980 = vld [vmem:[%s7 + $0x104] sm:$0xf]
      %v2981 = vld [vmem:[%s7 + $0x108] sm:$0xf]
      %v2982 = vld [vmem:[%s7 + $0x10c] sm:$0xf]
      %v2983 = vld [vmem:[%s7 + $0x110] sm:$0xf]
      %v2984 = vld [vmem:[%s7 + $0x114] sm:$0xf]
      %v2985 = vld [vmem:[%s7 + $0x118] sm:$0xf]
      %v2986 = vld [vmem:[%s7 + $0x11c] sm:$0xf]
      %v2987 = vld [vmem:[%s7 + $0x120] sm:$0xf]
      %v2988 = vld [vmem:[%s7 + $0x124] sm:$0xf]
      %v2989 = vld [vmem:[%s7 + $0x128] sm:$0xf]
      %v2990 = vld [vmem:[%s7 + $0x12c] sm:$0xf]
      %v2991 = vld [vmem:[%s7 + $0x130] sm:$0xf]
      %v2992 = vld [vmem:[%s7 + $0x134] sm:$0xf]
      %v2993 = vld [vmem:[%s7 + $0x138] sm:$0xf]
      %v2994 = vld [vmem:[%s7 + $0x13c] sm:$0xf]
      %v2995 = vld [vmem:[%s7 + $0x140] sm:$0xf]
      %v2996 = vld [vmem:[%s7 + $0x144] sm:$0xf]
      %v2997 = vld [vmem:[%s7 + $0x148] sm:$0xf]
      %v2998 = vld [vmem:[%s7 + $0x14c] sm:$0xf]
      %v2999 = vld [vmem:[%s7 + $0x150] sm:$0xf]
      %v3000 = vld [vmem:[%s7 + $0x154] sm:$0xf]
      %v3001 = vld [vmem:[%s7 + $0x158] sm:$0xf]
      %v3002 = vld [vmem:[%s7 + $0x15c] sm:$0xf]
      %v3003 = vld [vmem:[%s7 + $0x160] sm:$0xf]
      %v3004 = vld [vmem:[%s7 + $0x164] sm:$0xf]
      %v3005 = vld [vmem:[%s7 + $0x168] sm:$0xf]
      %v3006 = vld [vmem:[%s7 + $0x16c] sm:$0xf]
      %v3007 = vld [vmem:[%s7 + $0x170] sm:$0xf]
      %v3008 = vld [vmem:[%s7 + $0x174] sm:$0xf]
      %v3009 = vld [vmem:[%s7 + $0x178] sm:$0xf]
      %v3010 = vld [vmem:[%s7 + $0x17c] sm:$0xf]
      %v3011 = vld [vmem:[%s7 + $0x180] sm:$0xf]
      %v3012 = vld [vmem:[%s7 + $0x184] sm:$0xf]
      %v3013 = vld [vmem:[%s7 + $0x188] sm:$0xf]
      %v3014 = vld [vmem:[%s7 + $0x18c] sm:$0xf]
      %v3015 = vld [vmem:[%s7 + $0x190] sm:$0xf]
      %v3016 = vld [vmem:[%s7 + $0x194] sm:$0xf]
      %v3017 = vld [vmem:[%s7 + $0x198] sm:$0xf]
      %v3018 = vld [vmem:[%s7 + $0x19c] sm:$0xf]
      %v3019 = vld [vmem:[%s7 + $0x1a0] sm:$0xf]
      %v3020 = vld [vmem:[%s7 + $0x1a4] sm:$0xf]
      %v3021 = vld [vmem:[%s7 + $0x1a8] sm:$0xf]
      %v3022 = vld [vmem:[%s7 + $0x1ac] sm:$0xf]
      %v3023 = vld [vmem:[%s7 + $0x1b0] sm:$0xf]
      %v3024 = vld [vmem:[%s7 + $0x1b4] sm:$0xf]
      %v3025 = vld [vmem:[%s7 + $0x1b8] sm:$0xf]
      %v3026 = vld [vmem:[%s7 + $0x1bc] sm:$0xf]
      %v3027 = vld [vmem:[%s7 + $0x1c0] sm:$0xf]
      %v3028 = vld [vmem:[%s7 + $0x1c4] sm:$0xf]
      %v3029 = vld [vmem:[%s7 + $0x1c8] sm:$0xf]
      %v3030 = vld [vmem:[%s7 + $0x1cc] sm:$0xf]
      %v3031 = vld [vmem:[%s7 + $0x1d0] sm:$0xf]
      %v3032 = vld [vmem:[%s7 + $0x1d4] sm:$0xf]
      %v3033 = vld [vmem:[%s7 + $0x1d8] sm:$0xf]
      %v3034 = vld [vmem:[%s7 + $0x1dc] sm:$0xf]
      %v3035 = vld [vmem:[%s7 + $0x1e0] sm:$0xf]
      %v3036 = vld [vmem:[%s7 + $0x1e4] sm:$0xf]
      %v3037 = vld [vmem:[%s7 + $0x1e8] sm:$0xf]
      %v3038 = vld [vmem:[%s7 + $0x1ec] sm:$0xf]
      %v3039 = vld [vmem:[%s7 + $0x1f0] sm:$0xf]
      %v3040 = vld [vmem:[%s7 + $0x1f4] sm:$0xf]
      %v3041 = vld [vmem:[%s7 + $0x1f8] sm:$0xf]
      %v3042 = vld [vmem:[%s7 + $0x1fc] sm:$0xf]
      %v3043 = vld [vmem:[%s8] sm:$0x1]
      %v3045 = vperm.slane %v3043, 0
      %3048 = vst [vmem:[#allocation1] ss:$4 sm:$0xff] %v2913
      %s3050 = scalar_lea.vmem [#allocation1], 32
      %3051 = vst [vmem:[%s3050] ss:$4 sm:$0xff] %v2914
      %v3052 = vld.sshfl [vmem:[#allocation1] sm:$0xff pattern:$0x73625140]
      %v3053 = vld.sshfl [vmem:[#allocation1 + $0x8] sm:$0xff pattern:$0x73625140]
      %v3054 = vld.sshfl [vmem:[#allocation1 + $0x10] sm:$0xff pattern:$0x73625140]
      %v3055 = vld.sshfl [vmem:[#allocation1 + $0x18] sm:$0xff pattern:$0x73625140]
      %v3056 = vld.sshfl [vmem:[#allocation1 + $0x20] sm:$0xff pattern:$0x73625140]
      %v3057 = vld.sshfl [vmem:[#allocation1 + $0x28] sm:$0xff pattern:$0x73625140]
      %v3058 = vld.sshfl [vmem:[#allocation1 + $0x30] sm:$0xff pattern:$0x73625140]
      %v3059 = vld.sshfl [vmem:[#allocation1 + $0x38] sm:$0xff pattern:$0x73625140]
      %v3196 = vunpack.c.l.b16 %v2915
      %v3197 = vunpack.c.l.b16 %v2916
      %v3198 = vunpack.c.l.b16 %v2917
      %v3199 = vunpack.c.l.b16 %v2918
      %v3200 = vunpack.c.l.b16 %v2919
      %v3201 = vunpack.c.l.b16 %v2920
      %v3202 = vunpack.c.l.b16 %v2921
      %v3203 = vunpack.c.l.b16 %v2922
      %v3204 = vunpack.c.l.b16 %v2923
      %v3205 = vunpack.c.l.b16 %v2924
      %v3206 = vunpack.c.l.b16 %v2925
      %v3207 = vunpack.c.l.b16 %v2926
      %v3208 = vunpack.c.l.b16 %v2927
      %v3209 = vunpack.c.l.b16 %v2928
      %v3210 = vunpack.c.l.b16 %v2929
      %v3211 = vunpack.c.l.b16 %v2930
      %v3212 = vunpack.c.l.b16 %v2931
      %v3213 = vunpack.c.l.b16 %v2932
      %v3214 = vunpack.c.l.b16 %v2933
      %v3215 = vunpack.c.l.b16 %v2934
      %v3216 = vunpack.c.l.b16 %v2935
      %v3217 = vunpack.c.l.b16 %v2936
      %v3218 = vunpack.c.l.b16 %v2937
      %v3219 = vunpack.c.l.b16 %v2938
      %v3220 = vunpack.c.l.b16 %v2939
      %v3221 = vunpack.c.l.b16 %v2940
      %v3222 = vunpack.c.l.b16 %v2941
      %v3223 = vunpack.c.l.b16 %v2942
      %v3224 = vunpack.c.l.b16 %v2943
      %v3225 = vunpack.c.l.b16 %v2944
      %v3226 = vunpack.c.l.b16 %v2945
      %v3227 = vunpack.c.l.b16 %v2946
      %v3228 = vunpack.c.l.b16 %v2947
      %v3229 = vunpack.c.l.b16 %v2948
      %v3230 = vunpack.c.l.b16 %v2949
      %v3231 = vunpack.c.l.b16 %v2950
      %v3232 = vunpack.c.l.b16 %v2951
      %v3233 = vunpack.c.l.b16 %v2952
      %v3234 = vunpack.c.l.b16 %v2953
      %v3235 = vunpack.c.l.b16 %v2954
      %v3236 = vunpack.c.l.b16 %v2955
      %v3237 = vunpack.c.l.b16 %v2956
      %v3238 = vunpack.c.l.b16 %v2957
      %v3239 = vunpack.c.l.b16 %v2958
      %v3240 = vunpack.c.l.b16 %v2959
      %v3241 = vunpack.c.l.b16 %v2960
      %v3242 = vunpack.c.l.b16 %v2961
      %v3243 = vunpack.c.l.b16 %v2962
      %v3244 = vunpack.c.l.b16 %v2963
      %v3245 = vunpack.c.l.b16 %v2964
      %v3246 = vunpack.c.l.b16 %v2965
      %v3247 = vunpack.c.l.b16 %v2966
      %v3248 = vunpack.c.l.b16 %v2967
      %v3249 = vunpack.c.l.b16 %v2968
      %v3250 = vunpack.c.l.b16 %v2969
      %v3251 = vunpack.c.l.b16 %v2970
      %v3252 = vunpack.c.l.b16 %v2971
      %v3253 = vunpack.c.l.b16 %v2972
      %v3254 = vunpack.c.l.b16 %v2973
      %v3255 = vunpack.c.l.b16 %v2974
      %v3256 = vunpack.c.l.b16 %v2975
      %v3257 = vunpack.c.l.b16 %v2976
      %v3258 = vunpack.c.l.b16 %v2977
      %v3259 = vunpack.c.l.b16 %v2978
      %v3260 = vunpack.c.l.b16 %v2979
      %v3261 = vunpack.c.l.b16 %v2980
      %v3262 = vunpack.c.l.b16 %v2981
      %v3263 = vunpack.c.l.b16 %v2982
      %v3264 = vunpack.c.l.b16 %v2983
      %v3265 = vunpack.c.l.b16 %v2984
      %v3266 = vunpack.c.l.b16 %v2985
      %v3267 = vunpack.c.l.b16 %v2986
      %v3268 = vunpack.c.l.b16 %v2987
      %v3269 = vunpack.c.l.b16 %v2988
      %v3270 = vunpack.c.l.b16 %v2989
      %v3271 = vunpack.c.l.b16 %v2990
      %v3272 = vunpack.c.l.b16 %v2991
      %v3273 = vunpack.c.l.b16 %v2992
      %v3274 = vunpack.c.l.b16 %v2993
      %v3275 = vunpack.c.l.b16 %v2994
      %v3276 = vunpack.c.l.b16 %v2995
      %v3277 = vunpack.c.l.b16 %v2996
      %v3278 = vunpack.c.l.b16 %v2997
      %v3279 = vunpack.c.l.b16 %v2998
      %v3280 = vunpack.c.l.b16 %v2999
      %v3281 = vunpack.c.l.b16 %v3000
      %v3282 = vunpack.c.l.b16 %v3001
      %v3283 = vunpack.c.l.b16 %v3002
      %v3284 = vunpack.c.l.b16 %v3003
      %v3285 = vunpack.c.l.b16 %v3004
      %v3286 = vunpack.c.l.b16 %v3005
      %v3287 = vunpack.c.l.b16 %v3006
      %v3288 = vunpack.c.l.b16 %v3007
      %v3289 = vunpack.c.l.b16 %v3008
      %v3290 = vunpack.c.l.b16 %v3009
      %v3291 = vunpack.c.l.b16 %v3010
      %v3292 = vunpack.c.l.b16 %v3011
      %v3293 = vunpack.c.l.b16 %v3012
      %v3294 = vunpack.c.l.b16 %v3013
      %v3295 = vunpack.c.l.b16 %v3014
      %v3296 = vunpack.c.l.b16 %v3015
      %v3297 = vunpack.c.l.b16 %v3016
      %v3298 = vunpack.c.l.b16 %v3017
      %v3299 = vunpack.c.l.b16 %v3018
      %v3300 = vunpack.c.l.b16 %v3019
      %v3301 = vunpack.c.l.b16 %v3020
      %v3302 = vunpack.c.l.b16 %v3021
      %v3303 = vunpack.c.l.b16 %v3022
      %v3304 = vunpack.c.l.b16 %v3023
      %v3305 = vunpack.c.l.b16 %v3024
      %v3306 = vunpack.c.l.b16 %v3025
      %v3307 = vunpack.c.l.b16 %v3026
      %v3308 = vunpack.c.l.b16 %v3027
      %v3309 = vunpack.c.l.b16 %v3028
      %v3310 = vunpack.c.l.b16 %v3029
      %v3311 = vunpack.c.l.b16 %v3030
      %v3312 = vunpack.c.l.b16 %v3031
      %v3313 = vunpack.c.l.b16 %v3032
      %v3314 = vunpack.c.l.b16 %v3033
      %v3315 = vunpack.c.l.b16 %v3034
      %v3316 = vunpack.c.l.b16 %v3035
      %v3317 = vunpack.c.l.b16 %v3036
      %v3318 = vunpack.c.l.b16 %v3037
      %v3319 = vunpack.c.l.b16 %v3038
      %v3320 = vunpack.c.l.b16 %v3039
      %v3321 = vunpack.c.l.b16 %v3040
      %v3322 = vunpack.c.l.b16 %v3041
      %v3323 = vunpack.c.l.b16 %v3042
      %v3324 = vpack.c.b16 %v3197, %v3196
      %v3325 = vpack.c.b16 %v3199, %v3198
      %v3326 = vpack.c.b16 %v3201, %v3200
      %v3327 = vpack.c.b16 %v3203, %v3202
      %v3328 = vpack.c.b16 %v3205, %v3204
      %v3329 = vpack.c.b16 %v3207, %v3206
      %v3330 = vpack.c.b16 %v3209, %v3208
      %v3331 = vpack.c.b16 %v3211, %v3210
      %v3332 = vpack.c.b16 %v3213, %v3212
      %v3333 = vpack.c.b16 %v3215, %v3214
      %v3334 = vpack.c.b16 %v3217, %v3216
      %v3335 = vpack.c.b16 %v3219, %v3218
      %v3336 = vpack.c.b16 %v3221, %v3220
      %v3337 = vpack.c.b16 %v3223, %v3222
      %v3338 = vpack.c.b16 %v3225, %v3224
      %v3339 = vpack.c.b16 %v3227, %v3226
      %v3340 = vpack.c.b16 %v3229, %v3228
      %v3341 = vpack.c.b16 %v3231, %v3230
      %v3342 = vpack.c.b16 %v3233, %v3232
      %v3343 = vpack.c.b16 %v3235, %v3234
      %v3344 = vpack.c.b16 %v3237, %v3236
      %v3345 = vpack.c.b16 %v3239, %v3238
      %v3346 = vpack.c.b16 %v3241, %v3240
      %v3347 = vpack.c.b16 %v3243, %v3242
      %v3348 = vpack.c.b16 %v3245, %v3244
      %v3349 = vpack.c.b16 %v3247, %v3246
      %v3350 = vpack.c.b16 %v3249, %v3248
      %v3351 = vpack.c.b16 %v3251, %v3250
      %v3352 = vpack.c.b16 %v3253, %v3252
      %v3353 = vpack.c.b16 %v3255, %v3254
      %v3354 = vpack.c.b16 %v3257, %v3256
      %v3355 = vpack.c.b16 %v3259, %v3258
      %v3356 = vpack.c.b16 %v3261, %v3260
      %v3357 = vpack.c.b16 %v3263, %v3262
      %v3358 = vpack.c.b16 %v3265, %v3264
      %v3359 = vpack.c.b16 %v3267, %v3266
      %v3360 = vpack.c.b16 %v3269, %v3268
      %v3361 = vpack.c.b16 %v3271, %v3270
      %v3362 = vpack.c.b16 %v3273, %v3272
      %v3363 = vpack.c.b16 %v3275, %v3274
      %v3364 = vpack.c.b16 %v3277, %v3276
      %v3365 = vpack.c.b16 %v3279, %v3278
      %v3366 = vpack.c.b16 %v3281, %v3280
      %v3367 = vpack.c.b16 %v3283, %v3282
      %v3368 = vpack.c.b16 %v3285, %v3284
      %v3369 = vpack.c.b16 %v3287, %v3286
      %v3370 = vpack.c.b16 %v3289, %v3288
      %v3371 = vpack.c.b16 %v3291, %v3290
      %v3372 = vpack.c.b16 %v3293, %v3292
      %v3373 = vpack.c.b16 %v3295, %v3294
      %v3374 = vpack.c.b16 %v3297, %v3296
      %v3375 = vpack.c.b16 %v3299, %v3298
      %v3376 = vpack.c.b16 %v3301, %v3300
      %v3377 = vpack.c.b16 %v3303, %v3302
      %v3378 = vpack.c.b16 %v3305, %v3304
      %v3379 = vpack.c.b16 %v3307, %v3306
      %v3380 = vpack.c.b16 %v3309, %v3308
      %v3381 = vpack.c.b16 %v3311, %v3310
      %v3382 = vpack.c.b16 %v3313, %v3312
      %v3383 = vpack.c.b16 %v3315, %v3314
      %v3384 = vpack.c.b16 %v3317, %v3316
      %v3385 = vpack.c.b16 %v3319, %v3318
      %v3386 = vpack.c.b16 %v3321, %v3320
      %v3387 = vpack.c.b16 %v3323, %v3322
      %3452 = vmatpush.bf16.msra.mxu0 %v3331
      %3453 = vmatpush.bf16.msra.mxu0 %v3330
      %3454 = vmatpush.bf16.msra.mxu0 %v3329
      %3455 = vmatpush.bf16.msra.mxu0 %v3328
      %3456 = vmatpush.bf16.msra.mxu0 %v3327
      %3457 = vmatpush.bf16.msra.mxu0 %v3326
      %3458 = vmatpush.bf16.msra.mxu0 %v3325
      %3459 = vmatpush.bf16.msra.mxu0 %v3324
      %3460 = vmatmul.bf16.gmra.mxu0 %v3052
      %v3461 = vpop.f32.mrf.mxu0
      %v3462 = vadd.f32 %v3045, %v3461
      %v3463 = vpop.f32.mrf.mxu0
      %3464 = vdwg.mxu0
      %3465 = vmatpush.bf16.msra.mxu0 %v3339
      %3466 = vmatpush.bf16.msra.mxu0 %v3338
      %3467 = vmatpush.bf16.msra.mxu0 %v3337
      %3468 = vmatpush.bf16.msra.mxu0 %v3336
      %3469 = vmatpush.bf16.msra.mxu0 %v3335
      %3470 = vmatpush.bf16.msra.mxu0 %v3334
      %3471 = vmatpush.bf16.msra.mxu0 %v3333
      %3472 = vmatpush.bf16.msra.mxu0 %v3332
      %3473 = vmatmul.bf16.gmra.mxu0 %v3053
      %v3474 = vpop.f32.mrf.mxu0
      %v3475 = vadd.f32 %v3462, %v3474
      %v3476 = vpop.f32.mrf.mxu0
      %3477 = vdwg.mxu0
      %3478 = vmatpush.bf16.msra.mxu0 %v3347
      %3479 = vmatpush.bf16.msra.mxu0 %v3346
      %3480 = vmatpush.bf16.msra.mxu0 %v3345
      %3481 = vmatpush.bf16.msra.mxu0 %v3344
      %3482 = vmatpush.bf16.msra.mxu0 %v3343
      %3483 = vmatpush.bf16.msra.mxu0 %v3342
      %3484 = vmatpush.bf16.msra.mxu0 %v3341
      %3485 = vmatpush.bf16.msra.mxu0 %v3340
      %3486 = vmatmul.bf16.gmra.mxu0 %v3054
      %v3487 = vpop.f32.mrf.mxu0
      %v3488 = vadd.f32 %v3475, %v3487
      %v3489 = vpop.f32.mrf.mxu0
      %3490 = vdwg.mxu0
      %3491 = vmatpush.bf16.msra.mxu0 %v3355
      %3492 = vmatpush.bf16.msra.mxu0 %v3354
      %3493 = vmatpush.bf16.msra.mxu0 %v3353
      %3494 = vmatpush.bf16.msra.mxu0 %v3352
      %3495 = vmatpush.bf16.msra.mxu0 %v3351
      %3496 = vmatpush.bf16.msra.mxu0 %v3350
      %3497 = vmatpush.bf16.msra.mxu0 %v3349
      %3498 = vmatpush.bf16.msra.mxu0 %v3348
      %3499 = vmatmul.bf16.gmra.mxu0 %v3055
      %v3500 = vpop.f32.mrf.mxu0
      %v3501 = vadd.f32 %v3488, %v3500
      %v3502 = vpop.f32.mrf.mxu0
      %3503 = vdwg.mxu0
      %3504 = vmatpush.bf16.msra.mxu0 %v3363
      %3505 = vmatpush.bf16.msra.mxu0 %v3362
      %3506 = vmatpush.bf16.msra.mxu0 %v3361
      %3507 = vmatpush.bf16.msra.mxu0 %v3360
      %3508 = vmatpush.bf16.msra.mxu0 %v3359
      %3509 = vmatpush.bf16.msra.mxu0 %v3358
      %3510 = vmatpush.bf16.msra.mxu0 %v3357
      %3511 = vmatpush.bf16.msra.mxu0 %v3356
      %3512 = vmatmul.bf16.gmra.mxu0 %v3056
      %v3513 = vpop.f32.mrf.mxu0
      %v3514 = vadd.f32 %v3501, %v3513
      %v3515 = vpop.f32.mrf.mxu0
      %3516 = vdwg.mxu0
      %3517 = vmatpush.bf16.msra.mxu0 %v3371
      %3518 = vmatpush.bf16.msra.mxu0 %v3370
      %3519 = vmatpush.bf16.msra.mxu0 %v3369
      %3520 = vmatpush.bf16.msra.mxu0 %v3368
      %3521 = vmatpush.bf16.msra.mxu0 %v3367
      %3522 = vmatpush.bf16.msra.mxu0 %v3366
      %3523 = vmatpush.bf16.msra.mxu0 %v3365
      %3524 = vmatpush.bf16.msra.mxu0 %v3364
      %3525 = vmatmul.bf16.gmra.mxu0 %v3057
      %v3526 = vpop.f32.mrf.mxu0
      %v3527 = vadd.f32 %v3514, %v3526
      %v3528 = vpop.f32.mrf.mxu0
      %3529 = vdwg.mxu0
      %3530 = vmatpush.bf16.msra.mxu0 %v3379
      %3531 = vmatpush.bf16.msra.mxu0 %v3378
      %3532 = vmatpush.bf16.msra.mxu0 %v3377
      %3533 = vmatpush.bf16.msra.mxu0 %v3376
      %3534 = vmatpush.bf16.msra.mxu0 %v3375
      %3535 = vmatpush.bf16.msra.mxu0 %v3374
      %3536 = vmatpush.bf16.msra.mxu0 %v3373
      %3537 = vmatpush.bf16.msra.mxu0 %v3372
      %3538 = vmatmul.bf16.gmra.mxu0 %v3058
      %v3539 = vpop.f32.mrf.mxu0
      %v3540 = vadd.f32 %v3527, %v3539
      %v3541 = vpop.f32.mrf.mxu0
      %3542 = vdwg.mxu0
      %3543 = vmatpush.bf16.msra.mxu0 %v3387
      %3544 = vmatpush.bf16.msra.mxu0 %v3386
      %3545 = vmatpush.bf16.msra.mxu0 %v3385
      %3546 = vmatpush.bf16.msra.mxu0 %v3384
      %3547 = vmatpush.bf16.msra.mxu0 %v3383
      %3548 = vmatpush.bf16.msra.mxu0 %v3382
      %3549 = vmatpush.bf16.msra.mxu0 %v3381
      %3550 = vmatpush.bf16.msra.mxu0 %v3380
      %3551 = vmatmul.bf16.gmra.mxu0 %v3059
      %v3552 = vpop.f32.mrf.mxu0
      %v3553 = vadd.f32 %v3540, %v3552
      %v3554 = vpop.f32.mrf.mxu0
      %3555 = vdwg.mxu0
      %v3556 = vld [vmem:[%s9] sm:$0xf]
      %v3557 = vmul.f32 %v3553, %v3556
      %vm3558 = vcmask 1043456
      %v3559 = vsel %vm3558, %v3557, 0.0
      %v3560 = vrot.slane %v3559, 4
      %v3561 = vadd.f32 %v3559, %v3560
      %v3562 = vrot.slane %v3561, 2
      %v3563 = vadd.f32 %v3561, %v3562
      %v3564 = vrot.slane %v3563, 1
      %v3565 = vadd.f32 %v3563, %v3564
      %3566 = vadd.xlane.f32.xlu0 %v3565
      %v3567 = vpop.xlane.xlu0 %3566
      %v3568 = vld [vmem:[#allocation12] sm:$0x1]
      %v3569 = vadd.f32 %v3567, %v3568
      %vm3570 = vcmp.ge.f32.partialorder %v3569, 0.0
      %v3571 = vmul.f32 %v3569, 2.0
      %v3572 = vsel %vm3570, %v3569, %v3571
      %v3574 = vperm.slane %v3572, 0
      %3575 = vset.pattern.permute.xlu0 0
      %3576 = vperm.xlu0 %3575, %v3574
      %v3577 = vpop.permute.xlu0 %3576
      %3579 = vst [vmem:[%s386] sm:$0xff] %v3577
      %p3580 = scmp.lt.s32.totalorder %s24, 1
      %s3581 = scalar_select %p3580, %s24, 1
      %s3582 = smul.addr %s3581, 8
      %s3583 = scalar_lea.vmem %s11, %s3582
      // Predicated region
      $region65: #{critic_forward.1} parent=63 // pred_check
        %p3584 = pneg %p278
      $region66: #{critic_forward.1} parent=63 // pred_check_branch
        %3586 = sbr.rel (%p3584) target = $region68
      $region67: #{critic_forward.1} parent=63 // pred_region
        _
      $region68: #{critic_forward.1} parent=63 // pred_fallthru
        _
    $region64: #{critic_forward.1} parent=5 // pred_fallthru
      _
    %p3587 = scmp.le.s32.totalorder 2, %s19
    // Predicated region
    $region69: #{critic_forward.1} parent=5 // pred_check
      %p3588 = pneg %p3587
    $region70: #{critic_forward.1} parent=5 // pred_check_branch
      %3590 = sbr.rel (%p3588) target = $region72
    $region71: #{critic_forward.1} parent=5 // pred_region
      %s3591 = ssub.s32 %s19, 2
      // Predicated region
      $region73: #{critic_forward.1} parent=71 // pred_check
        %p3592 = pneg %p284
      $region74: #{critic_forward.1} parent=71 // pred_check_branch
        %3594 = sbr.rel (%p3592) target = $region76
      $region75: #{critic_forward.1} parent=71 // pred_region
        %p3595 = scmp.lt.s32.totalorder %s25, 1
        %s3596 = scalar_select %p3595, %s25, 1
        %s3597 = smul.addr %s3596, 8
        %s3598 = scalar_lea.vmem %s11, %s3597
      $region76: #{critic_forward.1} parent=71 // pred_fallthru
        _
    $region72: #{critic_forward.1} parent=5 // pred_fallthru
      _
  $region6: #{critic_forward.1} parent=0 // loop_footer
    %s23 = sadd.s32 1, %s19
  $region7: #{critic_forward.1} parent=0 // loop_footer_branch
    %18 = sbr.rel target = $region3
  $region8: #{critic_forward.1} parent=0 // loop_exit
    _

</llo_original>
